<compile_context>
chip_gen: v5e
topology: v5e:2x2
jax: 0.10.0
libtpu: 0.0.40
codegen_flags: <defaults>
</compile_context>

<pallas_src>
import jax
import jax.numpy as jnp
from jax.experimental import pallas as pl
from jax.experimental.pallas import tpu as pltpu

EPS = 1e-5


def _round_down_128(x):
    return max(128, (x // 128) * 128)


def _choose_block(hw, n_batch, target, min_total_steps=4):
    """Lane-aligned tile width along the flattened spatial axis.

    As large as possible (per-step overhead ~0.35us -> bigger tiles approach the
    HBM roofline) but capped so the grid has >= min_total_steps steps, keeping the
    'parallel' axes sharded across both v7x TensorCores.
    """
    bm = min(target, hw)
    if bm < hw:
        bm = _round_down_128(bm)

    def steps(b):
        return n_batch * ((hw + b - 1) // b)

    while steps(bm) < min_total_steps and bm > 128:
        nb = _round_down_128(bm // 2)
        if nb >= bm:
            break
        bm = nb
    return bm


def _make_conv_stats_kernel(hw, block_m):
    ragged = (hw % block_m) != 0

    def kernel(w_ref, x_ref, y_ref, stats_ref):
        # w_ref:     [Cout, Cin]        gate-folded 1x1 conv weight (grid-resident)
        # x_ref:     [1, Cin, block_m]  activations (channels on sublanes, pixels on lanes)
        # y_ref:     [1, Cout, block_m] conv output tile (lane-dense store)
        # stats_ref: [1, Cout, 2]       per-tile [sum(y), sum(y*y)]
        y = jnp.dot(w_ref[...], x_ref[0], preferred_element_type=jnp.float32)
        y_ref[0] = y.astype(y_ref.dtype)
        if ragged:
            # Last tile is partial: OOB input lanes are unspecified -> mask them
            # out of the statistics (the y store above drops OOB lanes itself).
            i = pl.program_id(1)
            valid = hw - i * block_m
            lane = jax.lax.broadcasted_iota(jnp.int32, (1, block_m), 1)
            y = jnp.where(lane < valid, y, 0.0)
        stats_ref[0, :, 0:1] = jnp.sum(y, axis=1, keepdims=True)
        stats_ref[0, :, 1:2] = jnp.sum(y * y, axis=1, keepdims=True)

    return kernel


def _make_bn_apply_kernel(count, eps):
    inv_count = 1.0 / float(count)

    def kernel(stats_ref, gb_ref, y_ref, o_ref):
        # stats_ref: [n_tiles, Cout, 2]  all per-tile partial sums (grid-resident, tiny)
        # gb_ref:    [Cout, 2]           packed (gamma, beta)
        # y_ref/o_ref: [1, Cout, block_m]
        s = jnp.sum(stats_ref[...], axis=0)                      # [Cout, 2]
        mean = s[:, 0:1] * inv_count                             # [Cout, 1]
        var = jnp.maximum(s[:, 1:2] * inv_count - mean * mean, 0.0)
        inv_std = jax.lax.rsqrt(var + eps)
        a = gb_ref[:, 0:1] * inv_std                              # gamma * inv_std
        b = gb_ref[:, 1:2] - mean * a                             # beta  - mean * a
        o_ref[0] = (y_ref[0] * a + b).astype(o_ref.dtype)

    return kernel


def fused_mul_conv1x1_bn(x_nchw, scale_nc11, weight_oi11, gamma, beta, *,
                         eps=EPS, block_m1=2048, block_m2=8192):
    """x_nchw: [N, Cin, H, W]; scale_nc11: [1, Cin, 1, 1];
    weight_oi11: [Cout, Cin, 1, 1]; gamma/beta: [Cout]. Returns [N, Cout, H, W]."""
    N, Cin, H, W = x_nchw.shape
    Cout = weight_oi11.shape[0]
    hw = H * W
    count = N * hw
    x_dtype = x_nchw.dtype

    # [N, Cin, H, W] -> [N, Cin, H*W]: pure reshape (no transpose, no dtype copy).
    x = x_nchw.reshape(N, Cin, hw)

    # Fold the per-channel gate into the conv weight; match the activation dtype.
    w = weight_oi11.reshape(Cout, Cin).astype(jnp.float32)
    scale = scale_nc11.reshape(1, Cin).astype(jnp.float32)
    w_scaled = (w * scale).astype(x_dtype)

    bm1 = _choose_block(hw, N, block_m1)
    bm2 = _choose_block(hw, N, block_m2)
    gm1 = pl.cdiv(hw, bm1)
    gm2 = pl.cdiv(hw, bm2)
    n_tiles = N * gm1

    cparams = pltpu.CompilerParams(
        dimension_semantics=("parallel", "parallel"),   # shards across v7x's 2 TCs
        vmem_limit_bytes=32 * 1024 * 1024,              # v5e default scoped VMEM is 16 MiB
    )

    # -------- pass 1: 1x1 conv (matmul) + per-tile BN partial statistics --------
    y, stats = pl.pallas_call(
        _make_conv_stats_kernel(hw, bm1),
        grid=(N, gm1),
        in_specs=[
            pl.BlockSpec((Cout, Cin), lambda n, i: (0, 0)),        # weight (resident)
            pl.BlockSpec((1, Cin, bm1), lambda n, i: (n, 0, i)),   # x tile
        ],
        out_specs=[
            pl.BlockSpec((1, Cout, bm1), lambda n, i: (n, 0, i)),              # y tile
            pl.BlockSpec((1, Cout, 2), lambda n, i: (n * gm1 + i, 0, 0)),      # stats
        ],
        out_shape=[
            jax.ShapeDtypeStruct((N, Cout, hw), jnp.float32),
            jax.ShapeDtypeStruct((n_tiles, Cout, 2), jnp.float32),
        ],
        compiler_params=cparams,
    )(w_scaled, x)

    # -------- pass 2: finish BN (global stats + affine) and apply, tiled over hw --------
    gb = jnp.stack([gamma.reshape(Cout).astype(jnp.float32),
                    beta.reshape(Cout).astype(jnp.float32)], axis=1)   # [Cout, 2]

    aliases = {2: 0} if jnp.dtype(x_dtype) == jnp.dtype(jnp.float32) else {}
    out = pl.pallas_call(
        _make_bn_apply_kernel(count, eps),
        grid=(N, gm2),
        in_specs=[
            pl.BlockSpec((n_tiles, Cout, 2), lambda n, i: (0, 0, 0)),  # stats (resident)
            pl.BlockSpec((Cout, 2), lambda n, i: (0, 0)),              # gamma/beta
            pl.BlockSpec((1, Cout, bm2), lambda n, i: (n, 0, i)),      # y tile
        ],
        out_specs=pl.BlockSpec((1, Cout, bm2), lambda n, i: (n, 0, i)),
        out_shape=jax.ShapeDtypeStruct((N, Cout, hw), x_dtype),
        input_output_aliases=aliases,                                   # reuse y's buffer
        compiler_params=cparams,
    )(stats, gb, y)

    # [N, Cout, H*W] -> [N, Cout, H, W]: pure reshape.
    return out.reshape(N, Cout, H, W)


def _reference(x_nchw, scale_nc11, weight_oi11, gamma, beta, eps=EPS):
    x = x_nchw * scale_nc11
    Cout, Cin = weight_oi11.shape[0], weight_oi11.shape[1]
    w = weight_oi11.reshape(Cout, Cin)
    y = jnp.einsum("nchw,oc->nohw", x, w, precision=jax.lax.Precision.HIGHEST)
    mean = jnp.mean(y, axis=(0, 2, 3), keepdims=True)
    var = jnp.mean((y - mean) ** 2, axis=(0, 2, 3), keepdims=True)
    y_hat = (y - mean) * jax.lax.rsqrt(var + eps)
    return y_hat * gamma.reshape(1, -1, 1, 1) + beta.reshape(1, -1, 1, 1)


if __name__ == "__main__":
    # Module shapes: Cin=240, Cout=40, spatial 56x56 (HW=3136 exercises the ragged tail).
    N, Cin, H, W = 1, 240, 56, 56
    Cout = 40

    key = jax.random.PRNGKey(0)
    k1, k2, k3, k4, k5 = jax.random.split(key, 5)

    x106 = jax.random.normal(k1, (N, Cin, H, W), dtype=jnp.float32)
    x111 = jax.random.normal(k2, (1, Cin, 1, 1), dtype=jnp.float32)

    # Deterministic synthetic parameters (shapes from module __init__).
    conv_w = jax.random.normal(k3, (Cout, Cin, 1, 1), dtype=jnp.float32) * 0.05
    bn_gamma = 1.0 + 0.1 * jax.random.normal(k4, (Cout,), dtype=jnp.float32)
    bn_beta = 0.1 * jax.random.normal(k5, (Cout,), dtype=jnp.float32)

    fused = jax.jit(fused_mul_conv1x1_bn)
    out = fused(x106, x111, conv_w, bn_gamma, bn_beta)
    out = jax.block_until_ready(out)

    ref = _reference(x106, x111, conv_w, bn_gamma, bn_beta)
    assert out.shape == (N, Cout, H, W)
    err = float(jnp.max(jnp.abs(out - ref)))
    assert err < 1e-3, f"mismatch vs reference: {err}"

    print("KERNEL_OK")
</pallas_src>

<mosaic_0001>
module attributes {stable_mosaic.version = 11 : i64} {
  func.func @kernel(%arg0: i32, %arg1: i32, %arg2: memref<4x40x2xf32, #tpu.memory_space<vmem>>, %arg3: memref<40x2xf32, #tpu.memory_space<vmem>>, %arg4: memref<1x40x768xf32, #tpu.memory_space<vmem>>, %arg5: memref<1x40x768xf32, #tpu.memory_space<vmem>>) attributes {dimension_semantics = [#tpu.dimension_semantics<parallel>, #tpu.dimension_semantics<parallel>], iteration_bounds = array<i64: 1, 5>, scalar_prefetch = 0 : i64, scratch_operands = 0 : i64, tpu.core_type = #tpu.core_type<tc>, window_params = [{pipeline_mode = #tpu.pipeline_mode<synchronous>, transform_indices = @transform_0, window_bounds = array<i64: 4, 40, 2>}, {pipeline_mode = #tpu.pipeline_mode<synchronous>, transform_indices = @transform_1, window_bounds = array<i64: 40, 2>}, {transform_indices = @transform_2, window_bounds = array<i64: 1, 40, 768>}, {transform_indices = @transform_3, window_bounds = array<i64: 1, 40, 768>}]} {
    %c0 = arith.constant 0 : index
    %c0_0 = arith.constant 0 : index
    %c0_1 = arith.constant 0 : index
    %0 = vector.load %arg2[%c0, %c0_0, %c0_1] : memref<4x40x2xf32, #tpu.memory_space<vmem>>, vector<4x40x2xf32>
    %cst = arith.constant dense<0.000000e+00> : vector<40x2xf32>
    %1 = vector.multi_reduction <add>, %0, %cst [0] : vector<4x40x2xf32> to vector<40x2xf32>
    %2 = vector.extract_strided_slice %1 {offsets = [0, 0], sizes = [40, 1], strides = [1, 1]} : vector<40x2xf32> to vector<40x1xf32>
    %cst_2 = arith.constant 3.18877544E-4 : f32
    %3 = vector.broadcast %cst_2 : f32 to vector<40x1xf32>
    %4 = arith.mulf %2, %3 : vector<40x1xf32>
    %5 = vector.extract_strided_slice %1 {offsets = [0, 1], sizes = [40, 1], strides = [1, 1]} : vector<40x2xf32> to vector<40x1xf32>
    %cst_3 = arith.constant 3.18877544E-4 : f32
    %6 = vector.broadcast %cst_3 : f32 to vector<40x1xf32>
    %7 = arith.mulf %5, %6 : vector<40x1xf32>
    %8 = arith.mulf %4, %4 : vector<40x1xf32>
    %9 = arith.subf %7, %8 : vector<40x1xf32>
    %cst_4 = arith.constant 0.000000e+00 : f32
    %10 = vector.broadcast %cst_4 : f32 to vector<40x1xf32>
    %11 = arith.maximumf %9, %10 : vector<40x1xf32>
    %cst_5 = arith.constant 9.99999974E-6 : f32
    %12 = vector.broadcast %cst_5 : f32 to vector<40x1xf32>
    %13 = arith.addf %11, %12 : vector<40x1xf32>
    %14 = math.rsqrt %13 : vector<40x1xf32>
    %c0_6 = arith.constant 0 : index
    %c0_7 = arith.constant 0 : index
    %15 = vector.load %arg3[%c0_6, %c0_7] : memref<40x2xf32, #tpu.memory_space<vmem>>, vector<40x1xf32>
    %16 = arith.mulf %15, %14 : vector<40x1xf32>
    %c0_8 = arith.constant 0 : index
    %c1 = arith.constant 1 : index
    %17 = vector.load %arg3[%c0_8, %c1] : memref<40x2xf32, #tpu.memory_space<vmem>>, vector<40x1xf32>
    %18 = arith.mulf %4, %16 : vector<40x1xf32>
    %19 = arith.subf %17, %18 : vector<40x1xf32>
    %c0_9 = arith.constant 0 : index
    %c0_10 = arith.constant 0 : index
    %c0_11 = arith.constant 0 : index
    %20 = vector.load %arg4[%c0_9, %c0_10, %c0_11] : memref<1x40x768xf32, #tpu.memory_space<vmem>>, vector<1x40x768xf32>
    %21 = vector.shape_cast %20 : vector<1x40x768xf32> to vector<40x768xf32>
    %22 = vector.broadcast %16 : vector<40x1xf32> to vector<40x768xf32>
    %23 = arith.mulf %21, %22 : vector<40x768xf32>
    %24 = vector.broadcast %19 : vector<40x1xf32> to vector<40x768xf32>
    %25 = arith.addf %23, %24 : vector<40x768xf32>
    %c0_12 = arith.constant 0 : index
    %c0_13 = arith.constant 0 : index
    %c0_14 = arith.constant 0 : index
    %26 = vector.load %arg5[%c0_12, %c0_13, %c0_14] : memref<1x40x768xf32, #tpu.memory_space<vmem>>, vector<1x40x768xf32>
    %27 = vector.shape_cast %26 : vector<1x40x768xf32> to vector<40x768xf32>
    %28 = vector.shape_cast %25 : vector<40x768xf32> to vector<1x40x768xf32>
    tpu.vector_store %arg5[%c0_12, %c0_13, %c0_14], %28 {strides = array<i32>} : memref<1x40x768xf32, #tpu.memory_space<vmem>>, vector<1x40x768xf32>,
    return
  }
  func.func @transform_0(%arg0: i32, %arg1: i32) -> (i32, i32, i32) {
    %c0_i32 = arith.constant 0 : i32
    %c0_i32_0 = arith.constant 0 : i32
    %c0_i32_1 = arith.constant 0 : i32
    %c0_i32_2 = arith.constant 0 : i32
    return %c0_i32, %c0_i32_0, %c0_i32_1 : i32, i32, i32
  }
  func.func @transform_1(%arg0: i32, %arg1: i32) -> (i32, i32) {
    %c0_i32 = arith.constant 0 : i32
    %c0_i32_0 = arith.constant 0 : i32
    %c0_i32_1 = arith.constant 0 : i32
    return %c0_i32, %c0_i32_0 : i32, i32
  }
  func.func @transform_2(%arg0: i32, %arg1: i32) -> (i32, i32, i32) {
    %c0_i32 = arith.constant 0 : i32
    %c0_i32_0 = arith.constant 0 : i32
    return %arg0, %c0_i32, %arg1 : i32, i32, i32
  }
  func.func @transform_3(%arg0: i32, %arg1: i32) -> (i32, i32, i32) {
    %c0_i32 = arith.constant 0 : i32
    %c0_i32_0 = arith.constant 0 : i32
    return %arg0, %c0_i32, %arg1 : i32, i32, i32
  }
}

module attributes {stable_mosaic.version = 11 : i64} {
  func.func @kernel(%arg0: i32, %arg1: i32, %arg2: memref<40x240xf32, #tpu.memory_space<vmem>>, %arg3: memref<1x240x1024xf32, #tpu.memory_space<vmem>>, %arg4: memref<1x40x1024xf32, #tpu.memory_space<vmem>>, %arg5: memref<1x40x2xf32, #tpu.memory_space<vmem>>) attributes {dimension_semantics = [#tpu.dimension_semantics<parallel>, #tpu.dimension_semantics<parallel>], iteration_bounds = array<i64: 1, 4>, scalar_prefetch = 0 : i64, scratch_operands = 0 : i64, tpu.core_type = #tpu.core_type<tc>, window_params = [{pipeline_mode = #tpu.pipeline_mode<synchronous>, transform_indices = @transform_0, window_bounds = array<i64: 40, 240>}, {transform_indices = @transform_1, window_bounds = array<i64: 1, 240, 1024>}, {transform_indices = @transform_2, window_bounds = array<i64: 1, 40, 1024>}, {transform_indices = @transform_3, window_bounds = array<i64: 1, 40, 2>}]} {
    %c0 = arith.constant 0 : index
    %c0_0 = arith.constant 0 : index
    %0 = vector.load %arg2[%c0, %c0_0] : memref<40x240xf32, #tpu.memory_space<vmem>>, vector<40x240xf32>
    %c0_1 = arith.constant 0 : index
    %c0_2 = arith.constant 0 : index
    %c0_3 = arith.constant 0 : index
    %1 = vector.load %arg3[%c0_1, %c0_2, %c0_3] : memref<1x240x1024xf32, #tpu.memory_space<vmem>>, vector<1x240x1024xf32>
    %2 = vector.shape_cast %1 : vector<1x240x1024xf32> to vector<240x1024xf32>
    %cst = arith.constant dense<0.000000e+00> : vector<40x1024xf32>
    %3 = tpu.matmul %0, %2, %cst {dimension_numbers = #tpu.dot_dimension_numbers<[1], [0], [0], [1], [0, 0, 1, 1], [], []>} : vector<40x240xf32>, vector<240x1024xf32>, vector<40x1024xf32> -> vector<40x1024xf32>
    %c0_4 = arith.constant 0 : index
    %c0_5 = arith.constant 0 : index
    %c0_6 = arith.constant 0 : index
    %4 = vector.load %arg4[%c0_4, %c0_5, %c0_6] : memref<1x40x1024xf32, #tpu.memory_space<vmem>>, vector<1x40x1024xf32>
    %5 = vector.shape_cast %4 : vector<1x40x1024xf32> to vector<40x1024xf32>
    %6 = vector.shape_cast %3 : vector<40x1024xf32> to vector<1x40x1024xf32>
    tpu.vector_store %arg4[%c0_4, %c0_5, %c0_6], %6 {strides = array<i32>} : memref<1x40x1024xf32, #tpu.memory_space<vmem>>, vector<1x40x1024xf32>,
    %c1024_i32 = arith.constant 1024 : i32
    %7 = arith.muli %arg1, %c1024_i32 : i32
    %c3136_i32 = arith.constant 3136 : i32
    %8 = arith.subi %c3136_i32, %7 : i32
    %9 = tpu.iota {dimensions = array<i32: 1>} : vector<1x1024xi32>
    %10 = vector.broadcast %8 : i32 to vector<1x1024xi32>
    %11 = arith.cmpi slt, %9, %10 : vector<1x1024xi32>
    %cst_7 = arith.constant 0.000000e+00 : f32
    %12 = vector.shape_cast %11 : vector<1x1024xi1> to vector<1x1024xi1>
    %13 = vector.broadcast %12 : vector<1x1024xi1> to vector<40x1024xi1>
    %14 = vector.broadcast %cst_7 : f32 to vector<40x1024xf32>
    %15 = arith.select %13, %3, %14 : vector<40x1024xi1>, vector<40x1024xf32>
    %cst_8 = arith.constant dense<0.000000e+00> : vector<40xf32>
    %16 = vector.multi_reduction <add>, %15, %cst_8 [1] : vector<40x1024xf32> to vector<40xf32>
    %17 = vector.shape_cast %16 : vector<40xf32> to vector<40x1xf32>
    %c0_9 = arith.constant 0 : index
    %c0_10 = arith.constant 0 : index
    %c0_11 = arith.constant 0 : index
    %18 = vector.load %arg5[%c0_9, %c0_10, %c0_11] : memref<1x40x2xf32, #tpu.memory_space<vmem>>, vector<1x40x1xf32>
    %19 = vector.shape_cast %18 : vector<1x40x1xf32> to vector<40x1xf32>
    %20 = vector.shape_cast %17 : vector<40x1xf32> to vector<1x40x1xf32>
    tpu.vector_store %arg5[%c0_9, %c0_10, %c0_11], %20 {strides = array<i32>} : memref<1x40x2xf32, #tpu.memory_space<vmem>>, vector<1x40x1xf32>,
    %21 = arith.mulf %15, %15 : vector<40x1024xf32>
    %cst_12 = arith.constant dense<0.000000e+00> : vector<40xf32>
    %22 = vector.multi_reduction <add>, %21, %cst_12 [1] : vector<40x1024xf32> to vector<40xf32>
    %23 = vector.shape_cast %22 : vector<40xf32> to vector<40x1xf32>
    %c0_13 = arith.constant 0 : index
    %c0_14 = arith.constant 0 : index
    %c1 = arith.constant 1 : index
    %24 = vector.load %arg5[%c0_13, %c0_14, %c1] : memref<1x40x2xf32, #tpu.memory_space<vmem>>, vector<1x40x1xf32>
    %25 = vector.shape_cast %24 : vector<1x40x1xf32> to vector<40x1xf32>
    %26 = vector.shape_cast %23 : vector<40x1xf32> to vector<1x40x1xf32>
    tpu.vector_store %arg5[%c0_13, %c0_14, %c1], %26 {strides = array<i32>} : memref<1x40x2xf32, #tpu.memory_space<vmem>>, vector<1x40x1xf32>,
    return
  }
  func.func @transform_0(%arg0: i32, %arg1: i32) -> (i32, i32) {
    %c0_i32 = arith.constant 0 : i32
    %c0_i32_0 = arith.constant 0 : i32
    %c0_i32_1 = arith.constant 0 : i32
    return %c0_i32, %c0_i32_0 : i32, i32
  }
  func.func @transform_1(%arg0: i32, %arg1: i32) -> (i32, i32, i32) {
    %c0_i32 = arith.constant 0 : i32
    %c0_i32_0 = arith.constant 0 : i32
    return %arg0, %c0_i32, %arg1 : i32, i32, i32
  }
  func.func @transform_2(%arg0: i32, %arg1: i32) -> (i32, i32, i32) {
    %c0_i32 = arith.constant 0 : i32
    %c0_i32_0 = arith.constant 0 : i32
    return %arg0, %c0_i32, %arg1 : i32, i32, i32
  }
  func.func @transform_3(%arg0: i32, %arg1: i32) -> (i32, i32, i32) {
    %c4_i32 = arith.constant 4 : i32
    %0 = arith.muli %arg0, %c4_i32 : i32
    %1 = arith.addi %0, %arg1 : i32
    %c0_i32 = arith.constant 0 : i32
    %c0_i32_0 = arith.constant 0 : i32
    %c0_i32_1 = arith.constant 0 : i32
    return %1, %c0_i32, %c0_i32_0 : i32, i32, i32
  }
}

</mosaic_0001>

<llo_original>
// kernel: fused_mul_conv1x1_bn.3
$region0: #{fused_mul_conv1x1_bn.3}
  #allocation0 [shape = 'u32[]', space=smem, size = 0x4, offset = 0x4, fixed_abs, tag = 'smem constant byte address 0x4 - core index']
  #allocation1 [shape = 'u32[72,128]{1,0:T(1,128)}', space=vmem, size = 0x9000, scoped, tag = 'internal scratch']
  %s0 = inlined_call_operand.vmem [shape: f32[4,40,2], index: 0, kind: input, shape index: {}]
  %s1 = inlined_call_operand.vmem [shape: f32[40,2], index: 1, kind: input, shape index: {}]
  %s2 = inlined_call_operand.vmem [shape: f32[1,40,3136], index: 2, kind: input, shape index: {}, may-alias: {2,3}]
  %s3 = inlined_call_operand.vmem [shape: f32[1,40,3136], index: 3, kind: output, shape index: {}, may-alias: {2,3}]
  %s4 = sld [smem:[#allocation0]]
  $region173: #{fused_mul_conv1x1_bn.3} parent=0
    _
  %s6 = ssub.s32 1, %s4
  %s7 = scalar_select 0, %s6, %s4
  $region1: #{fused_mul_conv1x1_bn.3} parent=0
    #allocation2 [shape = 'u8[245760]{0}', space=vmem, size = 0x3c000, scoped, tag = 'input window, operand 2']
    #allocation3 [shape = 'u8[245760]{0}', space=vmem, size = 0x3c000, scoped, tag = 'output window, operand 0']
    loop: start=0, step=1, limit=7
    $region2: #{fused_mul_conv1x1_bn.3} parent=1 // loop_pre_header
      _
    $region3: #{fused_mul_conv1x1_bn.3} parent=1 // loop_header
      %s9 = sphi 0, %s13
      %p10 = scmp.ge.s32.totalorder %s9, 7
      %s16 = sphi 0, %s28
      %s17 = sphi 0, %s24
      %s18 = sphi 0, %s16
      %s19 = sphi 0, %s17
      %s20 = sphi 0, %s18
      %s21 = sphi 0, %s19
      %s29 = sphi 0, %s29
      %s31 = sphi 0, %s29
      %s32 = sphi 0, %s31
      %s46 = sphi 0, %s32
      %s50 = sphi 0, %s50
      %s52 = sphi 0, %s50
      %s53 = sphi 0, %s52
      %s67 = sphi 0, %s53
      %s75 = sphi 0, %s77
      %s78 = sphi 0, %s75
      %s79 = sphi 0, %s78
      %s95 = sphi 0, %s79
      %s103 = sphi 0, %s105
      %s106 = sphi 0, %s103
      %s107 = sphi 0, %s106
      %s123 = sphi 0, %s107
    $region4: #{fused_mul_conv1x1_bn.3} parent=1 // loop_header_branch
      %12 = sbr.rel (%p10) target = $region8
    $region5: #{fused_mul_conv1x1_bn.3} parent=1 // loop_body
      %s14 = ssub.s32 %s9, 1
      %s15 = ssub.s32 %s9, 2
      %s22 = sadd.s32 1, %s17
      %p23 = scmp.ge.s32.totalorder %s22, 5
      %s24 = scalar_select %p23, 0, %s22
      %s25 = sadd.s32 1, %s16
      %s26 = scalar_select %p23, %s25, %s16
      %p27 = scmp.ge.s32.totalorder %s26, 1
      %s28 = scalar_select %p27, 0, %s26
      %s30 = sadd.s32 %s29, 1
      %p33 = scmp.eq.s32.totalorder %s9, 4
      %p34 = scmp.ne.s32.totalorder %s29, %s31
      %p35 = scmp.eq.s32.totalorder %s9, 0
      %p36 = por %p34, %p35
      %p37 = scmp.ne.s32.totalorder %s29, %s31
      %p38 = scmp.eq.s32.totalorder %s14, 4
      %p39 = por %p37, %p38
      %p40 = scmp.ne.s32.totalorder %s31, %s32
      %p41 = scmp.eq.s32.totalorder %s14, 0
      %p42 = por %p40, %p41
      %p43 = scmp.ne.s32.totalorder %s31, %s32
      %p44 = scmp.eq.s32.totalorder %s15, 4
      %p45 = por %p43, %p44
      %p47 = scmp.ne.s32.totalorder %s32, %s46
      %p48 = scmp.eq.s32.totalorder %s15, 0
      %p49 = por %p47, %p48
      %s51 = sadd.s32 %s50, 1
      %p54 = scmp.eq.s32.totalorder %s9, 4
      %p55 = scmp.ne.s32.totalorder %s50, %s52
      %p56 = scmp.eq.s32.totalorder %s9, 0
      %p57 = por %p55, %p56
      %p58 = scmp.ne.s32.totalorder %s50, %s52
      %p59 = scmp.eq.s32.totalorder %s14, 4
      %p60 = por %p58, %p59
      %p61 = scmp.ne.s32.totalorder %s52, %s53
      %p62 = scmp.eq.s32.totalorder %s14, 0
      %p63 = por %p61, %p62
      %p64 = scmp.ne.s32.totalorder %s52, %s53
      %p65 = scmp.eq.s32.totalorder %s15, 4
      %p66 = por %p64, %p65
      %p68 = scmp.ne.s32.totalorder %s53, %s67
      %p69 = scmp.eq.s32.totalorder %s15, 0
      %p70 = por %p68, %p69
      %s71 = ssub.s32 %s16, %s28
      %s72 = ssub.s32 %s17, %s24
      %s73 = sor.u32 %s71, %s72
      %p74 = scmp.eq.s32.totalorder %s73, 0
      %s76 = sadd.s32 %s75, 1
      %s77 = scalar_select %p74, %s75, %s76
      %p80 = pneg %p74
      %p81 = scmp.eq.s32.totalorder %s9, 4
      %p82 = por %p80, %p81
      %p83 = scmp.ne.s32.totalorder %s75, %s78
      %p84 = scmp.eq.s32.totalorder %s9, 0
      %p85 = por %p83, %p84
      %p86 = scmp.ne.s32.totalorder %s75, %s78
      %p87 = scmp.eq.s32.totalorder %s14, 4
      %p88 = por %p86, %p87
      %p89 = scmp.ne.s32.totalorder %s78, %s79
      %p90 = scmp.eq.s32.totalorder %s14, 0
      %p91 = por %p89, %p90
      %p92 = scmp.ne.s32.totalorder %s78, %s79
      %p93 = scmp.eq.s32.totalorder %s15, 4
      %p94 = por %p92, %p93
      %p96 = scmp.ne.s32.totalorder %s79, %s95
      %p97 = scmp.eq.s32.totalorder %s15, 0
      %p98 = por %p96, %p97
      %s99 = ssub.s32 %s16, %s28
      %s100 = ssub.s32 %s17, %s24
      %s101 = sor.u32 %s99, %s100
      %p102 = scmp.eq.s32.totalorder %s101, 0
      %s104 = sadd.s32 %s103, 1
      %s105 = scalar_select %p102, %s103, %s104
      %p108 = pneg %p102
      %p109 = scmp.eq.s32.totalorder %s9, 4
      %p110 = por %p108, %p109
      %p111 = scmp.ne.s32.totalorder %s103, %s106
      %p112 = scmp.eq.s32.totalorder %s9, 0
      %p113 = por %p111, %p112
      %p114 = scmp.ne.s32.totalorder %s103, %s106
      %p115 = scmp.eq.s32.totalorder %s14, 4
      %p116 = por %p114, %p115
      %p117 = scmp.ne.s32.totalorder %s106, %s107
      %p118 = scmp.eq.s32.totalorder %s14, 0
      %p119 = por %p117, %p118
      %p120 = scmp.ne.s32.totalorder %s106, %s107
      %p121 = scmp.eq.s32.totalorder %s15, 4
      %p122 = por %p120, %p121
      %p124 = scmp.ne.s32.totalorder %s107, %s123
      %p125 = scmp.eq.s32.totalorder %s15, 0
      %p126 = por %p124, %p125
      %p127 = scmp.le.s32.totalorder 1, %s9
      %p128 = scmp.lt.s32.totalorder %s9, 6
      %p129 = pnand %p127, %p128
      %p130 = pneg %p129
      // Predicated region
      $region9: #{fused_mul_conv1x1_bn.3} parent=5 // pred_check
        _
      $region10: #{fused_mul_conv1x1_bn.3} parent=5 // pred_check_branch
        %132 = sbr.rel (%p129) target = $region12
      $region11: #{fused_mul_conv1x1_bn.3} parent=5 // pred_region
        %s133 = ssub.s32 %s9, 1
        // Predicated region
        $region13: #{fused_mul_conv1x1_bn.3} parent=11 // pred_check
          %p134 = pneg %p42
        $region14: #{fused_mul_conv1x1_bn.3} parent=11 // pred_check_branch
          %136 = sbr.rel (%p134) target = $region16
        $region15: #{fused_mul_conv1x1_bn.3} parent=11 // pred_region
          _
        $region16: #{fused_mul_conv1x1_bn.3} parent=11 // pred_fallthru
          _
        // Predicated region
        $region17: #{fused_mul_conv1x1_bn.3} parent=11 // pred_check
          %p137 = pneg %p63
        $region18: #{fused_mul_conv1x1_bn.3} parent=11 // pred_check_branch
          %139 = sbr.rel (%p137) target = $region20
        $region19: #{fused_mul_conv1x1_bn.3} parent=11 // pred_region
          _
        $region20: #{fused_mul_conv1x1_bn.3} parent=11 // pred_fallthru
          _
      $region12: #{fused_mul_conv1x1_bn.3} parent=5 // pred_fallthru
        _
      %p140 = scmp.lt.s32.totalorder %s9, 5
      // Predicated region
      $region21: #{fused_mul_conv1x1_bn.3} parent=5 // pred_check
        %p141 = pneg %p140
      $region22: #{fused_mul_conv1x1_bn.3} parent=5 // pred_check_branch
        %143 = sbr.rel (%p141) target = $region24
      $region23: #{fused_mul_conv1x1_bn.3} parent=5 // pred_region
        // Predicated region
        $region25: #{fused_mul_conv1x1_bn.3} parent=23 // pred_check
          %p144 = pneg %p85
        $region26: #{fused_mul_conv1x1_bn.3} parent=23 // pred_check_branch
          %146 = sbr.rel (%p144) target = $region28
        $region27: #{fused_mul_conv1x1_bn.3} parent=23 // pred_region
          %s147 = sand.u32 %s75, 1
          %s148 = sand.u32 %s75, 1
          %s149 = smul.addr %s148, 240
          %s150 = scalar_lea.vmem [#allocation2], %s149
          %s151 = smul.u32 6, %s17
          %s152 = ssub.s32 25, %s151
          %p153 = scmp.lt.s32.totalorder %s152, 6
          %s154 = scalar_select %p153, %s152, 6
          %s155 = smul.u32 40, %s154
          %p156 = scmp.ne.s32.totalorder 0, %s155
          %s157 = smul.addr %s16, 125
          %s158 = sadd.s32 %s151, %s157
          %s159 = smul.addr %s158, 8
          %s160 = scalar_lea.vmem %s2, %s159
          %s161 = smul.u32 %s154, 8
          // Predicated region
          $region29: #{fused_mul_conv1x1_bn.3} parent=27 // pred_check
            %p162 = pneg %p156
          $region30: #{fused_mul_conv1x1_bn.3} parent=27 // pred_check_branch
            %164 = sbr.rel (%p162) target = $region32
          $region31: #{fused_mul_conv1x1_bn.3} parent=27 // pred_region
            %p165 = scmp.lt.u32.totalorder %s161, 8
            %p166 = pneg %p165
            // Predicated region
            $region33: #{fused_mul_conv1x1_bn.3} parent=31 // pred_check
              _
            $region34: #{fused_mul_conv1x1_bn.3} parent=31 // pred_check_branch
              %168 = sbr.rel (%p165) target = $region36
            $region35: #{fused_mul_conv1x1_bn.3} parent=31 // pred_region
              %s192 = sand.u32 %s161, 7
              %p193 = scmp.eq.s32.totalorder %s192, 0
              // Predicated region
              $region48: #{fused_mul_conv1x1_bn.3} parent=35 // pred_check
                %p194 = pneg %p193
              $region49: #{fused_mul_conv1x1_bn.3} parent=35 // pred_check_branch
                %196 = sbr.rel (%p194) target = $region51
              $region50: #{fused_mul_conv1x1_bn.3} parent=35 // pred_region
                %s197 = sshrl.u32 %s161, 3
                %s198 = sshrl.u32 %s197, 3
                // While loop
                $region52: #{fused_mul_conv1x1_bn.3} parent=50 // loop_pre_header
                  _
                $region53: #{fused_mul_conv1x1_bn.3} parent=50 // loop_header
                  %s200 = sphi 0, %s202
                  %p201 = scmp.ge.s32.totalorder %s200, %s198
                  %s205 = sphi 0, %s290
                  %s206 = sphi %s160, %s293
                  %s207 = sphi %s150, %s294
                $region54: #{fused_mul_conv1x1_bn.3} parent=50 // loop_header_branch
                  %204 = sbr.rel (%p201) target = $region58
                $region55: #{fused_mul_conv1x1_bn.3} parent=50 // loop_body
                  %v208 = vld [vmem:[%s206] sm:$0xff]
                  %209 = vst [vmem:[%s207] sm:$0xff] %v208
                  %v210 = vld [vmem:[%s206 + $0x8] sm:$0xff]
                  %211 = vst [vmem:[%s207 + $0x8] sm:$0xff] %v210
                  %v212 = vld [vmem:[%s206 + $0x10] sm:$0xff]
                  %213 = vst [vmem:[%s207 + $0x10] sm:$0xff] %v212
                  %v214 = vld [vmem:[%s206 + $0x18] sm:$0xff]
                  %215 = vst [vmem:[%s207 + $0x18] sm:$0xff] %v214
                  %v216 = vld [vmem:[%s206 + $0x20] sm:$0xff]
                  %217 = vst [vmem:[%s207 + $0x20] sm:$0xff] %v216
                  %v218 = vld [vmem:[%s206 + $0x28] sm:$0xff]
                  %219 = vst [vmem:[%s207 + $0x28] sm:$0xff] %v218
                  %v220 = vld [vmem:[%s206 + $0x30] sm:$0xff]
                  %221 = vst [vmem:[%s207 + $0x30] sm:$0xff] %v220
                  %v222 = vld [vmem:[%s206 + $0x38] sm:$0xff]
                  %223 = vst [vmem:[%s207 + $0x38] sm:$0xff] %v222
                  %v224 = vld [vmem:[%s206 + $0xc8] sm:$0xff]
                  %225 = vst [vmem:[%s207 + $0x30] sm:$0xff] %v224
                  %v226 = vld [vmem:[%s206 + $0xd0] sm:$0xff]
                  %227 = vst [vmem:[%s207 + $0x38] sm:$0xff] %v226
                  %v228 = vld [vmem:[%s206 + $0xd8] sm:$0xff]
                  %229 = vst [vmem:[%s207 + $0x40] sm:$0xff] %v228
                  %v230 = vld [vmem:[%s206 + $0xe0] sm:$0xff]
                  %231 = vst [vmem:[%s207 + $0x48] sm:$0xff] %v230
                  %v232 = vld [vmem:[%s206 + $0xe8] sm:$0xff]
                  %233 = vst [vmem:[%s207 + $0x50] sm:$0xff] %v232
                  %v234 = vld [vmem:[%s206 + $0xf0] sm:$0xff]
                  %235 = vst [vmem:[%s207 + $0x58] sm:$0xff] %v234
                  %v236 = vld [vmem:[%s206 + $0xf8] sm:$0xff]
                  %237 = vst [vmem:[%s207 + $0x60] sm:$0xff] %v236
                  %v238 = vld [vmem:[%s206 + $0x100] sm:$0xff]
                  %239 = vst [vmem:[%s207 + $0x68] sm:$0xff] %v238
                  %v240 = vld [vmem:[%s206 + $0x190] sm:$0xff]
                  %241 = vst [vmem:[%s207 + $0x60] sm:$0xff] %v240
                  %v242 = vld [vmem:[%s206 + $0x198] sm:$0xff]
                  %243 = vst [vmem:[%s207 + $0x68] sm:$0xff] %v242
                  %v244 = vld [vmem:[%s206 + $0x1a0] sm:$0xff]
                  %245 = vst [vmem:[%s207 + $0x70] sm:$0xff] %v244
                  %v246 = vld [vmem:[%s206 + $0x1a8] sm:$0xff]
                  %247 = vst [vmem:[%s207 + $0x78] sm:$0xff] %v246
                  %v248 = vld [vmem:[%s206 + $0x1b0] sm:$0xff]
                  %249 = vst [vmem:[%s207 + $0x80] sm:$0xff] %v248
                  %v250 = vld [vmem:[%s206 + $0x1b8] sm:$0xff]
                  %251 = vst [vmem:[%s207 + $0x88] sm:$0xff] %v250
                  %v252 = vld [vmem:[%s206 + $0x1c0] sm:$0xff]
                  %253 = vst [vmem:[%s207 + $0x90] sm:$0xff] %v252
                  %v254 = vld [vmem:[%s206 + $0x1c8] sm:$0xff]
                  %255 = vst [vmem:[%s207 + $0x98] sm:$0xff] %v254
                  %v256 = vld [vmem:[%s206 + $0x258] sm:$0xff]
                  %257 = vst [vmem:[%s207 + $0x90] sm:$0xff] %v256
                  %v258 = vld [vmem:[%s206 + $0x260] sm:$0xff]
                  %259 = vst [vmem:[%s207 + $0x98] sm:$0xff] %v258
                  %v260 = vld [vmem:[%s206 + $0x268] sm:$0xff]
                  %261 = vst [vmem:[%s207 + $0xa0] sm:$0xff] %v260
                  %v262 = vld [vmem:[%s206 + $0x270] sm:$0xff]
                  %263 = vst [vmem:[%s207 + $0xa8] sm:$0xff] %v262
                  %v264 = vld [vmem:[%s206 + $0x278] sm:$0xff]
                  %265 = vst [vmem:[%s207 + $0xb0] sm:$0xff] %v264
                  %v266 = vld [vmem:[%s206 + $0x280] sm:$0xff]
                  %267 = vst [vmem:[%s207 + $0xb8] sm:$0xff] %v266
                  %v268 = vld [vmem:[%s206 + $0x288] sm:$0xff]
                  %269 = vst [vmem:[%s207 + $0xc0] sm:$0xff] %v268
                  %v270 = vld [vmem:[%s206 + $0x290] sm:$0xff]
                  %271 = vst [vmem:[%s207 + $0xc8] sm:$0xff] %v270
                  %v272 = vld [vmem:[%s206 + $0x320] sm:$0xff]
                  %273 = vst [vmem:[%s207 + $0xc0] sm:$0xff] %v272
                  %v274 = vld [vmem:[%s206 + $0x328] sm:$0xff]
                  %275 = vst [vmem:[%s207 + $0xc8] sm:$0xff] %v274
                  %v276 = vld [vmem:[%s206 + $0x330] sm:$0xff]
                  %277 = vst [vmem:[%s207 + $0xd0] sm:$0xff] %v276
                  %v278 = vld [vmem:[%s206 + $0x338] sm:$0xff]
                  %279 = vst [vmem:[%s207 + $0xd8] sm:$0xff] %v278
                  %v280 = vld [vmem:[%s206 + $0x340] sm:$0xff]
                  %281 = vst [vmem:[%s207 + $0xe0] sm:$0xff] %v280
                  %v282 = vld [vmem:[%s206 + $0x348] sm:$0xff]
                  %283 = vst [vmem:[%s207 + $0xe8] sm:$0xff] %v282
                  %v284 = vld [vmem:[%s206 + $0x350] sm:$0xff]
                  %285 = vst [vmem:[%s207 + $0xf0] sm:$0xff] %v284
                  %v286 = vld [vmem:[%s206 + $0x358] sm:$0xff]
                  %287 = vst [vmem:[%s207 + $0xf8] sm:$0xff] %v286
                  %s288 = sadd.s32 1, %s205
                  %p289 = scmp.ge.s32.totalorder %s288, %s198
                  %s290 = scalar_select %p289, 0, %s288
                  %s291 = smul.u32 %s290, 64
                  %s292 = smul.u32 %s290, 64
                  %s293 = scalar_lea.vmem %s160, %s291
                  %s294 = scalar_lea.vmem %s150, %s292 [#allocation2]
                $region56: #{fused_mul_conv1x1_bn.3} parent=50 // loop_footer
                  %s202 = sadd.s32 %s200, 1
                $region57: #{fused_mul_conv1x1_bn.3} parent=50 // loop_footer_branch
                  %199 = sbr.rel target = $region53
                $region58: #{fused_mul_conv1x1_bn.3} parent=50 // loop_exit
                  _
                %s295 = sshrl.u32 %s197, 3
                %s296 = sand.u32 %s197, 7
                %s297 = smul.u32 %s295, 8
                %s298 = smul.u32 8, %s297
                %s299 = scalar_lea.vmem %s160, %s298
                %s300 = smul.u32 8, %s297
                %s301 = scalar_lea.vmem %s150, %s300 [#allocation2]
                // While loop
                $region59: #{fused_mul_conv1x1_bn.3} parent=50 // loop_pre_header
                  _
                $region60: #{fused_mul_conv1x1_bn.3} parent=50 // loop_header
                  %s303 = sphi 0, %s305
                  %p304 = scmp.ge.s32.totalorder %s303, %s296
                  %s308 = sphi 0, %s323
                  %s309 = sphi %s299, %s326
                  %s310 = sphi %s301, %s327
                $region61: #{fused_mul_conv1x1_bn.3} parent=50 // loop_header_branch
                  %307 = sbr.rel (%p304) target = $region65
                $region62: #{fused_mul_conv1x1_bn.3} parent=50 // loop_body
                  %v311 = vld [vmem:[%s309] sm:$0xff]
                  %312 = vst [vmem:[%s310] sm:$0xff] %v311
                  %v313 = vld [vmem:[%s309 + $0xc8] sm:$0xff]
                  %314 = vst [vmem:[%s310 + $0x30] sm:$0xff] %v313
                  %v315 = vld [vmem:[%s309 + $0x190] sm:$0xff]
                  %316 = vst [vmem:[%s310 + $0x60] sm:$0xff] %v315
                  %v317 = vld [vmem:[%s309 + $0x258] sm:$0xff]
                  %318 = vst [vmem:[%s310 + $0x90] sm:$0xff] %v317
                  %v319 = vld [vmem:[%s309 + $0x320] sm:$0xff]
                  %320 = vst [vmem:[%s310 + $0xc0] sm:$0xff] %v319
                  %s321 = sadd.s32 1, %s308
                  %p322 = scmp.ge.s32.totalorder %s321, %s296
                  %s323 = scalar_select %p322, 0, %s321
                  %s324 = smul.u32 %s323, 8
                  %s325 = smul.u32 %s323, 8
                  %s326 = scalar_lea.vmem %s299, %s324
                  %s327 = scalar_lea.vmem %s301, %s325 [#allocation2]
                $region63: #{fused_mul_conv1x1_bn.3} parent=50 // loop_footer
                  %s305 = sadd.s32 %s303, 1
                $region64: #{fused_mul_conv1x1_bn.3} parent=50 // loop_footer_branch
                  %302 = sbr.rel target = $region60
                $region65: #{fused_mul_conv1x1_bn.3} parent=50 // loop_exit
                  _
              $region51: #{fused_mul_conv1x1_bn.3} parent=35 // pred_fallthru
                _
              %p328 = pneg %p193
              // Predicated region
              $region66: #{fused_mul_conv1x1_bn.3} parent=35 // pred_check
                _
              $region67: #{fused_mul_conv1x1_bn.3} parent=35 // pred_check_branch
                %330 = sbr.rel (%p193) target = $region69
              $region68: #{fused_mul_conv1x1_bn.3} parent=35 // pred_region
                %s331 = sand.u32 %s161, 7
                %s332 = ssub.s32 %s161, %s331
                %s333 = scalar_lea.vmem %s160, %s332
                %s334 = ssub.s32 %s161, %s331
                %s335 = scalar_lea.vmem %s150, %s334 [#allocation2]
                %s336 = sshrl.u32 %s161, 3
                %s337 = sshrl.u32 %s336, 3
                // While loop
                $region70: #{fused_mul_conv1x1_bn.3} parent=68 // loop_pre_header
                  _
                $region71: #{fused_mul_conv1x1_bn.3} parent=68 // loop_header
                  %s339 = sphi 0, %s341
                  %p340 = scmp.ge.s32.totalorder %s339, %s337
                  %s344 = sphi 0, %s429
                  %s345 = sphi %s160, %s432
                  %s346 = sphi %s150, %s433
                $region72: #{fused_mul_conv1x1_bn.3} parent=68 // loop_header_branch
                  %343 = sbr.rel (%p340) target = $region76
                $region73: #{fused_mul_conv1x1_bn.3} parent=68 // loop_body
                  %v347 = vld [vmem:[%s345] sm:$0xff]
                  %348 = vst [vmem:[%s346] sm:$0xff] %v347
                  %v349 = vld [vmem:[%s345 + $0x8] sm:$0xff]
                  %350 = vst [vmem:[%s346 + $0x8] sm:$0xff] %v349
                  %v351 = vld [vmem:[%s345 + $0x10] sm:$0xff]
                  %352 = vst [vmem:[%s346 + $0x10] sm:$0xff] %v351
                  %v353 = vld [vmem:[%s345 + $0x18] sm:$0xff]
                  %354 = vst [vmem:[%s346 + $0x18] sm:$0xff] %v353
                  %v355 = vld [vmem:[%s345 + $0x20] sm:$0xff]
                  %356 = vst [vmem:[%s346 + $0x20] sm:$0xff] %v355
                  %v357 = vld [vmem:[%s345 + $0x28] sm:$0xff]
                  %358 = vst [vmem:[%s346 + $0x28] sm:$0xff] %v357
                  %v359 = vld [vmem:[%s345 + $0x30] sm:$0xff]
                  %360 = vst [vmem:[%s346 + $0x30] sm:$0xff] %v359
                  %v361 = vld [vmem:[%s345 + $0x38] sm:$0xff]
                  %362 = vst [vmem:[%s346 + $0x38] sm:$0xff] %v361
                  %v363 = vld [vmem:[%s345 + $0xc8] sm:$0xff]
                  %364 = vst [vmem:[%s346 + $0x30] sm:$0xff] %v363
                  %v365 = vld [vmem:[%s345 + $0xd0] sm:$0xff]
                  %366 = vst [vmem:[%s346 + $0x38] sm:$0xff] %v365
                  %v367 = vld [vmem:[%s345 + $0xd8] sm:$0xff]
                  %368 = vst [vmem:[%s346 + $0x40] sm:$0xff] %v367
                  %v369 = vld [vmem:[%s345 + $0xe0] sm:$0xff]
                  %370 = vst [vmem:[%s346 + $0x48] sm:$0xff] %v369
                  %v371 = vld [vmem:[%s345 + $0xe8] sm:$0xff]
                  %372 = vst [vmem:[%s346 + $0x50] sm:$0xff] %v371
                  %v373 = vld [vmem:[%s345 + $0xf0] sm:$0xff]
                  %374 = vst [vmem:[%s346 + $0x58] sm:$0xff] %v373
                  %v375 = vld [vmem:[%s345 + $0xf8] sm:$0xff]
                  %376 = vst [vmem:[%s346 + $0x60] sm:$0xff] %v375
                  %v377 = vld [vmem:[%s345 + $0x100] sm:$0xff]
                  %378 = vst [vmem:[%s346 + $0x68] sm:$0xff] %v377
                  %v379 = vld [vmem:[%s345 + $0x190] sm:$0xff]
                  %380 = vst [vmem:[%s346 + $0x60] sm:$0xff] %v379
                  %v381 = vld [vmem:[%s345 + $0x198] sm:$0xff]
                  %382 = vst [vmem:[%s346 + $0x68] sm:$0xff] %v381
                  %v383 = vld [vmem:[%s345 + $0x1a0] sm:$0xff]
                  %384 = vst [vmem:[%s346 + $0x70] sm:$0xff] %v383
                  %v385 = vld [vmem:[%s345 + $0x1a8] sm:$0xff]
                  %386 = vst [vmem:[%s346 + $0x78] sm:$0xff] %v385
                  %v387 = vld [vmem:[%s345 + $0x1b0] sm:$0xff]
                  %388 = vst [vmem:[%s346 + $0x80] sm:$0xff] %v387
                  %v389 = vld [vmem:[%s345 + $0x1b8] sm:$0xff]
                  %390 = vst [vmem:[%s346 + $0x88] sm:$0xff] %v389
                  %v391 = vld [vmem:[%s345 + $0x1c0] sm:$0xff]
                  %392 = vst [vmem:[%s346 + $0x90] sm:$0xff] %v391
                  %v393 = vld [vmem:[%s345 + $0x1c8] sm:$0xff]
                  %394 = vst [vmem:[%s346 + $0x98] sm:$0xff] %v393
                  %v395 = vld [vmem:[%s345 + $0x258] sm:$0xff]
                  %396 = vst [vmem:[%s346 + $0x90] sm:$0xff] %v395
                  %v397 = vld [vmem:[%s345 + $0x260] sm:$0xff]
                  %398 = vst [vmem:[%s346 + $0x98] sm:$0xff] %v397
                  %v399 = vld [vmem:[%s345 + $0x268] sm:$0xff]
                  %400 = vst [vmem:[%s346 + $0xa0] sm:$0xff] %v399
                  %v401 = vld [vmem:[%s345 + $0x270] sm:$0xff]
                  %402 = vst [vmem:[%s346 + $0xa8] sm:$0xff] %v401
                  %v403 = vld [vmem:[%s345 + $0x278] sm:$0xff]
                  %404 = vst [vmem:[%s346 + $0xb0] sm:$0xff] %v403
                  %v405 = vld [vmem:[%s345 + $0x280] sm:$0xff]
                  %406 = vst [vmem:[%s346 + $0xb8] sm:$0xff] %v405
                  %v407 = vld [vmem:[%s345 + $0x288] sm:$0xff]
                  %408 = vst [vmem:[%s346 + $0xc0] sm:$0xff] %v407
                  %v409 = vld [vmem:[%s345 + $0x290] sm:$0xff]
                  %410 = vst [vmem:[%s346 + $0xc8] sm:$0xff] %v409
                  %v411 = vld [vmem:[%s345 + $0x320] sm:$0xff]
                  %412 = vst [vmem:[%s346 + $0xc0] sm:$0xff] %v411
                  %v413 = vld [vmem:[%s345 + $0x328] sm:$0xff]
                  %414 = vst [vmem:[%s346 + $0xc8] sm:$0xff] %v413
                  %v415 = vld [vmem:[%s345 + $0x330] sm:$0xff]
                  %416 = vst [vmem:[%s346 + $0xd0] sm:$0xff] %v415
                  %v417 = vld [vmem:[%s345 + $0x338] sm:$0xff]
                  %418 = vst [vmem:[%s346 + $0xd8] sm:$0xff] %v417
                  %v419 = vld [vmem:[%s345 + $0x340] sm:$0xff]
                  %420 = vst [vmem:[%s346 + $0xe0] sm:$0xff] %v419
                  %v421 = vld [vmem:[%s345 + $0x348] sm:$0xff]
                  %422 = vst [vmem:[%s346 + $0xe8] sm:$0xff] %v421
                  %v423 = vld [vmem:[%s345 + $0x350] sm:$0xff]
                  %424 = vst [vmem:[%s346 + $0xf0] sm:$0xff] %v423
                  %v425 = vld [vmem:[%s345 + $0x358] sm:$0xff]
                  %426 = vst [vmem:[%s346 + $0xf8] sm:$0xff] %v425
                  %s427 = sadd.s32 1, %s344
                  %p428 = scmp.ge.s32.totalorder %s427, %s337
                  %s429 = scalar_select %p428, 0, %s427
                  %s430 = smul.u32 %s429, 64
                  %s431 = smul.u32 %s429, 64
                  %s432 = scalar_lea.vmem %s160, %s430
                  %s433 = scalar_lea.vmem %s150, %s431 [#allocation2]
                $region74: #{fused_mul_conv1x1_bn.3} parent=68 // loop_footer
                  %s341 = sadd.s32 %s339, 1
                $region75: #{fused_mul_conv1x1_bn.3} parent=68 // loop_footer_branch
                  %338 = sbr.rel target = $region71
                $region76: #{fused_mul_conv1x1_bn.3} parent=68 // loop_exit
                  _
                %s434 = sshrl.u32 %s336, 3
                %s435 = sand.u32 %s336, 7
                %s436 = smul.u32 %s434, 8
                %s437 = smul.u32 8, %s436
                %s438 = scalar_lea.vmem %s160, %s437
                %s439 = smul.u32 8, %s436
                %s440 = scalar_lea.vmem %s150, %s439 [#allocation2]
                // While loop
                $region77: #{fused_mul_conv1x1_bn.3} parent=68 // loop_pre_header
                  _
                $region78: #{fused_mul_conv1x1_bn.3} parent=68 // loop_header
                  %s442 = sphi 0, %s444
                  %p443 = scmp.ge.s32.totalorder %s442, %s435
                  %s447 = sphi 0, %s462
                  %s448 = sphi %s438, %s465
                  %s449 = sphi %s440, %s466
                $region79: #{fused_mul_conv1x1_bn.3} parent=68 // loop_header_branch
                  %446 = sbr.rel (%p443) target = $region83
                $region80: #{fused_mul_conv1x1_bn.3} parent=68 // loop_body
                  %v450 = vld [vmem:[%s448] sm:$0xff]
                  %451 = vst [vmem:[%s449] sm:$0xff] %v450
                  %v452 = vld [vmem:[%s448 + $0xc8] sm:$0xff]
                  %453 = vst [vmem:[%s449 + $0x30] sm:$0xff] %v452
                  %v454 = vld [vmem:[%s448 + $0x190] sm:$0xff]
                  %455 = vst [vmem:[%s449 + $0x60] sm:$0xff] %v454
                  %v456 = vld [vmem:[%s448 + $0x258] sm:$0xff]
                  %457 = vst [vmem:[%s449 + $0x90] sm:$0xff] %v456
                  %v458 = vld [vmem:[%s448 + $0x320] sm:$0xff]
                  %459 = vst [vmem:[%s449 + $0xc0] sm:$0xff] %v458
                  %s460 = sadd.s32 1, %s447
                  %p461 = scmp.ge.s32.totalorder %s460, %s435
                  %s462 = scalar_select %p461, 0, %s460
                  %s463 = smul.u32 %s462, 8
                  %s464 = smul.u32 %s462, 8
                  %s465 = scalar_lea.vmem %s438, %s463
                  %s466 = scalar_lea.vmem %s440, %s464 [#allocation2]
                $region81: #{fused_mul_conv1x1_bn.3} parent=68 // loop_footer
                  %s444 = sadd.s32 %s442, 1
                $region82: #{fused_mul_conv1x1_bn.3} parent=68 // loop_footer_branch
                  %441 = sbr.rel target = $region78
                $region83: #{fused_mul_conv1x1_bn.3} parent=68 // loop_exit
                  _
                %s467 = sshll.u32 1, %s331
                %s468 = ssub.s32 %s467, 1
                loop: start=0, step=1, limit=1
                $region84: #{fused_mul_conv1x1_bn.3} parent=68 // loop_pre_header
                  _
                $region85: #{fused_mul_conv1x1_bn.3} parent=68 // loop_header
                  %s470 = sphi 0, %s474
                  %p471 = scmp.ge.s32.totalorder %s470, 1
                  %s475 = sphi %s333, %s333
                  %s476 = sphi %s335, %s335
                $region86: #{fused_mul_conv1x1_bn.3} parent=68 // loop_header_branch
                  %473 = sbr.rel (%p471) target = $region90
                $region87: #{fused_mul_conv1x1_bn.3} parent=68 // loop_body
                  %v477 = vld [vmem:[%s475] sm:%s468]
                  %478 = vst [vmem:[%s476] sm:%s468] %v477
                  %v479 = vld [vmem:[%s475 + $0xc8] sm:%s468]
                  %480 = vst [vmem:[%s476 + $0x30] sm:%s468] %v479
                  %v481 = vld [vmem:[%s475 + $0x190] sm:%s468]
                  %482 = vst [vmem:[%s476 + $0x60] sm:%s468] %v481
                  %v483 = vld [vmem:[%s475 + $0x258] sm:%s468]
                  %484 = vst [vmem:[%s476 + $0x90] sm:%s468] %v483
                  %v485 = vld [vmem:[%s475 + $0x320] sm:%s468]
                  %486 = vst [vmem:[%s476 + $0xc0] sm:%s468] %v485
                $region88: #{fused_mul_conv1x1_bn.3} parent=68 // loop_footer
                  %s474 = sadd.s32 1, %s470
                $region89: #{fused_mul_conv1x1_bn.3} parent=68 // loop_footer_branch
                  %469 = sbr.rel target = $region85
                $region90: #{fused_mul_conv1x1_bn.3} parent=68 // loop_exit
                  _
              $region69: #{fused_mul_conv1x1_bn.3} parent=35 // pred_fallthru
                _
            $region36: #{fused_mul_conv1x1_bn.3} parent=31 // pred_fallthru
              _
            // Predicated region
            $region37: #{fused_mul_conv1x1_bn.3} parent=31 // pred_check
              %p169 = pneg %p165
            $region38: #{fused_mul_conv1x1_bn.3} parent=31 // pred_check_branch
              %171 = sbr.rel (%p169) target = $region40
            $region39: #{fused_mul_conv1x1_bn.3} parent=31 // pred_region
              %s172 = sshll.u32 1, %s161
              %s173 = ssub.s32 %s172, 1
              loop: start=0, step=1, limit=1
              $region41: #{fused_mul_conv1x1_bn.3} parent=39 // loop_pre_header
                _
              $region42: #{fused_mul_conv1x1_bn.3} parent=39 // loop_header
                %s175 = sphi 0, %s179
                %p176 = scmp.ge.s32.totalorder %s175, 1
                %s180 = sphi %s160, %s160
                %s181 = sphi %s150, %s150
              $region43: #{fused_mul_conv1x1_bn.3} parent=39 // loop_header_branch
                %178 = sbr.rel (%p176) target = $region47
              $region44: #{fused_mul_conv1x1_bn.3} parent=39 // loop_body
                %v182 = vld [vmem:[%s180] sm:%s173]
                %183 = vst [vmem:[%s181] sm:%s173] %v182
                %v184 = vld [vmem:[%s180 + $0xc8] sm:%s173]
                %185 = vst [vmem:[%s181 + $0x30] sm:%s173] %v184
                %v186 = vld [vmem:[%s180 + $0x190] sm:%s173]
                %187 = vst [vmem:[%s181 + $0x60] sm:%s173] %v186
                %v188 = vld [vmem:[%s180 + $0x258] sm:%s173]
                %189 = vst [vmem:[%s181 + $0x90] sm:%s173] %v188
                %v190 = vld [vmem:[%s180 + $0x320] sm:%s173]
                %191 = vst [vmem:[%s181 + $0xc0] sm:%s173] %v190
              $region45: #{fused_mul_conv1x1_bn.3} parent=39 // loop_footer
                %s179 = sadd.s32 1, %s175
              $region46: #{fused_mul_conv1x1_bn.3} parent=39 // loop_footer_branch
                %174 = sbr.rel target = $region42
              $region47: #{fused_mul_conv1x1_bn.3} parent=39 // loop_exit
                _
            $region40: #{fused_mul_conv1x1_bn.3} parent=31 // pred_fallthru
              _
          $region32: #{fused_mul_conv1x1_bn.3} parent=27 // pred_fallthru
            _
          %487 = vnop
        $region28: #{fused_mul_conv1x1_bn.3} parent=23 // pred_fallthru
          _
      $region24: #{fused_mul_conv1x1_bn.3} parent=5 // pred_fallthru
        _
      %p488 = scmp.le.s32.totalorder 1, %s9
      %p489 = scmp.lt.s32.totalorder %s9, 6
      %p490 = pnand %p488, %p489
      %p491 = pneg %p490
      // Predicated region
      $region91: #{fused_mul_conv1x1_bn.3} parent=5 // pred_check
        _
      $region92: #{fused_mul_conv1x1_bn.3} parent=5 // pred_check_branch
        %493 = sbr.rel (%p490) target = $region94
      $region93: #{fused_mul_conv1x1_bn.3} parent=5 // pred_region
        %s494 = ssub.s32 %s9, 1
        %s495 = sand.u32 %s78, 1
        %s496 = sand.u32 %s78, 1
        %s497 = smul.addr %s496, 240
        %s498 = scalar_lea.vmem [#allocation2], %s497
        // Predicated region
        $region95: #{fused_mul_conv1x1_bn.3} parent=93 // pred_check
          %p499 = pneg %p91
        $region96: #{fused_mul_conv1x1_bn.3} parent=93 // pred_check_branch
          %501 = sbr.rel (%p499) target = $region98
        $region97: #{fused_mul_conv1x1_bn.3} parent=93 // pred_region
          _
        $region98: #{fused_mul_conv1x1_bn.3} parent=93 // pred_fallthru
          _
        %p502 = pneg %p42
        %p503 = pneg %p39
        %p504 = pneg %p63
        %p505 = pneg %p60
        %s506 = sand.u32 %s78, 1
        %s507 = sand.u32 %s78, 1
        %s508 = smul.addr %s507, 240
        %s509 = scalar_lea.vmem [#allocation2], %s508
        %p510 = pneg %p91
        %p511 = pneg %p88
        %p512 = pneg %p119
        %p513 = pneg %p116
        %s514 = sand.u32 %s106, 1
        %s515 = sand.u32 %s106, 1
        %s516 = smul.addr %s515, 240
        %s517 = scalar_lea.vmem [#allocation3], %s516
        %s518 = smul.u32 6, %s19
        %s519 = ssub.s32 25, %s518
        %p520 = scmp.lt.s32.totalorder %s519, 6
        %s521 = scalar_select %p520, %s519, 6
        %s522 = smul.u32 40, %s521
        %s523 = smul.u32 6, %s19
        %s524 = ssub.s32 25, %s523
        %p525 = scmp.lt.s32.totalorder %s524, 6
        %s526 = scalar_select %p525, %s524, 6
        %s527 = smul.u32 40, %s526
        %v528 = vld [vmem:[%s0] sm:$0xff]
        %v529 = vld [vmem:[%s0 + $0x8] sm:$0xff]
        %v530 = vld [vmem:[%s0 + $0x10] sm:$0xff]
        %v531 = vld [vmem:[%s0 + $0x18] sm:$0xff]
        %v532 = vld [vmem:[%s0 + $0x20] sm:$0xff]
        %v533 = vld [vmem:[%s0 + $0x28] sm:$0xff]
        %v534 = vld [vmem:[%s0 + $0x30] sm:$0xff]
        %v535 = vld [vmem:[%s0 + $0x38] sm:$0xff]
        %v536 = vld [vmem:[%s0 + $0x40] sm:$0xff]
        %v537 = vld [vmem:[%s0 + $0x48] sm:$0xff]
        %v538 = vld [vmem:[%s0 + $0x50] sm:$0xff]
        %v539 = vld [vmem:[%s0 + $0x58] sm:$0xff]
        %v540 = vld [vmem:[%s0 + $0x60] sm:$0xff]
        %v541 = vld [vmem:[%s0 + $0x68] sm:$0xff]
        %v542 = vld [vmem:[%s0 + $0x70] sm:$0xff]
        %v543 = vld [vmem:[%s0 + $0x78] sm:$0xff]
        %v544 = vld [vmem:[%s0 + $0x80] sm:$0xff]
        %v545 = vld [vmem:[%s0 + $0x88] sm:$0xff]
        %v546 = vld [vmem:[%s0 + $0x90] sm:$0xff]
        %v547 = vld [vmem:[%s0 + $0x98] sm:$0xff]
        %vm548 = vcmask 15360
        %v549 = vsel %vm548, %v528, 0.0
        %v550 = vsel %vm548, %v533, 0.0
        %v551 = vadd.f32 %v549, %v550
        %v552 = vsel %vm548, %v538, 0.0
        %v553 = vadd.f32 %v551, %v552
        %v554 = vsel %vm548, %v543, 0.0
        %v555 = vadd.f32 %v553, %v554
        %v556 = vsel %vm548, %v529, 0.0
        %v557 = vsel %vm548, %v534, 0.0
        %v558 = vadd.f32 %v556, %v557
        %v559 = vsel %vm548, %v539, 0.0
        %v560 = vadd.f32 %v558, %v559
        %v561 = vsel %vm548, %v544, 0.0
        %v562 = vadd.f32 %v560, %v561
        %v563 = vsel %vm548, %v530, 0.0
        %v564 = vsel %vm548, %v535, 0.0
        %v565 = vadd.f32 %v563, %v564
        %v566 = vsel %vm548, %v540, 0.0
        %v567 = vadd.f32 %v565, %v566
        %v568 = vsel %vm548, %v545, 0.0
        %v569 = vadd.f32 %v567, %v568
        %v570 = vsel %vm548, %v531, 0.0
        %v571 = vsel %vm548, %v536, 0.0
        %v572 = vadd.f32 %v570, %v571
        %v573 = vsel %vm548, %v541, 0.0
        %v574 = vadd.f32 %v572, %v573
        %v575 = vsel %vm548, %v546, 0.0
        %v576 = vadd.f32 %v574, %v575
        %v577 = vsel %vm548, %v532, 0.0
        %v578 = vsel %vm548, %v537, 0.0
        %v579 = vadd.f32 %v577, %v578
        %v580 = vsel %vm548, %v542, 0.0
        %v581 = vadd.f32 %v579, %v580
        %v582 = vsel %vm548, %v547, 0.0
        %v583 = vadd.f32 %v581, %v582
        %v584 = vmul.f32 %v555, 0.00031887754
        %v585 = vmul.f32 %v562, 0.00031887754
        %v586 = vmul.f32 %v569, 0.00031887754
        %v587 = vmul.f32 %v576, 0.00031887754
        %v588 = vmul.f32 %v583, 0.00031887754
        %v589 = vmul.f32 %v584, %v584
        %v590 = vmul.f32 %v585, %v585
        %v591 = vmul.f32 %v586, %v586
        %v592 = vmul.f32 %v587, %v587
        %v593 = vmul.f32 %v588, %v588
        %599 = vrot.lane.b32.xlu0 %v589, 1
        %v600 = vpop.permute.xlu0 %599
        %601 = vrot.lane.b32.xlu0 %v590, 1
        %v602 = vpop.permute.xlu0 %601
        %603 = vrot.lane.b32.xlu0 %v591, 1
        %v604 = vpop.permute.xlu0 %603
        %605 = vrot.lane.b32.xlu0 %v592, 1
        %v606 = vpop.permute.xlu0 %605
        %607 = vrot.lane.b32.xlu0 %v593, 1
        %v608 = vpop.permute.xlu0 %607
        %v614 = vsub.f32 %v584, %v600
        %v615 = vsub.f32 %v585, %v602
        %v616 = vsub.f32 %v586, %v604
        %v617 = vsub.f32 %v587, %v606
        %v618 = vsub.f32 %v588, %v608
        %v619 = vmax.f32 %v614, 0.0
        %v620 = vmax.f32 %v615, 0.0
        %v621 = vmax.f32 %v616, 0.0
        %v622 = vmax.f32 %v617, 0.0
        %v623 = vmax.f32 %v618, 0.0
        %v624 = vadd.f32 %v619, 1e-05
        %v625 = vadd.f32 %v620, 1e-05
        %v626 = vadd.f32 %v621, 1e-05
        %v627 = vadd.f32 %v622, 1e-05
        %v628 = vadd.f32 %v623, 1e-05
        %v629 = vrsqrt.pop %v624
        %v630 = vmul.f32 %v629, %v624
        %v631 = vmul.f32 %v630, %v629
        %v632 = vmul.f32 0.5, %v631
        %v633 = vsub.f32 1.5, %v632
        %v634 = vmul.f32 %v629, %v633
        %vm635 = vweird.f32 %v624
        %vm636 = vweird.f32 %v629
        %vm637 = vmor %vm635, %vm636
        %v638 = vsel %vm637, %v629, %v634
        %v639 = vrsqrt.pop %v625
        %v640 = vmul.f32 %v639, %v625
        %v641 = vmul.f32 %v640, %v639
        %v642 = vmul.f32 0.5, %v641
        %v643 = vsub.f32 1.5, %v642
        %v644 = vmul.f32 %v639, %v643
        %vm645 = vweird.f32 %v625
        %vm646 = vweird.f32 %v639
        %vm647 = vmor %vm645, %vm646
        %v648 = vsel %vm647, %v639, %v644
        %v649 = vrsqrt.pop %v626
        %v650 = vmul.f32 %v649, %v626
        %v651 = vmul.f32 %v650, %v649
        %v652 = vmul.f32 0.5, %v651
        %v653 = vsub.f32 1.5, %v652
        %v654 = vmul.f32 %v649, %v653
        %vm655 = vweird.f32 %v626
        %vm656 = vweird.f32 %v649
        %vm657 = vmor %vm655, %vm656
        %v658 = vsel %vm657, %v649, %v654
        %v659 = vrsqrt.pop %v627
        %v660 = vmul.f32 %v659, %v627
        %v661 = vmul.f32 %v660, %v659
        %v662 = vmul.f32 0.5, %v661
        %v663 = vsub.f32 1.5, %v662
        %v664 = vmul.f32 %v659, %v663
        %vm665 = vweird.f32 %v627
        %vm666 = vweird.f32 %v659
        %vm667 = vmor %vm665, %vm666
        %v668 = vsel %vm667, %v659, %v664
        %v669 = vrsqrt.pop %v628
        %v670 = vmul.f32 %v669, %v628
        %v671 = vmul.f32 %v670, %v669
        %v672 = vmul.f32 0.5, %v671
        %v673 = vsub.f32 1.5, %v672
        %v674 = vmul.f32 %v669, %v673
        %vm675 = vweird.f32 %v628
        %vm676 = vweird.f32 %v669
        %vm677 = vmor %vm675, %vm676
        %v678 = vsel %vm677, %v669, %v674
        %v679 = vld [vmem:[%s1] sm:$0xff]
        %v680 = vld [vmem:[%s1 + $0x8] sm:$0xff]
        %v681 = vld [vmem:[%s1 + $0x10] sm:$0xff]
        %v682 = vld [vmem:[%s1 + $0x18] sm:$0xff]
        %v683 = vld [vmem:[%s1 + $0x20] sm:$0xff]
        %689 = vrot.lane.b32.xlu0 %v638, 127
        %v690 = vpop.permute.xlu0 %689
        %691 = vrot.lane.b32.xlu0 %v648, 127
        %v692 = vpop.permute.xlu0 %691
        %693 = vrot.lane.b32.xlu0 %v658, 127
        %v694 = vpop.permute.xlu0 %693
        %695 = vrot.lane.b32.xlu0 %v668, 127
        %v696 = vpop.permute.xlu0 %695
        %697 = vrot.lane.b32.xlu0 %v678, 127
        %v698 = vpop.permute.xlu0 %697
        %v704 = vmul.f32 %v679, %v690
        %v705 = vmul.f32 %v680, %v692
        %v706 = vmul.f32 %v681, %v694
        %v707 = vmul.f32 %v682, %v696
        %v708 = vmul.f32 %v683, %v698
        %v709 = vmul.f32 %v584, %v704
        %v710 = vmul.f32 %v585, %v705
        %v711 = vmul.f32 %v586, %v706
        %v712 = vmul.f32 %v587, %v707
        %v713 = vmul.f32 %v588, %v708
        %719 = vrot.lane.b32.xlu0 %v709, 1
        %v720 = vpop.permute.xlu0 %719
        %721 = vrot.lane.b32.xlu0 %v710, 1
        %v722 = vpop.permute.xlu0 %721
        %723 = vrot.lane.b32.xlu0 %v711, 1
        %v724 = vpop.permute.xlu0 %723
        %725 = vrot.lane.b32.xlu0 %v712, 1
        %v726 = vpop.permute.xlu0 %725
        %727 = vrot.lane.b32.xlu0 %v713, 1
        %v728 = vpop.permute.xlu0 %727
        %v734 = vsub.f32 %v679, %v720
        %v735 = vsub.f32 %v680, %v722
        %v736 = vsub.f32 %v681, %v724
        %v737 = vsub.f32 %v682, %v726
        %v738 = vsub.f32 %v683, %v728
        %v739 = vld [vmem:[%s498] sm:$0xff]
        %v740 = vld [vmem:[%s498 + $0x8] sm:$0xff]
        %v741 = vld [vmem:[%s498 + $0x10] sm:$0xff]
        %v742 = vld [vmem:[%s498 + $0x18] sm:$0xff]
        %v743 = vld [vmem:[%s498 + $0x20] sm:$0xff]
        %v744 = vld [vmem:[%s498 + $0x28] sm:$0xff]
        %v745 = vld [vmem:[%s498 + $0x30] sm:$0xff]
        %v746 = vld [vmem:[%s498 + $0x38] sm:$0xff]
        %v747 = vld [vmem:[%s498 + $0x40] sm:$0xff]
        %v748 = vld [vmem:[%s498 + $0x48] sm:$0xff]
        %v749 = vld [vmem:[%s498 + $0x50] sm:$0xff]
        %v750 = vld [vmem:[%s498 + $0x58] sm:$0xff]
        %v751 = vld [vmem:[%s498 + $0x60] sm:$0xff]
        %v752 = vld [vmem:[%s498 + $0x68] sm:$0xff]
        %v753 = vld [vmem:[%s498 + $0x70] sm:$0xff]
        %v754 = vld [vmem:[%s498 + $0x78] sm:$0xff]
        %v755 = vld [vmem:[%s498 + $0x80] sm:$0xff]
        %v756 = vld [vmem:[%s498 + $0x88] sm:$0xff]
        %v757 = vld [vmem:[%s498 + $0x90] sm:$0xff]
        %v758 = vld [vmem:[%s498 + $0x98] sm:$0xff]
        %v759 = vld [vmem:[%s498 + $0xa0] sm:$0xff]
        %v760 = vld [vmem:[%s498 + $0xa8] sm:$0xff]
        %v761 = vld [vmem:[%s498 + $0xb0] sm:$0xff]
        %v762 = vld [vmem:[%s498 + $0xb8] sm:$0xff]
        %v763 = vld [vmem:[%s498 + $0xc0] sm:$0xff]
        %v764 = vld [vmem:[%s498 + $0xc8] sm:$0xff]
        %v765 = vld [vmem:[%s498 + $0xd0] sm:$0xff]
        %v766 = vld [vmem:[%s498 + $0xd8] sm:$0xff]
        %v767 = vld [vmem:[%s498 + $0xe0] sm:$0xff]
        %v768 = vld [vmem:[%s498 + $0xe8] sm:$0xff]
        %770 = vset.pattern.permute.xlu0 0
        %771 = vperm.xlu0 %770, %v704
        %v772 = vpop.permute.xlu0 %771
        %775 = vset.pattern.permute.xlu0 0
        %776 = vperm.xlu0 %775, %v705
        %v777 = vpop.permute.xlu0 %776
        %780 = vset.pattern.permute.xlu0 0
        %781 = vperm.xlu0 %780, %v706
        %v782 = vpop.permute.xlu0 %781
        %785 = vset.pattern.permute.xlu0 0
        %786 = vperm.xlu0 %785, %v707
        %v787 = vpop.permute.xlu0 %786
        %790 = vset.pattern.permute.xlu0 0
        %791 = vperm.xlu0 %790, %v708
        %v792 = vpop.permute.xlu0 %791
        %v794 = vmul.f32 %v739, %v772
        %v795 = vmul.f32 %v740, %v772
        %v796 = vmul.f32 %v741, %v772
        %v797 = vmul.f32 %v742, %v772
        %v798 = vmul.f32 %v743, %v772
        %v799 = vmul.f32 %v744, %v772
        %v800 = vmul.f32 %v745, %v777
        %v801 = vmul.f32 %v746, %v777
        %v802 = vmul.f32 %v747, %v777
        %v803 = vmul.f32 %v748, %v777
        %v804 = vmul.f32 %v749, %v777
        %v805 = vmul.f32 %v750, %v777
        %v806 = vmul.f32 %v751, %v782
        %v807 = vmul.f32 %v752, %v782
        %v808 = vmul.f32 %v753, %v782
        %v809 = vmul.f32 %v754, %v782
        %v810 = vmul.f32 %v755, %v782
        %v811 = vmul.f32 %v756, %v782
        %v812 = vmul.f32 %v757, %v787
        %v813 = vmul.f32 %v758, %v787
        %v814 = vmul.f32 %v759, %v787
        %v815 = vmul.f32 %v760, %v787
        %v816 = vmul.f32 %v761, %v787
        %v817 = vmul.f32 %v762, %v787
        %v818 = vmul.f32 %v763, %v792
        %v819 = vmul.f32 %v764, %v792
        %v820 = vmul.f32 %v765, %v792
        %v821 = vmul.f32 %v766, %v792
        %v822 = vmul.f32 %v767, %v792
        %v823 = vmul.f32 %v768, %v792
        %825 = vset.pattern.permute.xlu0 1
        %826 = vperm.xlu0 %825, %v734
        %v827 = vpop.permute.xlu0 %826
        %830 = vset.pattern.permute.xlu0 1
        %831 = vperm.xlu0 %830, %v735
        %v832 = vpop.permute.xlu0 %831
        %835 = vset.pattern.permute.xlu0 1
        %836 = vperm.xlu0 %835, %v736
        %v837 = vpop.permute.xlu0 %836
        %840 = vset.pattern.permute.xlu0 1
        %841 = vperm.xlu0 %840, %v737
        %v842 = vpop.permute.xlu0 %841
        %845 = vset.pattern.permute.xlu0 1
        %846 = vperm.xlu0 %845, %v738
        %v847 = vpop.permute.xlu0 %846
        %v849 = vadd.f32 %v794, %v827
        %v850 = vadd.f32 %v795, %v827
        %v851 = vadd.f32 %v796, %v827
        %v852 = vadd.f32 %v797, %v827
        %v853 = vadd.f32 %v798, %v827
        %v854 = vadd.f32 %v799, %v827
        %v855 = vadd.f32 %v800, %v832
        %v856 = vadd.f32 %v801, %v832
        %v857 = vadd.f32 %v802, %v832
        %v858 = vadd.f32 %v803, %v832
        %v859 = vadd.f32 %v804, %v832
        %v860 = vadd.f32 %v805, %v832
        %v861 = vadd.f32 %v806, %v837
        %v862 = vadd.f32 %v807, %v837
        %v863 = vadd.f32 %v808, %v837
        %v864 = vadd.f32 %v809, %v837
        %v865 = vadd.f32 %v810, %v837
        %v866 = vadd.f32 %v811, %v837
        %v867 = vadd.f32 %v812, %v842
        %v868 = vadd.f32 %v813, %v842
        %v869 = vadd.f32 %v814, %v842
        %v870 = vadd.f32 %v815, %v842
        %v871 = vadd.f32 %v816, %v842
        %v872 = vadd.f32 %v817, %v842
        %v873 = vadd.f32 %v818, %v847
        %v874 = vadd.f32 %v819, %v847
        %v875 = vadd.f32 %v820, %v847
        %v876 = vadd.f32 %v821, %v847
        %v877 = vadd.f32 %v822, %v847
        %v878 = vadd.f32 %v823, %v847
        %879 = vst [vmem:[%s517] sm:$0xff] %v849
        %880 = vst [vmem:[%s517 + $0x8] sm:$0xff] %v850
        %881 = vst [vmem:[%s517 + $0x10] sm:$0xff] %v851
        %882 = vst [vmem:[%s517 + $0x18] sm:$0xff] %v852
        %883 = vst [vmem:[%s517 + $0x20] sm:$0xff] %v853
        %884 = vst [vmem:[%s517 + $0x28] sm:$0xff] %v854
        %885 = vst [vmem:[%s517 + $0x30] sm:$0xff] %v855
        %886 = vst [vmem:[%s517 + $0x38] sm:$0xff] %v856
        %887 = vst [vmem:[%s517 + $0x40] sm:$0xff] %v857
        %888 = vst [vmem:[%s517 + $0x48] sm:$0xff] %v858
        %889 = vst [vmem:[%s517 + $0x50] sm:$0xff] %v859
        %890 = vst [vmem:[%s517 + $0x58] sm:$0xff] %v860
        %891 = vst [vmem:[%s517 + $0x60] sm:$0xff] %v861
        %892 = vst [vmem:[%s517 + $0x68] sm:$0xff] %v862
        %893 = vst [vmem:[%s517 + $0x70] sm:$0xff] %v863
        %894 = vst [vmem:[%s517 + $0x78] sm:$0xff] %v864
        %895 = vst [vmem:[%s517 + $0x80] sm:$0xff] %v865
        %896 = vst [vmem:[%s517 + $0x88] sm:$0xff] %v866
        %897 = vst [vmem:[%s517 + $0x90] sm:$0xff] %v867
        %898 = vst [vmem:[%s517 + $0x98] sm:$0xff] %v868
        %899 = vst [vmem:[%s517 + $0xa0] sm:$0xff] %v869
        %900 = vst [vmem:[%s517 + $0xa8] sm:$0xff] %v870
        %901 = vst [vmem:[%s517 + $0xb0] sm:$0xff] %v871
        %902 = vst [vmem:[%s517 + $0xb8] sm:$0xff] %v872
        %903 = vst [vmem:[%s517 + $0xc0] sm:$0xff] %v873
        %904 = vst [vmem:[%s517 + $0xc8] sm:$0xff] %v874
        %905 = vst [vmem:[%s517 + $0xd0] sm:$0xff] %v875
        %906 = vst [vmem:[%s517 + $0xd8] sm:$0xff] %v876
        %907 = vst [vmem:[%s517 + $0xe0] sm:$0xff] %v877
        %908 = vst [vmem:[%s517 + $0xe8] sm:$0xff] %v878
        %s909 = sand.u32 %s106, 1
        %s910 = sand.u32 %s106, 1
        %s911 = smul.addr %s910, 240
        %s912 = scalar_lea.vmem [#allocation3], %s911
        // Predicated region
        $region99: #{fused_mul_conv1x1_bn.3} parent=93 // pred_check
          %p913 = pneg %p116
        $region100: #{fused_mul_conv1x1_bn.3} parent=93 // pred_check_branch
          %915 = sbr.rel (%p913) target = $region102
        $region101: #{fused_mul_conv1x1_bn.3} parent=93 // pred_region
          %s916 = smul.u32 6, %s19
          %s917 = ssub.s32 25, %s916
          %p918 = scmp.lt.s32.totalorder %s917, 6
          %s919 = scalar_select %p918, %s917, 6
          %s920 = smul.u32 40, %s919
          %p921 = scmp.ne.s32.totalorder 0, %s920
          %s922 = smul.addr %s18, 125
          %s923 = sadd.s32 %s916, %s922
          %s924 = smul.addr %s923, 8
          %s925 = scalar_lea.vmem %s3, %s924
          %s926 = smul.u32 %s919, 8
          // Predicated region
          $region103: #{fused_mul_conv1x1_bn.3} parent=101 // pred_check
            %p927 = pneg %p921
          $region104: #{fused_mul_conv1x1_bn.3} parent=101 // pred_check_branch
            %929 = sbr.rel (%p927) target = $region106
          $region105: #{fused_mul_conv1x1_bn.3} parent=101 // pred_region
            %p930 = scmp.lt.u32.totalorder %s926, 8
            %p931 = pneg %p930
            // Predicated region
            $region107: #{fused_mul_conv1x1_bn.3} parent=105 // pred_check
              _
            $region108: #{fused_mul_conv1x1_bn.3} parent=105 // pred_check_branch
              %933 = sbr.rel (%p930) target = $region110
            $region109: #{fused_mul_conv1x1_bn.3} parent=105 // pred_region
              %s957 = sand.u32 %s926, 7
              %p958 = scmp.eq.s32.totalorder %s957, 0
              // Predicated region
              $region122: #{fused_mul_conv1x1_bn.3} parent=109 // pred_check
                %p959 = pneg %p958
              $region123: #{fused_mul_conv1x1_bn.3} parent=109 // pred_check_branch
                %961 = sbr.rel (%p959) target = $region125
              $region124: #{fused_mul_conv1x1_bn.3} parent=109 // pred_region
                %s962 = sshrl.u32 %s926, 3
                %s963 = sshrl.u32 %s962, 3
                // While loop
                $region126: #{fused_mul_conv1x1_bn.3} parent=124 // loop_pre_header
                  _
                $region127: #{fused_mul_conv1x1_bn.3} parent=124 // loop_header
                  %s965 = sphi 0, %s967
                  %p966 = scmp.ge.s32.totalorder %s965, %s963
                  %s970 = sphi 0, %s1055
                  %s971 = sphi %s912, %s1058
                  %s972 = sphi %s925, %s1059
                $region128: #{fused_mul_conv1x1_bn.3} parent=124 // loop_header_branch
                  %969 = sbr.rel (%p966) target = $region132
                $region129: #{fused_mul_conv1x1_bn.3} parent=124 // loop_body
                  %v973 = vld [vmem:[%s971] sm:$0xff]
                  %974 = vst [vmem:[%s972] sm:$0xff] %v973
                  %v975 = vld [vmem:[%s971 + $0x8] sm:$0xff]
                  %976 = vst [vmem:[%s972 + $0x8] sm:$0xff] %v975
                  %v977 = vld [vmem:[%s971 + $0x10] sm:$0xff]
                  %978 = vst [vmem:[%s972 + $0x10] sm:$0xff] %v977
                  %v979 = vld [vmem:[%s971 + $0x18] sm:$0xff]
                  %980 = vst [vmem:[%s972 + $0x18] sm:$0xff] %v979
                  %v981 = vld [vmem:[%s971 + $0x20] sm:$0xff]
                  %982 = vst [vmem:[%s972 + $0x20] sm:$0xff] %v981
                  %v983 = vld [vmem:[%s971 + $0x28] sm:$0xff]
                  %984 = vst [vmem:[%s972 + $0x28] sm:$0xff] %v983
                  %v985 = vld [vmem:[%s971 + $0x30] sm:$0xff]
                  %986 = vst [vmem:[%s972 + $0x30] sm:$0xff] %v985
                  %v987 = vld [vmem:[%s971 + $0x38] sm:$0xff]
                  %988 = vst [vmem:[%s972 + $0x38] sm:$0xff] %v987
                  %v989 = vld [vmem:[%s971 + $0x30] sm:$0xff]
                  %990 = vst [vmem:[%s972 + $0xc8] sm:$0xff] %v989
                  %v991 = vld [vmem:[%s971 + $0x38] sm:$0xff]
                  %992 = vst [vmem:[%s972 + $0xd0] sm:$0xff] %v991
                  %v993 = vld [vmem:[%s971 + $0x40] sm:$0xff]
                  %994 = vst [vmem:[%s972 + $0xd8] sm:$0xff] %v993
                  %v995 = vld [vmem:[%s971 + $0x48] sm:$0xff]
                  %996 = vst [vmem:[%s972 + $0xe0] sm:$0xff] %v995
                  %v997 = vld [vmem:[%s971 + $0x50] sm:$0xff]
                  %998 = vst [vmem:[%s972 + $0xe8] sm:$0xff] %v997
                  %v999 = vld [vmem:[%s971 + $0x58] sm:$0xff]
                  %1000 = vst [vmem:[%s972 + $0xf0] sm:$0xff] %v999
                  %v1001 = vld [vmem:[%s971 + $0x60] sm:$0xff]
                  %1002 = vst [vmem:[%s972 + $0xf8] sm:$0xff] %v1001
                  %v1003 = vld [vmem:[%s971 + $0x68] sm:$0xff]
                  %1004 = vst [vmem:[%s972 + $0x100] sm:$0xff] %v1003
                  %v1005 = vld [vmem:[%s971 + $0x60] sm:$0xff]
                  %1006 = vst [vmem:[%s972 + $0x190] sm:$0xff] %v1005
                  %v1007 = vld [vmem:[%s971 + $0x68] sm:$0xff]
                  %1008 = vst [vmem:[%s972 + $0x198] sm:$0xff] %v1007
                  %v1009 = vld [vmem:[%s971 + $0x70] sm:$0xff]
                  %1010 = vst [vmem:[%s972 + $0x1a0] sm:$0xff] %v1009
                  %v1011 = vld [vmem:[%s971 + $0x78] sm:$0xff]
                  %1012 = vst [vmem:[%s972 + $0x1a8] sm:$0xff] %v1011
                  %v1013 = vld [vmem:[%s971 + $0x80] sm:$0xff]
                  %1014 = vst [vmem:[%s972 + $0x1b0] sm:$0xff] %v1013
                  %v1015 = vld [vmem:[%s971 + $0x88] sm:$0xff]
                  %1016 = vst [vmem:[%s972 + $0x1b8] sm:$0xff] %v1015
                  %v1017 = vld [vmem:[%s971 + $0x90] sm:$0xff]
                  %1018 = vst [vmem:[%s972 + $0x1c0] sm:$0xff] %v1017
                  %v1019 = vld [vmem:[%s971 + $0x98] sm:$0xff]
                  %1020 = vst [vmem:[%s972 + $0x1c8] sm:$0xff] %v1019
                  %v1021 = vld [vmem:[%s971 + $0x90] sm:$0xff]
                  %1022 = vst [vmem:[%s972 + $0x258] sm:$0xff] %v1021
                  %v1023 = vld [vmem:[%s971 + $0x98] sm:$0xff]
                  %1024 = vst [vmem:[%s972 + $0x260] sm:$0xff] %v1023
                  %v1025 = vld [vmem:[%s971 + $0xa0] sm:$0xff]
                  %1026 = vst [vmem:[%s972 + $0x268] sm:$0xff] %v1025
                  %v1027 = vld [vmem:[%s971 + $0xa8] sm:$0xff]
                  %1028 = vst [vmem:[%s972 + $0x270] sm:$0xff] %v1027
                  %v1029 = vld [vmem:[%s971 + $0xb0] sm:$0xff]
                  %1030 = vst [vmem:[%s972 + $0x278] sm:$0xff] %v1029
                  %v1031 = vld [vmem:[%s971 + $0xb8] sm:$0xff]
                  %1032 = vst [vmem:[%s972 + $0x280] sm:$0xff] %v1031
                  %v1033 = vld [vmem:[%s971 + $0xc0] sm:$0xff]
                  %1034 = vst [vmem:[%s972 + $0x288] sm:$0xff] %v1033
                  %v1035 = vld [vmem:[%s971 + $0xc8] sm:$0xff]
                  %1036 = vst [vmem:[%s972 + $0x290] sm:$0xff] %v1035
                  %v1037 = vld [vmem:[%s971 + $0xc0] sm:$0xff]
                  %1038 = vst [vmem:[%s972 + $0x320] sm:$0xff] %v1037
                  %v1039 = vld [vmem:[%s971 + $0xc8] sm:$0xff]
                  %1040 = vst [vmem:[%s972 + $0x328] sm:$0xff] %v1039
                  %v1041 = vld [vmem:[%s971 + $0xd0] sm:$0xff]
                  %1042 = vst [vmem:[%s972 + $0x330] sm:$0xff] %v1041
                  %v1043 = vld [vmem:[%s971 + $0xd8] sm:$0xff]
                  %1044 = vst [vmem:[%s972 + $0x338] sm:$0xff] %v1043
                  %v1045 = vld [vmem:[%s971 + $0xe0] sm:$0xff]
                  %1046 = vst [vmem:[%s972 + $0x340] sm:$0xff] %v1045
                  %v1047 = vld [vmem:[%s971 + $0xe8] sm:$0xff]
                  %1048 = vst [vmem:[%s972 + $0x348] sm:$0xff] %v1047
                  %v1049 = vld [vmem:[%s971 + $0xf0] sm:$0xff]
                  %1050 = vst [vmem:[%s972 + $0x350] sm:$0xff] %v1049
                  %v1051 = vld [vmem:[%s971 + $0xf8] sm:$0xff]
                  %1052 = vst [vmem:[%s972 + $0x358] sm:$0xff] %v1051
                  %s1053 = sadd.s32 1, %s970
                  %p1054 = scmp.ge.s32.totalorder %s1053, %s963
                  %s1055 = scalar_select %p1054, 0, %s1053
                  %s1056 = smul.u32 %s1055, 64
                  %s1057 = smul.u32 %s1055, 64
                  %s1058 = scalar_lea.vmem %s912, %s1056 [#allocation3]
                  %s1059 = scalar_lea.vmem %s925, %s1057
                $region130: #{fused_mul_conv1x1_bn.3} parent=124 // loop_footer
                  %s967 = sadd.s32 %s965, 1
                $region131: #{fused_mul_conv1x1_bn.3} parent=124 // loop_footer_branch
                  %964 = sbr.rel target = $region127
                $region132: #{fused_mul_conv1x1_bn.3} parent=124 // loop_exit
                  _
                %s1060 = sshrl.u32 %s962, 3
                %s1061 = sand.u32 %s962, 7
                %s1062 = smul.u32 %s1060, 8
                %s1063 = smul.u32 8, %s1062
                %s1064 = scalar_lea.vmem %s912, %s1063 [#allocation3]
                %s1065 = smul.u32 8, %s1062
                %s1066 = scalar_lea.vmem %s925, %s1065
                // While loop
                $region133: #{fused_mul_conv1x1_bn.3} parent=124 // loop_pre_header
                  _
                $region134: #{fused_mul_conv1x1_bn.3} parent=124 // loop_header
                  %s1068 = sphi 0, %s1070
                  %p1069 = scmp.ge.s32.totalorder %s1068, %s1061
                  %s1073 = sphi 0, %s1088
                  %s1074 = sphi %s1064, %s1091
                  %s1075 = sphi %s1066, %s1092
                $region135: #{fused_mul_conv1x1_bn.3} parent=124 // loop_header_branch
                  %1072 = sbr.rel (%p1069) target = $region139
                $region136: #{fused_mul_conv1x1_bn.3} parent=124 // loop_body
                  %v1076 = vld [vmem:[%s1074] sm:$0xff]
                  %1077 = vst [vmem:[%s1075] sm:$0xff] %v1076
                  %v1078 = vld [vmem:[%s1074 + $0x30] sm:$0xff]
                  %1079 = vst [vmem:[%s1075 + $0xc8] sm:$0xff] %v1078
                  %v1080 = vld [vmem:[%s1074 + $0x60] sm:$0xff]
                  %1081 = vst [vmem:[%s1075 + $0x190] sm:$0xff] %v1080
                  %v1082 = vld [vmem:[%s1074 + $0x90] sm:$0xff]
                  %1083 = vst [vmem:[%s1075 + $0x258] sm:$0xff] %v1082
                  %v1084 = vld [vmem:[%s1074 + $0xc0] sm:$0xff]
                  %1085 = vst [vmem:[%s1075 + $0x320] sm:$0xff] %v1084
                  %s1086 = sadd.s32 1, %s1073
                  %p1087 = scmp.ge.s32.totalorder %s1086, %s1061
                  %s1088 = scalar_select %p1087, 0, %s1086
                  %s1089 = smul.u32 %s1088, 8
                  %s1090 = smul.u32 %s1088, 8
                  %s1091 = scalar_lea.vmem %s1064, %s1089 [#allocation3]
                  %s1092 = scalar_lea.vmem %s1066, %s1090
                $region137: #{fused_mul_conv1x1_bn.3} parent=124 // loop_footer
                  %s1070 = sadd.s32 %s1068, 1
                $region138: #{fused_mul_conv1x1_bn.3} parent=124 // loop_footer_branch
                  %1067 = sbr.rel target = $region134
                $region139: #{fused_mul_conv1x1_bn.3} parent=124 // loop_exit
                  _
              $region125: #{fused_mul_conv1x1_bn.3} parent=109 // pred_fallthru
                _
              %p1093 = pneg %p958
              // Predicated region
              $region140: #{fused_mul_conv1x1_bn.3} parent=109 // pred_check
                _
              $region141: #{fused_mul_conv1x1_bn.3} parent=109 // pred_check_branch
                %1095 = sbr.rel (%p958) target = $region143
              $region142: #{fused_mul_conv1x1_bn.3} parent=109 // pred_region
                %s1096 = sand.u32 %s926, 7
                %s1097 = ssub.s32 %s926, %s1096
                %s1098 = scalar_lea.vmem %s912, %s1097 [#allocation3]
                %s1099 = ssub.s32 %s926, %s1096
                %s1100 = scalar_lea.vmem %s925, %s1099
                %s1101 = sshrl.u32 %s926, 3
                %s1102 = sshrl.u32 %s1101, 3
                // While loop
                $region144: #{fused_mul_conv1x1_bn.3} parent=142 // loop_pre_header
                  _
                $region145: #{fused_mul_conv1x1_bn.3} parent=142 // loop_header
                  %s1104 = sphi 0, %s1106
                  %p1105 = scmp.ge.s32.totalorder %s1104, %s1102
                  %s1109 = sphi 0, %s1194
                  %s1110 = sphi %s912, %s1197
                  %s1111 = sphi %s925, %s1198
                $region146: #{fused_mul_conv1x1_bn.3} parent=142 // loop_header_branch
                  %1108 = sbr.rel (%p1105) target = $region150
                $region147: #{fused_mul_conv1x1_bn.3} parent=142 // loop_body
                  %v1112 = vld [vmem:[%s1110] sm:$0xff]
                  %1113 = vst [vmem:[%s1111] sm:$0xff] %v1112
                  %v1114 = vld [vmem:[%s1110 + $0x8] sm:$0xff]
                  %1115 = vst [vmem:[%s1111 + $0x8] sm:$0xff] %v1114
                  %v1116 = vld [vmem:[%s1110 + $0x10] sm:$0xff]
                  %1117 = vst [vmem:[%s1111 + $0x10] sm:$0xff] %v1116
                  %v1118 = vld [vmem:[%s1110 + $0x18] sm:$0xff]
                  %1119 = vst [vmem:[%s1111 + $0x18] sm:$0xff] %v1118
                  %v1120 = vld [vmem:[%s1110 + $0x20] sm:$0xff]
                  %1121 = vst [vmem:[%s1111 + $0x20] sm:$0xff] %v1120
                  %v1122 = vld [vmem:[%s1110 + $0x28] sm:$0xff]
                  %1123 = vst [vmem:[%s1111 + $0x28] sm:$0xff] %v1122
                  %v1124 = vld [vmem:[%s1110 + $0x30] sm:$0xff]
                  %1125 = vst [vmem:[%s1111 + $0x30] sm:$0xff] %v1124
                  %v1126 = vld [vmem:[%s1110 + $0x38] sm:$0xff]
                  %1127 = vst [vmem:[%s1111 + $0x38] sm:$0xff] %v1126
                  %v1128 = vld [vmem:[%s1110 + $0x30] sm:$0xff]
                  %1129 = vst [vmem:[%s1111 + $0xc8] sm:$0xff] %v1128
                  %v1130 = vld [vmem:[%s1110 + $0x38] sm:$0xff]
                  %1131 = vst [vmem:[%s1111 + $0xd0] sm:$0xff] %v1130
                  %v1132 = vld [vmem:[%s1110 + $0x40] sm:$0xff]
                  %1133 = vst [vmem:[%s1111 + $0xd8] sm:$0xff] %v1132
                  %v1134 = vld [vmem:[%s1110 + $0x48] sm:$0xff]
                  %1135 = vst [vmem:[%s1111 + $0xe0] sm:$0xff] %v1134
                  %v1136 = vld [vmem:[%s1110 + $0x50] sm:$0xff]
                  %1137 = vst [vmem:[%s1111 + $0xe8] sm:$0xff] %v1136
                  %v1138 = vld [vmem:[%s1110 + $0x58] sm:$0xff]
                  %1139 = vst [vmem:[%s1111 + $0xf0] sm:$0xff] %v1138
                  %v1140 = vld [vmem:[%s1110 + $0x60] sm:$0xff]
                  %1141 = vst [vmem:[%s1111 + $0xf8] sm:$0xff] %v1140
                  %v1142 = vld [vmem:[%s1110 + $0x68] sm:$0xff]
                  %1143 = vst [vmem:[%s1111 + $0x100] sm:$0xff] %v1142
                  %v1144 = vld [vmem:[%s1110 + $0x60] sm:$0xff]
                  %1145 = vst [vmem:[%s1111 + $0x190] sm:$0xff] %v1144
                  %v1146 = vld [vmem:[%s1110 + $0x68] sm:$0xff]
                  %1147 = vst [vmem:[%s1111 + $0x198] sm:$0xff] %v1146
                  %v1148 = vld [vmem:[%s1110 + $0x70] sm:$0xff]
                  %1149 = vst [vmem:[%s1111 + $0x1a0] sm:$0xff] %v1148
                  %v1150 = vld [vmem:[%s1110 + $0x78] sm:$0xff]
                  %1151 = vst [vmem:[%s1111 + $0x1a8] sm:$0xff] %v1150
                  %v1152 = vld [vmem:[%s1110 + $0x80] sm:$0xff]
                  %1153 = vst [vmem:[%s1111 + $0x1b0] sm:$0xff] %v1152
                  %v1154 = vld [vmem:[%s1110 + $0x88] sm:$0xff]
                  %1155 = vst [vmem:[%s1111 + $0x1b8] sm:$0xff] %v1154
                  %v1156 = vld [vmem:[%s1110 + $0x90] sm:$0xff]
                  %1157 = vst [vmem:[%s1111 + $0x1c0] sm:$0xff] %v1156
                  %v1158 = vld [vmem:[%s1110 + $0x98] sm:$0xff]
                  %1159 = vst [vmem:[%s1111 + $0x1c8] sm:$0xff] %v1158
                  %v1160 = vld [vmem:[%s1110 + $0x90] sm:$0xff]
                  %1161 = vst [vmem:[%s1111 + $0x258] sm:$0xff] %v1160
                  %v1162 = vld [vmem:[%s1110 + $0x98] sm:$0xff]
                  %1163 = vst [vmem:[%s1111 + $0x260] sm:$0xff] %v1162
                  %v1164 = vld [vmem:[%s1110 + $0xa0] sm:$0xff]
                  %1165 = vst [vmem:[%s1111 + $0x268] sm:$0xff] %v1164
                  %v1166 = vld [vmem:[%s1110 + $0xa8] sm:$0xff]
                  %1167 = vst [vmem:[%s1111 + $0x270] sm:$0xff] %v1166
                  %v1168 = vld [vmem:[%s1110 + $0xb0] sm:$0xff]
                  %1169 = vst [vmem:[%s1111 + $0x278] sm:$0xff] %v1168
                  %v1170 = vld [vmem:[%s1110 + $0xb8] sm:$0xff]
                  %1171 = vst [vmem:[%s1111 + $0x280] sm:$0xff] %v1170
                  %v1172 = vld [vmem:[%s1110 + $0xc0] sm:$0xff]
                  %1173 = vst [vmem:[%s1111 + $0x288] sm:$0xff] %v1172
                  %v1174 = vld [vmem:[%s1110 + $0xc8] sm:$0xff]
                  %1175 = vst [vmem:[%s1111 + $0x290] sm:$0xff] %v1174
                  %v1176 = vld [vmem:[%s1110 + $0xc0] sm:$0xff]
                  %1177 = vst [vmem:[%s1111 + $0x320] sm:$0xff] %v1176
                  %v1178 = vld [vmem:[%s1110 + $0xc8] sm:$0xff]
                  %1179 = vst [vmem:[%s1111 + $0x328] sm:$0xff] %v1178
                  %v1180 = vld [vmem:[%s1110 + $0xd0] sm:$0xff]
                  %1181 = vst [vmem:[%s1111 + $0x330] sm:$0xff] %v1180
                  %v1182 = vld [vmem:[%s1110 + $0xd8] sm:$0xff]
                  %1183 = vst [vmem:[%s1111 + $0x338] sm:$0xff] %v1182
                  %v1184 = vld [vmem:[%s1110 + $0xe0] sm:$0xff]
                  %1185 = vst [vmem:[%s1111 + $0x340] sm:$0xff] %v1184
                  %v1186 = vld [vmem:[%s1110 + $0xe8] sm:$0xff]
                  %1187 = vst [vmem:[%s1111 + $0x348] sm:$0xff] %v1186
                  %v1188 = vld [vmem:[%s1110 + $0xf0] sm:$0xff]
                  %1189 = vst [vmem:[%s1111 + $0x350] sm:$0xff] %v1188
                  %v1190 = vld [vmem:[%s1110 + $0xf8] sm:$0xff]
                  %1191 = vst [vmem:[%s1111 + $0x358] sm:$0xff] %v1190
                  %s1192 = sadd.s32 1, %s1109
                  %p1193 = scmp.ge.s32.totalorder %s1192, %s1102
                  %s1194 = scalar_select %p1193, 0, %s1192
                  %s1195 = smul.u32 %s1194, 64
                  %s1196 = smul.u32 %s1194, 64
                  %s1197 = scalar_lea.vmem %s912, %s1195 [#allocation3]
                  %s1198 = scalar_lea.vmem %s925, %s1196
                $region148: #{fused_mul_conv1x1_bn.3} parent=142 // loop_footer
                  %s1106 = sadd.s32 %s1104, 1
                $region149: #{fused_mul_conv1x1_bn.3} parent=142 // loop_footer_branch
                  %1103 = sbr.rel target = $region145
                $region150: #{fused_mul_conv1x1_bn.3} parent=142 // loop_exit
                  _
                %s1199 = sshrl.u32 %s1101, 3
                %s1200 = sand.u32 %s1101, 7
                %s1201 = smul.u32 %s1199, 8
                %s1202 = smul.u32 8, %s1201
                %s1203 = scalar_lea.vmem %s912, %s1202 [#allocation3]
                %s1204 = smul.u32 8, %s1201
                %s1205 = scalar_lea.vmem %s925, %s1204
                // While loop
                $region151: #{fused_mul_conv1x1_bn.3} parent=142 // loop_pre_header
                  _
                $region152: #{fused_mul_conv1x1_bn.3} parent=142 // loop_header
                  %s1207 = sphi 0, %s1209
                  %p1208 = scmp.ge.s32.totalorder %s1207, %s1200
                  %s1212 = sphi 0, %s1227
                  %s1213 = sphi %s1203, %s1230
                  %s1214 = sphi %s1205, %s1231
                $region153: #{fused_mul_conv1x1_bn.3} parent=142 // loop_header_branch
                  %1211 = sbr.rel (%p1208) target = $region157
                $region154: #{fused_mul_conv1x1_bn.3} parent=142 // loop_body
                  %v1215 = vld [vmem:[%s1213] sm:$0xff]
                  %1216 = vst [vmem:[%s1214] sm:$0xff] %v1215
                  %v1217 = vld [vmem:[%s1213 + $0x30] sm:$0xff]
                  %1218 = vst [vmem:[%s1214 + $0xc8] sm:$0xff] %v1217
                  %v1219 = vld [vmem:[%s1213 + $0x60] sm:$0xff]
                  %1220 = vst [vmem:[%s1214 + $0x190] sm:$0xff] %v1219
                  %v1221 = vld [vmem:[%s1213 + $0x90] sm:$0xff]
                  %1222 = vst [vmem:[%s1214 + $0x258] sm:$0xff] %v1221
                  %v1223 = vld [vmem:[%s1213 + $0xc0] sm:$0xff]
                  %1224 = vst [vmem:[%s1214 + $0x320] sm:$0xff] %v1223
                  %s1225 = sadd.s32 1, %s1212
                  %p1226 = scmp.ge.s32.totalorder %s1225, %s1200
                  %s1227 = scalar_select %p1226, 0, %s1225
                  %s1228 = smul.u32 %s1227, 8
                  %s1229 = smul.u32 %s1227, 8
                  %s1230 = scalar_lea.vmem %s1203, %s1228 [#allocation3]
                  %s1231 = scalar_lea.vmem %s1205, %s1229
                $region155: #{fused_mul_conv1x1_bn.3} parent=142 // loop_footer
                  %s1209 = sadd.s32 %s1207, 1
                $region156: #{fused_mul_conv1x1_bn.3} parent=142 // loop_footer_branch
                  %1206 = sbr.rel target = $region152
                $region157: #{fused_mul_conv1x1_bn.3} parent=142 // loop_exit
                  _
                %s1232 = sshll.u32 1, %s1096
                %s1233 = ssub.s32 %s1232, 1
                loop: start=0, step=1, limit=1
                $region158: #{fused_mul_conv1x1_bn.3} parent=142 // loop_pre_header
                  _
                $region159: #{fused_mul_conv1x1_bn.3} parent=142 // loop_header
                  %s1235 = sphi 0, %s1239
                  %p1236 = scmp.ge.s32.totalorder %s1235, 1
                  %s1240 = sphi %s1098, %s1098
                  %s1241 = sphi %s1100, %s1100
                $region160: #{fused_mul_conv1x1_bn.3} parent=142 // loop_header_branch
                  %1238 = sbr.rel (%p1236) target = $region164
                $region161: #{fused_mul_conv1x1_bn.3} parent=142 // loop_body
                  %v1242 = vld [vmem:[%s1240] sm:%s1233]
                  %1243 = vst [vmem:[%s1241] sm:%s1233] %v1242
                  %v1244 = vld [vmem:[%s1240 + $0x30] sm:%s1233]
                  %1245 = vst [vmem:[%s1241 + $0xc8] sm:%s1233] %v1244
                  %v1246 = vld [vmem:[%s1240 + $0x60] sm:%s1233]
                  %1247 = vst [vmem:[%s1241 + $0x190] sm:%s1233] %v1246
                  %v1248 = vld [vmem:[%s1240 + $0x90] sm:%s1233]
                  %1249 = vst [vmem:[%s1241 + $0x258] sm:%s1233] %v1248
                  %v1250 = vld [vmem:[%s1240 + $0xc0] sm:%s1233]
                  %1251 = vst [vmem:[%s1241 + $0x320] sm:%s1233] %v1250
                $region162: #{fused_mul_conv1x1_bn.3} parent=142 // loop_footer
                  %s1239 = sadd.s32 1, %s1235
                $region163: #{fused_mul_conv1x1_bn.3} parent=142 // loop_footer_branch
                  %1234 = sbr.rel target = $region159
                $region164: #{fused_mul_conv1x1_bn.3} parent=142 // loop_exit
                  _
              $region143: #{fused_mul_conv1x1_bn.3} parent=109 // pred_fallthru
                _
            $region110: #{fused_mul_conv1x1_bn.3} parent=105 // pred_fallthru
              _
            // Predicated region
            $region111: #{fused_mul_conv1x1_bn.3} parent=105 // pred_check
              %p934 = pneg %p930
            $region112: #{fused_mul_conv1x1_bn.3} parent=105 // pred_check_branch
              %936 = sbr.rel (%p934) target = $region114
            $region113: #{fused_mul_conv1x1_bn.3} parent=105 // pred_region
              %s937 = sshll.u32 1, %s926
              %s938 = ssub.s32 %s937, 1
              loop: start=0, step=1, limit=1
              $region115: #{fused_mul_conv1x1_bn.3} parent=113 // loop_pre_header
                _
              $region116: #{fused_mul_conv1x1_bn.3} parent=113 // loop_header
                %s940 = sphi 0, %s944
                %p941 = scmp.ge.s32.totalorder %s940, 1
                %s945 = sphi %s912, %s912
                %s946 = sphi %s925, %s925
              $region117: #{fused_mul_conv1x1_bn.3} parent=113 // loop_header_branch
                %943 = sbr.rel (%p941) target = $region121
              $region118: #{fused_mul_conv1x1_bn.3} parent=113 // loop_body
                %v947 = vld [vmem:[%s945] sm:%s938]
                %948 = vst [vmem:[%s946] sm:%s938] %v947
                %v949 = vld [vmem:[%s945 + $0x30] sm:%s938]
                %950 = vst [vmem:[%s946 + $0xc8] sm:%s938] %v949
                %v951 = vld [vmem:[%s945 + $0x60] sm:%s938]
                %952 = vst [vmem:[%s946 + $0x190] sm:%s938] %v951
                %v953 = vld [vmem:[%s945 + $0x90] sm:%s938]
                %954 = vst [vmem:[%s946 + $0x258] sm:%s938] %v953
                %v955 = vld [vmem:[%s945 + $0xc0] sm:%s938]
                %956 = vst [vmem:[%s946 + $0x320] sm:%s938] %v955
              $region119: #{fused_mul_conv1x1_bn.3} parent=113 // loop_footer
                %s944 = sadd.s32 1, %s940
              $region120: #{fused_mul_conv1x1_bn.3} parent=113 // loop_footer_branch
                %939 = sbr.rel target = $region116
              $region121: #{fused_mul_conv1x1_bn.3} parent=113 // loop_exit
                _
            $region114: #{fused_mul_conv1x1_bn.3} parent=105 // pred_fallthru
              _
          $region106: #{fused_mul_conv1x1_bn.3} parent=101 // pred_fallthru
            _
          %1252 = vnop
        $region102: #{fused_mul_conv1x1_bn.3} parent=93 // pred_fallthru
          _
      $region94: #{fused_mul_conv1x1_bn.3} parent=5 // pred_fallthru
        _
      %p1253 = scmp.le.s32.totalorder 2, %s9
      // Predicated region
      $region165: #{fused_mul_conv1x1_bn.3} parent=5 // pred_check
        %p1254 = pneg %p1253
      $region166: #{fused_mul_conv1x1_bn.3} parent=5 // pred_check_branch
        %1256 = sbr.rel (%p1254) target = $region168
      $region167: #{fused_mul_conv1x1_bn.3} parent=5 // pred_region
        %s1257 = ssub.s32 %s9, 2
        // Predicated region
        $region169: #{fused_mul_conv1x1_bn.3} parent=167 // pred_check
          %p1258 = pneg %p122
        $region170: #{fused_mul_conv1x1_bn.3} parent=167 // pred_check_branch
          %1260 = sbr.rel (%p1258) target = $region172
        $region171: #{fused_mul_conv1x1_bn.3} parent=167 // pred_region
          %s1261 = sand.u32 %s107, 1
          %s1262 = sand.u32 %s107, 1
          %s1263 = smul.addr %s1262, 240
          %s1264 = scalar_lea.vmem [#allocation3], %s1263
        $region172: #{fused_mul_conv1x1_bn.3} parent=167 // pred_fallthru
          _
      $region168: #{fused_mul_conv1x1_bn.3} parent=5 // pred_fallthru
        _
    $region6: #{fused_mul_conv1x1_bn.3} parent=1 // loop_footer
      %s13 = sadd.s32 1, %s9
    $region7: #{fused_mul_conv1x1_bn.3} parent=1 // loop_footer_branch
      %8 = sbr.rel target = $region3
    $region8: #{fused_mul_conv1x1_bn.3} parent=1 // loop_exit
      _

// kernel: fused_mul_conv1x1_bn.2
$region0: #{fused_mul_conv1x1_bn.2}
  #allocation0 [shape = 'u32[]', space=smem, size = 0x4, offset = 0x4, fixed_abs, tag = 'smem constant byte address 0x4 - core index']
  #allocation1 [shape = 'u32[72,128]{1,0:T(1,128)}', space=vmem, size = 0x9000, scoped, tag = 'internal scratch']
  %s0 = inlined_call_operand.vmem [shape: f32[40,240], index: 0, kind: input, shape index: {}]
  %s1 = inlined_call_operand.vmem [shape: f32[1,240,3136], index: 1, kind: input, shape index: {}]
  %s2 = inlined_call_operand.vmem [shape: f32[1,40,3136], index: 2, kind: output, shape index: {0}]
  %s3 = inlined_call_operand.vmem [shape: f32[4,40,2], index: 3, kind: output, shape index: {1}]
  %4 = xla_tuple %s2, %s3
  %s5 = sld [smem:[#allocation0]]
  $region177: #{fused_mul_conv1x1_bn.2} parent=0
    _
  %s7 = ssub.s32 1, %s5
  %s8 = scalar_select 0, %s7, %s5
  $region1: #{fused_mul_conv1x1_bn.2} parent=0
    #allocation2 [shape = 'u8[1966080]{0}', space=vmem, size = 0x1e0000, scoped, tag = 'input window, operand 1']
    #allocation3 [shape = 'u8[327680]{0}', space=vmem, size = 0x50000, scoped, tag = 'output window, operand 0']
    loop: start=0, step=1, limit=6
    $region2: #{fused_mul_conv1x1_bn.2} parent=1 // loop_pre_header
      _
    $region3: #{fused_mul_conv1x1_bn.2} parent=1 // loop_header
      %s10 = sphi 0, %s14
      %p11 = scmp.ge.s32.totalorder %s10, 6
      %s17 = sphi 0, %s29
      %s18 = sphi 0, %s25
      %s19 = sphi 0, %s17
      %s20 = sphi 0, %s18
      %s21 = sphi 0, %s19
      %s22 = sphi 0, %s20
      %s30 = sphi 0, %s30
      %s32 = sphi 0, %s30
      %s33 = sphi 0, %s32
      %s47 = sphi 0, %s33
      %s55 = sphi 0, %s57
      %s58 = sphi 0, %s55
      %s59 = sphi 0, %s58
      %s75 = sphi 0, %s59
      %s83 = sphi 0, %s85
      %s86 = sphi 0, %s83
      %s87 = sphi 0, %s86
      %s103 = sphi 0, %s87
      %s113 = sphi 0, %s115
      %s116 = sphi 0, %s113
      %s117 = sphi 0, %s116
      %s133 = sphi 0, %s117
    $region4: #{fused_mul_conv1x1_bn.2} parent=1 // loop_header_branch
      %13 = sbr.rel (%p11) target = $region8
    $region5: #{fused_mul_conv1x1_bn.2} parent=1 // loop_body
      %s15 = ssub.s32 %s10, 1
      %s16 = ssub.s32 %s10, 2
      %s23 = sadd.s32 1, %s18
      %p24 = scmp.ge.s32.totalorder %s23, 4
      %s25 = scalar_select %p24, 0, %s23
      %s26 = sadd.s32 1, %s17
      %s27 = scalar_select %p24, %s26, %s17
      %p28 = scmp.ge.s32.totalorder %s27, 1
      %s29 = scalar_select %p28, 0, %s27
      %s31 = sadd.s32 %s30, 1
      %p34 = scmp.eq.s32.totalorder %s10, 3
      %p35 = scmp.ne.s32.totalorder %s30, %s32
      %p36 = scmp.eq.s32.totalorder %s10, 0
      %p37 = por %p35, %p36
      %p38 = scmp.ne.s32.totalorder %s30, %s32
      %p39 = scmp.eq.s32.totalorder %s15, 3
      %p40 = por %p38, %p39
      %p41 = scmp.ne.s32.totalorder %s32, %s33
      %p42 = scmp.eq.s32.totalorder %s15, 0
      %p43 = por %p41, %p42
      %p44 = scmp.ne.s32.totalorder %s32, %s33
      %p45 = scmp.eq.s32.totalorder %s16, 3
      %p46 = por %p44, %p45
      %p48 = scmp.ne.s32.totalorder %s33, %s47
      %p49 = scmp.eq.s32.totalorder %s16, 0
      %p50 = por %p48, %p49
      %s51 = ssub.s32 %s17, %s29
      %s52 = ssub.s32 %s18, %s25
      %s53 = sor.u32 %s51, %s52
      %p54 = scmp.eq.s32.totalorder %s53, 0
      %s56 = sadd.s32 %s55, 1
      %s57 = scalar_select %p54, %s55, %s56
      %p60 = pneg %p54
      %p61 = scmp.eq.s32.totalorder %s10, 3
      %p62 = por %p60, %p61
      %p63 = scmp.ne.s32.totalorder %s55, %s58
      %p64 = scmp.eq.s32.totalorder %s10, 0
      %p65 = por %p63, %p64
      %p66 = scmp.ne.s32.totalorder %s55, %s58
      %p67 = scmp.eq.s32.totalorder %s15, 3
      %p68 = por %p66, %p67
      %p69 = scmp.ne.s32.totalorder %s58, %s59
      %p70 = scmp.eq.s32.totalorder %s15, 0
      %p71 = por %p69, %p70
      %p72 = scmp.ne.s32.totalorder %s58, %s59
      %p73 = scmp.eq.s32.totalorder %s16, 3
      %p74 = por %p72, %p73
      %p76 = scmp.ne.s32.totalorder %s59, %s75
      %p77 = scmp.eq.s32.totalorder %s16, 0
      %p78 = por %p76, %p77
      %s79 = ssub.s32 %s17, %s29
      %s80 = ssub.s32 %s18, %s25
      %s81 = sor.u32 %s79, %s80
      %p82 = scmp.eq.s32.totalorder %s81, 0
      %s84 = sadd.s32 %s83, 1
      %s85 = scalar_select %p82, %s83, %s84
      %p88 = pneg %p82
      %p89 = scmp.eq.s32.totalorder %s10, 3
      %p90 = por %p88, %p89
      %p91 = scmp.ne.s32.totalorder %s83, %s86
      %p92 = scmp.eq.s32.totalorder %s10, 0
      %p93 = por %p91, %p92
      %p94 = scmp.ne.s32.totalorder %s83, %s86
      %p95 = scmp.eq.s32.totalorder %s15, 3
      %p96 = por %p94, %p95
      %p97 = scmp.ne.s32.totalorder %s86, %s87
      %p98 = scmp.eq.s32.totalorder %s15, 0
      %p99 = por %p97, %p98
      %p100 = scmp.ne.s32.totalorder %s86, %s87
      %p101 = scmp.eq.s32.totalorder %s16, 3
      %p102 = por %p100, %p101
      %p104 = scmp.ne.s32.totalorder %s87, %s103
      %p105 = scmp.eq.s32.totalorder %s16, 0
      %p106 = por %p104, %p105
      %s107 = smul.u32 %s17, 4
      %s108 = sadd.s32 %s107, %s18
      %s109 = smul.u32 %s29, 4
      %s110 = sadd.s32 %s109, %s25
      %s111 = ssub.s32 %s108, %s110
      %p112 = scmp.eq.s32.totalorder %s111, 0
      %s114 = sadd.s32 %s113, 1
      %s115 = scalar_select %p112, %s113, %s114
      %p118 = pneg %p112
      %p119 = scmp.eq.s32.totalorder %s10, 3
      %p120 = por %p118, %p119
      %p121 = scmp.ne.s32.totalorder %s113, %s116
      %p122 = scmp.eq.s32.totalorder %s10, 0
      %p123 = por %p121, %p122
      %p124 = scmp.ne.s32.totalorder %s113, %s116
      %p125 = scmp.eq.s32.totalorder %s15, 3
      %p126 = por %p124, %p125
      %p127 = scmp.ne.s32.totalorder %s116, %s117
      %p128 = scmp.eq.s32.totalorder %s15, 0
      %p129 = por %p127, %p128
      %p130 = scmp.ne.s32.totalorder %s116, %s117
      %p131 = scmp.eq.s32.totalorder %s16, 3
      %p132 = por %p130, %p131
      %p134 = scmp.ne.s32.totalorder %s117, %s133
      %p135 = scmp.eq.s32.totalorder %s16, 0
      %p136 = por %p134, %p135
      %p137 = scmp.le.s32.totalorder 1, %s10
      %p138 = scmp.lt.s32.totalorder %s10, 5
      %p139 = pnand %p137, %p138
      %p140 = pneg %p139
      // Predicated region
      $region9: #{fused_mul_conv1x1_bn.2} parent=5 // pred_check
        _
      $region10: #{fused_mul_conv1x1_bn.2} parent=5 // pred_check_branch
        %142 = sbr.rel (%p139) target = $region12
      $region11: #{fused_mul_conv1x1_bn.2} parent=5 // pred_region
        %s143 = ssub.s32 %s10, 1
        // Predicated region
        $region13: #{fused_mul_conv1x1_bn.2} parent=11 // pred_check
          %p144 = pneg %p43
        $region14: #{fused_mul_conv1x1_bn.2} parent=11 // pred_check_branch
          %146 = sbr.rel (%p144) target = $region16
        $region15: #{fused_mul_conv1x1_bn.2} parent=11 // pred_region
          _
        $region16: #{fused_mul_conv1x1_bn.2} parent=11 // pred_fallthru
          _
      $region12: #{fused_mul_conv1x1_bn.2} parent=5 // pred_fallthru
        _
      %p147 = scmp.lt.s32.totalorder %s10, 4
      // Predicated region
      $region17: #{fused_mul_conv1x1_bn.2} parent=5 // pred_check
        %p148 = pneg %p147
      $region18: #{fused_mul_conv1x1_bn.2} parent=5 // pred_check_branch
        %150 = sbr.rel (%p148) target = $region20
      $region19: #{fused_mul_conv1x1_bn.2} parent=5 // pred_region
        // Predicated region
        $region21: #{fused_mul_conv1x1_bn.2} parent=19 // pred_check
          %p151 = pneg %p65
        $region22: #{fused_mul_conv1x1_bn.2} parent=19 // pred_check_branch
          %153 = sbr.rel (%p151) target = $region24
        $region23: #{fused_mul_conv1x1_bn.2} parent=19 // pred_region
          %s154 = sand.u32 %s55, 1
          %s155 = sand.u32 %s55, 1
          %s156 = smul.addr %s155, 1920
          %s157 = scalar_lea.vmem [#allocation2], %s156
          %s158 = smul.u32 8, %s18
          %s159 = ssub.s32 25, %s158
          %p160 = scmp.lt.s32.totalorder %s159, 8
          %s161 = scalar_select %p160, %s159, 8
          %s162 = smul.u32 240, %s161
          %p163 = scmp.ne.s32.totalorder 0, %s162
          %s164 = smul.addr %s17, 750
          %s165 = sadd.s32 %s158, %s164
          %s166 = smul.addr %s165, 8
          %s167 = scalar_lea.vmem %s1, %s166
          %s168 = smul.u32 %s161, 8
          // Predicated region
          $region25: #{fused_mul_conv1x1_bn.2} parent=23 // pred_check
            %p169 = pneg %p163
          $region26: #{fused_mul_conv1x1_bn.2} parent=23 // pred_check_branch
            %171 = sbr.rel (%p169) target = $region28
          $region27: #{fused_mul_conv1x1_bn.2} parent=23 // pred_region
            %p172 = scmp.lt.u32.totalorder %s168, 8
            %p173 = pneg %p172
            // Predicated region
            $region29: #{fused_mul_conv1x1_bn.2} parent=27 // pred_check
              _
            $region30: #{fused_mul_conv1x1_bn.2} parent=27 // pred_check_branch
              %175 = sbr.rel (%p172) target = $region32
            $region31: #{fused_mul_conv1x1_bn.2} parent=27 // pred_region
              %s249 = sand.u32 %s168, 7
              %p250 = scmp.eq.s32.totalorder %s249, 0
              // Predicated region
              $region44: #{fused_mul_conv1x1_bn.2} parent=31 // pred_check
                %p251 = pneg %p250
              $region45: #{fused_mul_conv1x1_bn.2} parent=31 // pred_check_branch
                %253 = sbr.rel (%p251) target = $region47
              $region46: #{fused_mul_conv1x1_bn.2} parent=31 // pred_region
                %s254 = sshrl.u32 %s168, 3
                %s255 = sshrl.u32 %s254, 1
                // While loop
                $region48: #{fused_mul_conv1x1_bn.2} parent=46 // loop_pre_header
                  _
                $region49: #{fused_mul_conv1x1_bn.2} parent=46 // loop_header
                  %s257 = sphi 0, %s259
                  %p258 = scmp.ge.s32.totalorder %s257, %s255
                  %s262 = sphi 0, %s387
                  %s263 = sphi %s167, %s390
                  %s264 = sphi %s157, %s391
                $region50: #{fused_mul_conv1x1_bn.2} parent=46 // loop_header_branch
                  %261 = sbr.rel (%p258) target = $region54
                $region51: #{fused_mul_conv1x1_bn.2} parent=46 // loop_body
                  %v265 = vld [vmem:[%s263] sm:$0xff]
                  %266 = vst [vmem:[%s264] sm:$0xff] %v265
                  %v267 = vld [vmem:[%s263 + $0x8] sm:$0xff]
                  %268 = vst [vmem:[%s264 + $0x8] sm:$0xff] %v267
                  %v269 = vld [vmem:[%s263 + $0xc8] sm:$0xff]
                  %270 = vst [vmem:[%s264 + $0x40] sm:$0xff] %v269
                  %v271 = vld [vmem:[%s263 + $0xd0] sm:$0xff]
                  %272 = vst [vmem:[%s264 + $0x48] sm:$0xff] %v271
                  %v273 = vld [vmem:[%s263 + $0x190] sm:$0xff]
                  %274 = vst [vmem:[%s264 + $0x80] sm:$0xff] %v273
                  %v275 = vld [vmem:[%s263 + $0x198] sm:$0xff]
                  %276 = vst [vmem:[%s264 + $0x88] sm:$0xff] %v275
                  %v277 = vld [vmem:[%s263 + $0x258] sm:$0xff]
                  %278 = vst [vmem:[%s264 + $0xc0] sm:$0xff] %v277
                  %v279 = vld [vmem:[%s263 + $0x260] sm:$0xff]
                  %280 = vst [vmem:[%s264 + $0xc8] sm:$0xff] %v279
                  %v281 = vld [vmem:[%s263 + $0x320] sm:$0xff]
                  %282 = vst [vmem:[%s264 + $0x100] sm:$0xff] %v281
                  %v283 = vld [vmem:[%s263 + $0x328] sm:$0xff]
                  %284 = vst [vmem:[%s264 + $0x108] sm:$0xff] %v283
                  %v285 = vld [vmem:[%s263 + $0x3e8] sm:$0xff]
                  %286 = vst [vmem:[%s264 + $0x140] sm:$0xff] %v285
                  %v287 = vld [vmem:[%s263 + $0x3f0] sm:$0xff]
                  %288 = vst [vmem:[%s264 + $0x148] sm:$0xff] %v287
                  %v289 = vld [vmem:[%s263 + $0x4b0] sm:$0xff]
                  %290 = vst [vmem:[%s264 + $0x180] sm:$0xff] %v289
                  %v291 = vld [vmem:[%s263 + $0x4b8] sm:$0xff]
                  %292 = vst [vmem:[%s264 + $0x188] sm:$0xff] %v291
                  %v293 = vld [vmem:[%s263 + $0x578] sm:$0xff]
                  %294 = vst [vmem:[%s264 + $0x1c0] sm:$0xff] %v293
                  %v295 = vld [vmem:[%s263 + $0x580] sm:$0xff]
                  %296 = vst [vmem:[%s264 + $0x1c8] sm:$0xff] %v295
                  %v297 = vld [vmem:[%s263 + $0x640] sm:$0xff]
                  %298 = vst [vmem:[%s264 + $0x200] sm:$0xff] %v297
                  %v299 = vld [vmem:[%s263 + $0x648] sm:$0xff]
                  %300 = vst [vmem:[%s264 + $0x208] sm:$0xff] %v299
                  %v301 = vld [vmem:[%s263 + $0x708] sm:$0xff]
                  %302 = vst [vmem:[%s264 + $0x240] sm:$0xff] %v301
                  %v303 = vld [vmem:[%s263 + $0x710] sm:$0xff]
                  %304 = vst [vmem:[%s264 + $0x248] sm:$0xff] %v303
                  %v305 = vld [vmem:[%s263 + $0x7d0] sm:$0xff]
                  %306 = vst [vmem:[%s264 + $0x280] sm:$0xff] %v305
                  %v307 = vld [vmem:[%s263 + $0x7d8] sm:$0xff]
                  %308 = vst [vmem:[%s264 + $0x288] sm:$0xff] %v307
                  %v309 = vld [vmem:[%s263 + $0x898] sm:$0xff]
                  %310 = vst [vmem:[%s264 + $0x2c0] sm:$0xff] %v309
                  %v311 = vld [vmem:[%s263 + $0x8a0] sm:$0xff]
                  %312 = vst [vmem:[%s264 + $0x2c8] sm:$0xff] %v311
                  %v313 = vld [vmem:[%s263 + $0x960] sm:$0xff]
                  %314 = vst [vmem:[%s264 + $0x300] sm:$0xff] %v313
                  %v315 = vld [vmem:[%s263 + $0x968] sm:$0xff]
                  %316 = vst [vmem:[%s264 + $0x308] sm:$0xff] %v315
                  %v317 = vld [vmem:[%s263 + $0xa28] sm:$0xff]
                  %318 = vst [vmem:[%s264 + $0x340] sm:$0xff] %v317
                  %v319 = vld [vmem:[%s263 + $0xa30] sm:$0xff]
                  %320 = vst [vmem:[%s264 + $0x348] sm:$0xff] %v319
                  %v321 = vld [vmem:[%s263 + $0xaf0] sm:$0xff]
                  %322 = vst [vmem:[%s264 + $0x380] sm:$0xff] %v321
                  %v323 = vld [vmem:[%s263 + $0xaf8] sm:$0xff]
                  %324 = vst [vmem:[%s264 + $0x388] sm:$0xff] %v323
                  %v325 = vld [vmem:[%s263 + $0xbb8] sm:$0xff]
                  %326 = vst [vmem:[%s264 + $0x3c0] sm:$0xff] %v325
                  %v327 = vld [vmem:[%s263 + $0xbc0] sm:$0xff]
                  %328 = vst [vmem:[%s264 + $0x3c8] sm:$0xff] %v327
                  %v329 = vld [vmem:[%s263 + $0xc80] sm:$0xff]
                  %330 = vst [vmem:[%s264 + $0x400] sm:$0xff] %v329
                  %v331 = vld [vmem:[%s263 + $0xc88] sm:$0xff]
                  %332 = vst [vmem:[%s264 + $0x408] sm:$0xff] %v331
                  %v333 = vld [vmem:[%s263 + $0xd48] sm:$0xff]
                  %334 = vst [vmem:[%s264 + $0x440] sm:$0xff] %v333
                  %v335 = vld [vmem:[%s263 + $0xd50] sm:$0xff]
                  %336 = vst [vmem:[%s264 + $0x448] sm:$0xff] %v335
                  %v337 = vld [vmem:[%s263 + $0xe10] sm:$0xff]
                  %338 = vst [vmem:[%s264 + $0x480] sm:$0xff] %v337
                  %v339 = vld [vmem:[%s263 + $0xe18] sm:$0xff]
                  %340 = vst [vmem:[%s264 + $0x488] sm:$0xff] %v339
                  %v341 = vld [vmem:[%s263 + $0xed8] sm:$0xff]
                  %342 = vst [vmem:[%s264 + $0x4c0] sm:$0xff] %v341
                  %v343 = vld [vmem:[%s263 + $0xee0] sm:$0xff]
                  %344 = vst [vmem:[%s264 + $0x4c8] sm:$0xff] %v343
                  %v345 = vld [vmem:[%s263 + $0xfa0] sm:$0xff]
                  %346 = vst [vmem:[%s264 + $0x500] sm:$0xff] %v345
                  %v347 = vld [vmem:[%s263 + $0xfa8] sm:$0xff]
                  %348 = vst [vmem:[%s264 + $0x508] sm:$0xff] %v347
                  %v349 = vld [vmem:[%s263 + $0x1068] sm:$0xff]
                  %350 = vst [vmem:[%s264 + $0x540] sm:$0xff] %v349
                  %v351 = vld [vmem:[%s263 + $0x1070] sm:$0xff]
                  %352 = vst [vmem:[%s264 + $0x548] sm:$0xff] %v351
                  %v353 = vld [vmem:[%s263 + $0x1130] sm:$0xff]
                  %354 = vst [vmem:[%s264 + $0x580] sm:$0xff] %v353
                  %v355 = vld [vmem:[%s263 + $0x1138] sm:$0xff]
                  %356 = vst [vmem:[%s264 + $0x588] sm:$0xff] %v355
                  %v357 = vld [vmem:[%s263 + $0x11f8] sm:$0xff]
                  %358 = vst [vmem:[%s264 + $0x5c0] sm:$0xff] %v357
                  %v359 = vld [vmem:[%s263 + $0x1200] sm:$0xff]
                  %360 = vst [vmem:[%s264 + $0x5c8] sm:$0xff] %v359
                  %v361 = vld [vmem:[%s263 + $0x12c0] sm:$0xff]
                  %362 = vst [vmem:[%s264 + $0x600] sm:$0xff] %v361
                  %v363 = vld [vmem:[%s263 + $0x12c8] sm:$0xff]
                  %364 = vst [vmem:[%s264 + $0x608] sm:$0xff] %v363
                  %v365 = vld [vmem:[%s263 + $0x1388] sm:$0xff]
                  %366 = vst [vmem:[%s264 + $0x640] sm:$0xff] %v365
                  %v367 = vld [vmem:[%s263 + $0x1390] sm:$0xff]
                  %368 = vst [vmem:[%s264 + $0x648] sm:$0xff] %v367
                  %v369 = vld [vmem:[%s263 + $0x1450] sm:$0xff]
                  %370 = vst [vmem:[%s264 + $0x680] sm:$0xff] %v369
                  %v371 = vld [vmem:[%s263 + $0x1458] sm:$0xff]
                  %372 = vst [vmem:[%s264 + $0x688] sm:$0xff] %v371
                  %v373 = vld [vmem:[%s263 + $0x1518] sm:$0xff]
                  %374 = vst [vmem:[%s264 + $0x6c0] sm:$0xff] %v373
                  %v375 = vld [vmem:[%s263 + $0x1520] sm:$0xff]
                  %376 = vst [vmem:[%s264 + $0x6c8] sm:$0xff] %v375
                  %v377 = vld [vmem:[%s263 + $0x15e0] sm:$0xff]
                  %378 = vst [vmem:[%s264 + $0x700] sm:$0xff] %v377
                  %v379 = vld [vmem:[%s263 + $0x15e8] sm:$0xff]
                  %380 = vst [vmem:[%s264 + $0x708] sm:$0xff] %v379
                  %v381 = vld [vmem:[%s263 + $0x16a8] sm:$0xff]
                  %382 = vst [vmem:[%s264 + $0x740] sm:$0xff] %v381
                  %v383 = vld [vmem:[%s263 + $0x16b0] sm:$0xff]
                  %384 = vst [vmem:[%s264 + $0x748] sm:$0xff] %v383
                  %s385 = sadd.s32 1, %s262
                  %p386 = scmp.ge.s32.totalorder %s385, %s255
                  %s387 = scalar_select %p386, 0, %s385
                  %s388 = smul.u32 %s387, 16
                  %s389 = smul.u32 %s387, 16
                  %s390 = scalar_lea.vmem %s167, %s388
                  %s391 = scalar_lea.vmem %s157, %s389 [#allocation2]
                $region52: #{fused_mul_conv1x1_bn.2} parent=46 // loop_footer
                  %s259 = sadd.s32 %s257, 1
                $region53: #{fused_mul_conv1x1_bn.2} parent=46 // loop_footer_branch
                  %256 = sbr.rel target = $region49
                $region54: #{fused_mul_conv1x1_bn.2} parent=46 // loop_exit
                  _
                %s392 = sshrl.u32 %s254, 1
                %s393 = sand.u32 %s254, 1
                %s394 = smul.u32 %s392, 2
                %s395 = smul.u32 8, %s394
                %s396 = scalar_lea.vmem %s167, %s395
                %s397 = smul.u32 8, %s394
                %s398 = scalar_lea.vmem %s157, %s397 [#allocation2]
                // While loop
                $region55: #{fused_mul_conv1x1_bn.2} parent=46 // loop_pre_header
                  _
                $region56: #{fused_mul_conv1x1_bn.2} parent=46 // loop_header
                  %s400 = sphi 0, %s402
                  %p401 = scmp.ge.s32.totalorder %s400, %s393
                  %s405 = sphi 0, %s470
                  %s406 = sphi %s396, %s473
                  %s407 = sphi %s398, %s474
                $region57: #{fused_mul_conv1x1_bn.2} parent=46 // loop_header_branch
                  %404 = sbr.rel (%p401) target = $region61
                $region58: #{fused_mul_conv1x1_bn.2} parent=46 // loop_body
                  %v408 = vld [vmem:[%s406] sm:$0xff]
                  %409 = vst [vmem:[%s407] sm:$0xff] %v408
                  %v410 = vld [vmem:[%s406 + $0xc8] sm:$0xff]
                  %411 = vst [vmem:[%s407 + $0x40] sm:$0xff] %v410
                  %v412 = vld [vmem:[%s406 + $0x190] sm:$0xff]
                  %413 = vst [vmem:[%s407 + $0x80] sm:$0xff] %v412
                  %v414 = vld [vmem:[%s406 + $0x258] sm:$0xff]
                  %415 = vst [vmem:[%s407 + $0xc0] sm:$0xff] %v414
                  %v416 = vld [vmem:[%s406 + $0x320] sm:$0xff]
                  %417 = vst [vmem:[%s407 + $0x100] sm:$0xff] %v416
                  %v418 = vld [vmem:[%s406 + $0x3e8] sm:$0xff]
                  %419 = vst [vmem:[%s407 + $0x140] sm:$0xff] %v418
                  %v420 = vld [vmem:[%s406 + $0x4b0] sm:$0xff]
                  %421 = vst [vmem:[%s407 + $0x180] sm:$0xff] %v420
                  %v422 = vld [vmem:[%s406 + $0x578] sm:$0xff]
                  %423 = vst [vmem:[%s407 + $0x1c0] sm:$0xff] %v422
                  %v424 = vld [vmem:[%s406 + $0x640] sm:$0xff]
                  %425 = vst [vmem:[%s407 + $0x200] sm:$0xff] %v424
                  %v426 = vld [vmem:[%s406 + $0x708] sm:$0xff]
                  %427 = vst [vmem:[%s407 + $0x240] sm:$0xff] %v426
                  %v428 = vld [vmem:[%s406 + $0x7d0] sm:$0xff]
                  %429 = vst [vmem:[%s407 + $0x280] sm:$0xff] %v428
                  %v430 = vld [vmem:[%s406 + $0x898] sm:$0xff]
                  %431 = vst [vmem:[%s407 + $0x2c0] sm:$0xff] %v430
                  %v432 = vld [vmem:[%s406 + $0x960] sm:$0xff]
                  %433 = vst [vmem:[%s407 + $0x300] sm:$0xff] %v432
                  %v434 = vld [vmem:[%s406 + $0xa28] sm:$0xff]
                  %435 = vst [vmem:[%s407 + $0x340] sm:$0xff] %v434
                  %v436 = vld [vmem:[%s406 + $0xaf0] sm:$0xff]
                  %437 = vst [vmem:[%s407 + $0x380] sm:$0xff] %v436
                  %v438 = vld [vmem:[%s406 + $0xbb8] sm:$0xff]
                  %439 = vst [vmem:[%s407 + $0x3c0] sm:$0xff] %v438
                  %v440 = vld [vmem:[%s406 + $0xc80] sm:$0xff]
                  %441 = vst [vmem:[%s407 + $0x400] sm:$0xff] %v440
                  %v442 = vld [vmem:[%s406 + $0xd48] sm:$0xff]
                  %443 = vst [vmem:[%s407 + $0x440] sm:$0xff] %v442
                  %v444 = vld [vmem:[%s406 + $0xe10] sm:$0xff]
                  %445 = vst [vmem:[%s407 + $0x480] sm:$0xff] %v444
                  %v446 = vld [vmem:[%s406 + $0xed8] sm:$0xff]
                  %447 = vst [vmem:[%s407 + $0x4c0] sm:$0xff] %v446
                  %v448 = vld [vmem:[%s406 + $0xfa0] sm:$0xff]
                  %449 = vst [vmem:[%s407 + $0x500] sm:$0xff] %v448
                  %v450 = vld [vmem:[%s406 + $0x1068] sm:$0xff]
                  %451 = vst [vmem:[%s407 + $0x540] sm:$0xff] %v450
                  %v452 = vld [vmem:[%s406 + $0x1130] sm:$0xff]
                  %453 = vst [vmem:[%s407 + $0x580] sm:$0xff] %v452
                  %v454 = vld [vmem:[%s406 + $0x11f8] sm:$0xff]
                  %455 = vst [vmem:[%s407 + $0x5c0] sm:$0xff] %v454
                  %v456 = vld [vmem:[%s406 + $0x12c0] sm:$0xff]
                  %457 = vst [vmem:[%s407 + $0x600] sm:$0xff] %v456
                  %v458 = vld [vmem:[%s406 + $0x1388] sm:$0xff]
                  %459 = vst [vmem:[%s407 + $0x640] sm:$0xff] %v458
                  %v460 = vld [vmem:[%s406 + $0x1450] sm:$0xff]
                  %461 = vst [vmem:[%s407 + $0x680] sm:$0xff] %v460
                  %v462 = vld [vmem:[%s406 + $0x1518] sm:$0xff]
                  %463 = vst [vmem:[%s407 + $0x6c0] sm:$0xff] %v462
                  %v464 = vld [vmem:[%s406 + $0x15e0] sm:$0xff]
                  %465 = vst [vmem:[%s407 + $0x700] sm:$0xff] %v464
                  %v466 = vld [vmem:[%s406 + $0x16a8] sm:$0xff]
                  %467 = vst [vmem:[%s407 + $0x740] sm:$0xff] %v466
                  %s468 = sadd.s32 1, %s405
                  %p469 = scmp.ge.s32.totalorder %s468, %s393
                  %s470 = scalar_select %p469, 0, %s468
                  %s471 = smul.u32 %s470, 8
                  %s472 = smul.u32 %s470, 8
                  %s473 = scalar_lea.vmem %s396, %s471
                  %s474 = scalar_lea.vmem %s398, %s472 [#allocation2]
                $region59: #{fused_mul_conv1x1_bn.2} parent=46 // loop_footer
                  %s402 = sadd.s32 %s400, 1
                $region60: #{fused_mul_conv1x1_bn.2} parent=46 // loop_footer_branch
                  %399 = sbr.rel target = $region56
                $region61: #{fused_mul_conv1x1_bn.2} parent=46 // loop_exit
                  _
              $region47: #{fused_mul_conv1x1_bn.2} parent=31 // pred_fallthru
                _
              %p475 = pneg %p250
              // Predicated region
              $region62: #{fused_mul_conv1x1_bn.2} parent=31 // pred_check
                _
              $region63: #{fused_mul_conv1x1_bn.2} parent=31 // pred_check_branch
                %477 = sbr.rel (%p250) target = $region65
              $region64: #{fused_mul_conv1x1_bn.2} parent=31 // pred_region
                %s478 = sand.u32 %s168, 7
                %s479 = ssub.s32 %s168, %s478
                %s480 = scalar_lea.vmem %s167, %s479
                %s481 = ssub.s32 %s168, %s478
                %s482 = scalar_lea.vmem %s157, %s481 [#allocation2]
                %s483 = sshrl.u32 %s168, 3
                %s484 = sshrl.u32 %s483, 1
                // While loop
                $region66: #{fused_mul_conv1x1_bn.2} parent=64 // loop_pre_header
                  _
                $region67: #{fused_mul_conv1x1_bn.2} parent=64 // loop_header
                  %s486 = sphi 0, %s488
                  %p487 = scmp.ge.s32.totalorder %s486, %s484
                  %s491 = sphi 0, %s616
                  %s492 = sphi %s167, %s619
                  %s493 = sphi %s157, %s620
                $region68: #{fused_mul_conv1x1_bn.2} parent=64 // loop_header_branch
                  %490 = sbr.rel (%p487) target = $region72
                $region69: #{fused_mul_conv1x1_bn.2} parent=64 // loop_body
                  %v494 = vld [vmem:[%s492] sm:$0xff]
                  %495 = vst [vmem:[%s493] sm:$0xff] %v494
                  %v496 = vld [vmem:[%s492 + $0x8] sm:$0xff]
                  %497 = vst [vmem:[%s493 + $0x8] sm:$0xff] %v496
                  %v498 = vld [vmem:[%s492 + $0xc8] sm:$0xff]
                  %499 = vst [vmem:[%s493 + $0x40] sm:$0xff] %v498
                  %v500 = vld [vmem:[%s492 + $0xd0] sm:$0xff]
                  %501 = vst [vmem:[%s493 + $0x48] sm:$0xff] %v500
                  %v502 = vld [vmem:[%s492 + $0x190] sm:$0xff]
                  %503 = vst [vmem:[%s493 + $0x80] sm:$0xff] %v502
                  %v504 = vld [vmem:[%s492 + $0x198] sm:$0xff]
                  %505 = vst [vmem:[%s493 + $0x88] sm:$0xff] %v504
                  %v506 = vld [vmem:[%s492 + $0x258] sm:$0xff]
                  %507 = vst [vmem:[%s493 + $0xc0] sm:$0xff] %v506
                  %v508 = vld [vmem:[%s492 + $0x260] sm:$0xff]
                  %509 = vst [vmem:[%s493 + $0xc8] sm:$0xff] %v508
                  %v510 = vld [vmem:[%s492 + $0x320] sm:$0xff]
                  %511 = vst [vmem:[%s493 + $0x100] sm:$0xff] %v510
                  %v512 = vld [vmem:[%s492 + $0x328] sm:$0xff]
                  %513 = vst [vmem:[%s493 + $0x108] sm:$0xff] %v512
                  %v514 = vld [vmem:[%s492 + $0x3e8] sm:$0xff]
                  %515 = vst [vmem:[%s493 + $0x140] sm:$0xff] %v514
                  %v516 = vld [vmem:[%s492 + $0x3f0] sm:$0xff]
                  %517 = vst [vmem:[%s493 + $0x148] sm:$0xff] %v516
                  %v518 = vld [vmem:[%s492 + $0x4b0] sm:$0xff]
                  %519 = vst [vmem:[%s493 + $0x180] sm:$0xff] %v518
                  %v520 = vld [vmem:[%s492 + $0x4b8] sm:$0xff]
                  %521 = vst [vmem:[%s493 + $0x188] sm:$0xff] %v520
                  %v522 = vld [vmem:[%s492 + $0x578] sm:$0xff]
                  %523 = vst [vmem:[%s493 + $0x1c0] sm:$0xff] %v522
                  %v524 = vld [vmem:[%s492 + $0x580] sm:$0xff]
                  %525 = vst [vmem:[%s493 + $0x1c8] sm:$0xff] %v524
                  %v526 = vld [vmem:[%s492 + $0x640] sm:$0xff]
                  %527 = vst [vmem:[%s493 + $0x200] sm:$0xff] %v526
                  %v528 = vld [vmem:[%s492 + $0x648] sm:$0xff]
                  %529 = vst [vmem:[%s493 + $0x208] sm:$0xff] %v528
                  %v530 = vld [vmem:[%s492 + $0x708] sm:$0xff]
                  %531 = vst [vmem:[%s493 + $0x240] sm:$0xff] %v530
                  %v532 = vld [vmem:[%s492 + $0x710] sm:$0xff]
                  %533 = vst [vmem:[%s493 + $0x248] sm:$0xff] %v532
                  %v534 = vld [vmem:[%s492 + $0x7d0] sm:$0xff]
                  %535 = vst [vmem:[%s493 + $0x280] sm:$0xff] %v534
                  %v536 = vld [vmem:[%s492 + $0x7d8] sm:$0xff]
                  %537 = vst [vmem:[%s493 + $0x288] sm:$0xff] %v536
                  %v538 = vld [vmem:[%s492 + $0x898] sm:$0xff]
                  %539 = vst [vmem:[%s493 + $0x2c0] sm:$0xff] %v538
                  %v540 = vld [vmem:[%s492 + $0x8a0] sm:$0xff]
                  %541 = vst [vmem:[%s493 + $0x2c8] sm:$0xff] %v540
                  %v542 = vld [vmem:[%s492 + $0x960] sm:$0xff]
                  %543 = vst [vmem:[%s493 + $0x300] sm:$0xff] %v542
                  %v544 = vld [vmem:[%s492 + $0x968] sm:$0xff]
                  %545 = vst [vmem:[%s493 + $0x308] sm:$0xff] %v544
                  %v546 = vld [vmem:[%s492 + $0xa28] sm:$0xff]
                  %547 = vst [vmem:[%s493 + $0x340] sm:$0xff] %v546
                  %v548 = vld [vmem:[%s492 + $0xa30] sm:$0xff]
                  %549 = vst [vmem:[%s493 + $0x348] sm:$0xff] %v548
                  %v550 = vld [vmem:[%s492 + $0xaf0] sm:$0xff]
                  %551 = vst [vmem:[%s493 + $0x380] sm:$0xff] %v550
                  %v552 = vld [vmem:[%s492 + $0xaf8] sm:$0xff]
                  %553 = vst [vmem:[%s493 + $0x388] sm:$0xff] %v552
                  %v554 = vld [vmem:[%s492 + $0xbb8] sm:$0xff]
                  %555 = vst [vmem:[%s493 + $0x3c0] sm:$0xff] %v554
                  %v556 = vld [vmem:[%s492 + $0xbc0] sm:$0xff]
                  %557 = vst [vmem:[%s493 + $0x3c8] sm:$0xff] %v556
                  %v558 = vld [vmem:[%s492 + $0xc80] sm:$0xff]
                  %559 = vst [vmem:[%s493 + $0x400] sm:$0xff] %v558
                  %v560 = vld [vmem:[%s492 + $0xc88] sm:$0xff]
                  %561 = vst [vmem:[%s493 + $0x408] sm:$0xff] %v560
                  %v562 = vld [vmem:[%s492 + $0xd48] sm:$0xff]
                  %563 = vst [vmem:[%s493 + $0x440] sm:$0xff] %v562
                  %v564 = vld [vmem:[%s492 + $0xd50] sm:$0xff]
                  %565 = vst [vmem:[%s493 + $0x448] sm:$0xff] %v564
                  %v566 = vld [vmem:[%s492 + $0xe10] sm:$0xff]
                  %567 = vst [vmem:[%s493 + $0x480] sm:$0xff] %v566
                  %v568 = vld [vmem:[%s492 + $0xe18] sm:$0xff]
                  %569 = vst [vmem:[%s493 + $0x488] sm:$0xff] %v568
                  %v570 = vld [vmem:[%s492 + $0xed8] sm:$0xff]
                  %571 = vst [vmem:[%s493 + $0x4c0] sm:$0xff] %v570
                  %v572 = vld [vmem:[%s492 + $0xee0] sm:$0xff]
                  %573 = vst [vmem:[%s493 + $0x4c8] sm:$0xff] %v572
                  %v574 = vld [vmem:[%s492 + $0xfa0] sm:$0xff]
                  %575 = vst [vmem:[%s493 + $0x500] sm:$0xff] %v574
                  %v576 = vld [vmem:[%s492 + $0xfa8] sm:$0xff]
                  %577 = vst [vmem:[%s493 + $0x508] sm:$0xff] %v576
                  %v578 = vld [vmem:[%s492 + $0x1068] sm:$0xff]
                  %579 = vst [vmem:[%s493 + $0x540] sm:$0xff] %v578
                  %v580 = vld [vmem:[%s492 + $0x1070] sm:$0xff]
                  %581 = vst [vmem:[%s493 + $0x548] sm:$0xff] %v580
                  %v582 = vld [vmem:[%s492 + $0x1130] sm:$0xff]
                  %583 = vst [vmem:[%s493 + $0x580] sm:$0xff] %v582
                  %v584 = vld [vmem:[%s492 + $0x1138] sm:$0xff]
                  %585 = vst [vmem:[%s493 + $0x588] sm:$0xff] %v584
                  %v586 = vld [vmem:[%s492 + $0x11f8] sm:$0xff]
                  %587 = vst [vmem:[%s493 + $0x5c0] sm:$0xff] %v586
                  %v588 = vld [vmem:[%s492 + $0x1200] sm:$0xff]
                  %589 = vst [vmem:[%s493 + $0x5c8] sm:$0xff] %v588
                  %v590 = vld [vmem:[%s492 + $0x12c0] sm:$0xff]
                  %591 = vst [vmem:[%s493 + $0x600] sm:$0xff] %v590
                  %v592 = vld [vmem:[%s492 + $0x12c8] sm:$0xff]
                  %593 = vst [vmem:[%s493 + $0x608] sm:$0xff] %v592
                  %v594 = vld [vmem:[%s492 + $0x1388] sm:$0xff]
                  %595 = vst [vmem:[%s493 + $0x640] sm:$0xff] %v594
                  %v596 = vld [vmem:[%s492 + $0x1390] sm:$0xff]
                  %597 = vst [vmem:[%s493 + $0x648] sm:$0xff] %v596
                  %v598 = vld [vmem:[%s492 + $0x1450] sm:$0xff]
                  %599 = vst [vmem:[%s493 + $0x680] sm:$0xff] %v598
                  %v600 = vld [vmem:[%s492 + $0x1458] sm:$0xff]
                  %601 = vst [vmem:[%s493 + $0x688] sm:$0xff] %v600
                  %v602 = vld [vmem:[%s492 + $0x1518] sm:$0xff]
                  %603 = vst [vmem:[%s493 + $0x6c0] sm:$0xff] %v602
                  %v604 = vld [vmem:[%s492 + $0x1520] sm:$0xff]
                  %605 = vst [vmem:[%s493 + $0x6c8] sm:$0xff] %v604
                  %v606 = vld [vmem:[%s492 + $0x15e0] sm:$0xff]
                  %607 = vst [vmem:[%s493 + $0x700] sm:$0xff] %v606
                  %v608 = vld [vmem:[%s492 + $0x15e8] sm:$0xff]
                  %609 = vst [vmem:[%s493 + $0x708] sm:$0xff] %v608
                  %v610 = vld [vmem:[%s492 + $0x16a8] sm:$0xff]
                  %611 = vst [vmem:[%s493 + $0x740] sm:$0xff] %v610
                  %v612 = vld [vmem:[%s492 + $0x16b0] sm:$0xff]
                  %613 = vst [vmem:[%s493 + $0x748] sm:$0xff] %v612
                  %s614 = sadd.s32 1, %s491
                  %p615 = scmp.ge.s32.totalorder %s614, %s484
                  %s616 = scalar_select %p615, 0, %s614
                  %s617 = smul.u32 %s616, 16
                  %s618 = smul.u32 %s616, 16
                  %s619 = scalar_lea.vmem %s167, %s617
                  %s620 = scalar_lea.vmem %s157, %s618 [#allocation2]
                $region70: #{fused_mul_conv1x1_bn.2} parent=64 // loop_footer
                  %s488 = sadd.s32 %s486, 1
                $region71: #{fused_mul_conv1x1_bn.2} parent=64 // loop_footer_branch
                  %485 = sbr.rel target = $region67
                $region72: #{fused_mul_conv1x1_bn.2} parent=64 // loop_exit
                  _
                %s621 = sshrl.u32 %s483, 1
                %s622 = sand.u32 %s483, 1
                %s623 = smul.u32 %s621, 2
                %s624 = smul.u32 8, %s623
                %s625 = scalar_lea.vmem %s167, %s624
                %s626 = smul.u32 8, %s623
                %s627 = scalar_lea.vmem %s157, %s626 [#allocation2]
                // While loop
                $region73: #{fused_mul_conv1x1_bn.2} parent=64 // loop_pre_header
                  _
                $region74: #{fused_mul_conv1x1_bn.2} parent=64 // loop_header
                  %s629 = sphi 0, %s631
                  %p630 = scmp.ge.s32.totalorder %s629, %s622
                  %s634 = sphi 0, %s699
                  %s635 = sphi %s625, %s702
                  %s636 = sphi %s627, %s703
                $region75: #{fused_mul_conv1x1_bn.2} parent=64 // loop_header_branch
                  %633 = sbr.rel (%p630) target = $region79
                $region76: #{fused_mul_conv1x1_bn.2} parent=64 // loop_body
                  %v637 = vld [vmem:[%s635] sm:$0xff]
                  %638 = vst [vmem:[%s636] sm:$0xff] %v637
                  %v639 = vld [vmem:[%s635 + $0xc8] sm:$0xff]
                  %640 = vst [vmem:[%s636 + $0x40] sm:$0xff] %v639
                  %v641 = vld [vmem:[%s635 + $0x190] sm:$0xff]
                  %642 = vst [vmem:[%s636 + $0x80] sm:$0xff] %v641
                  %v643 = vld [vmem:[%s635 + $0x258] sm:$0xff]
                  %644 = vst [vmem:[%s636 + $0xc0] sm:$0xff] %v643
                  %v645 = vld [vmem:[%s635 + $0x320] sm:$0xff]
                  %646 = vst [vmem:[%s636 + $0x100] sm:$0xff] %v645
                  %v647 = vld [vmem:[%s635 + $0x3e8] sm:$0xff]
                  %648 = vst [vmem:[%s636 + $0x140] sm:$0xff] %v647
                  %v649 = vld [vmem:[%s635 + $0x4b0] sm:$0xff]
                  %650 = vst [vmem:[%s636 + $0x180] sm:$0xff] %v649
                  %v651 = vld [vmem:[%s635 + $0x578] sm:$0xff]
                  %652 = vst [vmem:[%s636 + $0x1c0] sm:$0xff] %v651
                  %v653 = vld [vmem:[%s635 + $0x640] sm:$0xff]
                  %654 = vst [vmem:[%s636 + $0x200] sm:$0xff] %v653
                  %v655 = vld [vmem:[%s635 + $0x708] sm:$0xff]
                  %656 = vst [vmem:[%s636 + $0x240] sm:$0xff] %v655
                  %v657 = vld [vmem:[%s635 + $0x7d0] sm:$0xff]
                  %658 = vst [vmem:[%s636 + $0x280] sm:$0xff] %v657
                  %v659 = vld [vmem:[%s635 + $0x898] sm:$0xff]
                  %660 = vst [vmem:[%s636 + $0x2c0] sm:$0xff] %v659
                  %v661 = vld [vmem:[%s635 + $0x960] sm:$0xff]
                  %662 = vst [vmem:[%s636 + $0x300] sm:$0xff] %v661
                  %v663 = vld [vmem:[%s635 + $0xa28] sm:$0xff]
                  %664 = vst [vmem:[%s636 + $0x340] sm:$0xff] %v663
                  %v665 = vld [vmem:[%s635 + $0xaf0] sm:$0xff]
                  %666 = vst [vmem:[%s636 + $0x380] sm:$0xff] %v665
                  %v667 = vld [vmem:[%s635 + $0xbb8] sm:$0xff]
                  %668 = vst [vmem:[%s636 + $0x3c0] sm:$0xff] %v667
                  %v669 = vld [vmem:[%s635 + $0xc80] sm:$0xff]
                  %670 = vst [vmem:[%s636 + $0x400] sm:$0xff] %v669
                  %v671 = vld [vmem:[%s635 + $0xd48] sm:$0xff]
                  %672 = vst [vmem:[%s636 + $0x440] sm:$0xff] %v671
                  %v673 = vld [vmem:[%s635 + $0xe10] sm:$0xff]
                  %674 = vst [vmem:[%s636 + $0x480] sm:$0xff] %v673
                  %v675 = vld [vmem:[%s635 + $0xed8] sm:$0xff]
                  %676 = vst [vmem:[%s636 + $0x4c0] sm:$0xff] %v675
                  %v677 = vld [vmem:[%s635 + $0xfa0] sm:$0xff]
                  %678 = vst [vmem:[%s636 + $0x500] sm:$0xff] %v677
                  %v679 = vld [vmem:[%s635 + $0x1068] sm:$0xff]
                  %680 = vst [vmem:[%s636 + $0x540] sm:$0xff] %v679
                  %v681 = vld [vmem:[%s635 + $0x1130] sm:$0xff]
                  %682 = vst [vmem:[%s636 + $0x580] sm:$0xff] %v681
                  %v683 = vld [vmem:[%s635 + $0x11f8] sm:$0xff]
                  %684 = vst [vmem:[%s636 + $0x5c0] sm:$0xff] %v683
                  %v685 = vld [vmem:[%s635 + $0x12c0] sm:$0xff]
                  %686 = vst [vmem:[%s636 + $0x600] sm:$0xff] %v685
                  %v687 = vld [vmem:[%s635 + $0x1388] sm:$0xff]
                  %688 = vst [vmem:[%s636 + $0x640] sm:$0xff] %v687
                  %v689 = vld [vmem:[%s635 + $0x1450] sm:$0xff]
                  %690 = vst [vmem:[%s636 + $0x680] sm:$0xff] %v689
                  %v691 = vld [vmem:[%s635 + $0x1518] sm:$0xff]
                  %692 = vst [vmem:[%s636 + $0x6c0] sm:$0xff] %v691
                  %v693 = vld [vmem:[%s635 + $0x15e0] sm:$0xff]
                  %694 = vst [vmem:[%s636 + $0x700] sm:$0xff] %v693
                  %v695 = vld [vmem:[%s635 + $0x16a8] sm:$0xff]
                  %696 = vst [vmem:[%s636 + $0x740] sm:$0xff] %v695
                  %s697 = sadd.s32 1, %s634
                  %p698 = scmp.ge.s32.totalorder %s697, %s622
                  %s699 = scalar_select %p698, 0, %s697
                  %s700 = smul.u32 %s699, 8
                  %s701 = smul.u32 %s699, 8
                  %s702 = scalar_lea.vmem %s625, %s700
                  %s703 = scalar_lea.vmem %s627, %s701 [#allocation2]
                $region77: #{fused_mul_conv1x1_bn.2} parent=64 // loop_footer
                  %s631 = sadd.s32 %s629, 1
                $region78: #{fused_mul_conv1x1_bn.2} parent=64 // loop_footer_branch
                  %628 = sbr.rel target = $region74
                $region79: #{fused_mul_conv1x1_bn.2} parent=64 // loop_exit
                  _
                %s704 = sshll.u32 1, %s478
                %s705 = ssub.s32 %s704, 1
                loop: start=0, step=1, limit=1
                $region80: #{fused_mul_conv1x1_bn.2} parent=64 // loop_pre_header
                  _
                $region81: #{fused_mul_conv1x1_bn.2} parent=64 // loop_header
                  %s707 = sphi 0, %s711
                  %p708 = scmp.ge.s32.totalorder %s707, 1
                  %s712 = sphi %s480, %s480
                  %s713 = sphi %s482, %s482
                $region82: #{fused_mul_conv1x1_bn.2} parent=64 // loop_header_branch
                  %710 = sbr.rel (%p708) target = $region86
                $region83: #{fused_mul_conv1x1_bn.2} parent=64 // loop_body
                  %v714 = vld [vmem:[%s712] sm:%s705]
                  %715 = vst [vmem:[%s713] sm:%s705] %v714
                  %v716 = vld [vmem:[%s712 + $0xc8] sm:%s705]
                  %717 = vst [vmem:[%s713 + $0x40] sm:%s705] %v716
                  %v718 = vld [vmem:[%s712 + $0x190] sm:%s705]
                  %719 = vst [vmem:[%s713 + $0x80] sm:%s705] %v718
                  %v720 = vld [vmem:[%s712 + $0x258] sm:%s705]
                  %721 = vst [vmem:[%s713 + $0xc0] sm:%s705] %v720
                  %v722 = vld [vmem:[%s712 + $0x320] sm:%s705]
                  %723 = vst [vmem:[%s713 + $0x100] sm:%s705] %v722
                  %v724 = vld [vmem:[%s712 + $0x3e8] sm:%s705]
                  %725 = vst [vmem:[%s713 + $0x140] sm:%s705] %v724
                  %v726 = vld [vmem:[%s712 + $0x4b0] sm:%s705]
                  %727 = vst [vmem:[%s713 + $0x180] sm:%s705] %v726
                  %v728 = vld [vmem:[%s712 + $0x578] sm:%s705]
                  %729 = vst [vmem:[%s713 + $0x1c0] sm:%s705] %v728
                  %v730 = vld [vmem:[%s712 + $0x640] sm:%s705]
                  %731 = vst [vmem:[%s713 + $0x200] sm:%s705] %v730
                  %v732 = vld [vmem:[%s712 + $0x708] sm:%s705]
                  %733 = vst [vmem:[%s713 + $0x240] sm:%s705] %v732
                  %v734 = vld [vmem:[%s712 + $0x7d0] sm:%s705]
                  %735 = vst [vmem:[%s713 + $0x280] sm:%s705] %v734
                  %v736 = vld [vmem:[%s712 + $0x898] sm:%s705]
                  %737 = vst [vmem:[%s713 + $0x2c0] sm:%s705] %v736
                  %v738 = vld [vmem:[%s712 + $0x960] sm:%s705]
                  %739 = vst [vmem:[%s713 + $0x300] sm:%s705] %v738
                  %v740 = vld [vmem:[%s712 + $0xa28] sm:%s705]
                  %741 = vst [vmem:[%s713 + $0x340] sm:%s705] %v740
                  %v742 = vld [vmem:[%s712 + $0xaf0] sm:%s705]
                  %743 = vst [vmem:[%s713 + $0x380] sm:%s705] %v742
                  %v744 = vld [vmem:[%s712 + $0xbb8] sm:%s705]
                  %745 = vst [vmem:[%s713 + $0x3c0] sm:%s705] %v744
                  %v746 = vld [vmem:[%s712 + $0xc80] sm:%s705]
                  %747 = vst [vmem:[%s713 + $0x400] sm:%s705] %v746
                  %v748 = vld [vmem:[%s712 + $0xd48] sm:%s705]
                  %749 = vst [vmem:[%s713 + $0x440] sm:%s705] %v748
                  %v750 = vld [vmem:[%s712 + $0xe10] sm:%s705]
                  %751 = vst [vmem:[%s713 + $0x480] sm:%s705] %v750
                  %v752 = vld [vmem:[%s712 + $0xed8] sm:%s705]
                  %753 = vst [vmem:[%s713 + $0x4c0] sm:%s705] %v752
                  %v754 = vld [vmem:[%s712 + $0xfa0] sm:%s705]
                  %755 = vst [vmem:[%s713 + $0x500] sm:%s705] %v754
                  %v756 = vld [vmem:[%s712 + $0x1068] sm:%s705]
                  %757 = vst [vmem:[%s713 + $0x540] sm:%s705] %v756
                  %v758 = vld [vmem:[%s712 + $0x1130] sm:%s705]
                  %759 = vst [vmem:[%s713 + $0x580] sm:%s705] %v758
                  %v760 = vld [vmem:[%s712 + $0x11f8] sm:%s705]
                  %761 = vst [vmem:[%s713 + $0x5c0] sm:%s705] %v760
                  %v762 = vld [vmem:[%s712 + $0x12c0] sm:%s705]
                  %763 = vst [vmem:[%s713 + $0x600] sm:%s705] %v762
                  %v764 = vld [vmem:[%s712 + $0x1388] sm:%s705]
                  %765 = vst [vmem:[%s713 + $0x640] sm:%s705] %v764
                  %v766 = vld [vmem:[%s712 + $0x1450] sm:%s705]
                  %767 = vst [vmem:[%s713 + $0x680] sm:%s705] %v766
                  %v768 = vld [vmem:[%s712 + $0x1518] sm:%s705]
                  %769 = vst [vmem:[%s713 + $0x6c0] sm:%s705] %v768
                  %v770 = vld [vmem:[%s712 + $0x15e0] sm:%s705]
                  %771 = vst [vmem:[%s713 + $0x700] sm:%s705] %v770
                  %v772 = vld [vmem:[%s712 + $0x16a8] sm:%s705]
                  %773 = vst [vmem:[%s713 + $0x740] sm:%s705] %v772
                $region84: #{fused_mul_conv1x1_bn.2} parent=64 // loop_footer
                  %s711 = sadd.s32 1, %s707
                $region85: #{fused_mul_conv1x1_bn.2} parent=64 // loop_footer_branch
                  %706 = sbr.rel target = $region81
                $region86: #{fused_mul_conv1x1_bn.2} parent=64 // loop_exit
                  _
              $region65: #{fused_mul_conv1x1_bn.2} parent=31 // pred_fallthru
                _
            $region32: #{fused_mul_conv1x1_bn.2} parent=27 // pred_fallthru
              _
            // Predicated region
            $region33: #{fused_mul_conv1x1_bn.2} parent=27 // pred_check
              %p176 = pneg %p172
            $region34: #{fused_mul_conv1x1_bn.2} parent=27 // pred_check_branch
              %178 = sbr.rel (%p176) target = $region36
            $region35: #{fused_mul_conv1x1_bn.2} parent=27 // pred_region
              %s179 = sshll.u32 1, %s168
              %s180 = ssub.s32 %s179, 1
              loop: start=0, step=1, limit=1
              $region37: #{fused_mul_conv1x1_bn.2} parent=35 // loop_pre_header
                _
              $region38: #{fused_mul_conv1x1_bn.2} parent=35 // loop_header
                %s182 = sphi 0, %s186
                %p183 = scmp.ge.s32.totalorder %s182, 1
                %s187 = sphi %s167, %s167
                %s188 = sphi %s157, %s157
              $region39: #{fused_mul_conv1x1_bn.2} parent=35 // loop_header_branch
                %185 = sbr.rel (%p183) target = $region43
              $region40: #{fused_mul_conv1x1_bn.2} parent=35 // loop_body
                %v189 = vld [vmem:[%s187] sm:%s180]
                %190 = vst [vmem:[%s188] sm:%s180] %v189
                %v191 = vld [vmem:[%s187 + $0xc8] sm:%s180]
                %192 = vst [vmem:[%s188 + $0x40] sm:%s180] %v191
                %v193 = vld [vmem:[%s187 + $0x190] sm:%s180]
                %194 = vst [vmem:[%s188 + $0x80] sm:%s180] %v193
                %v195 = vld [vmem:[%s187 + $0x258] sm:%s180]
                %196 = vst [vmem:[%s188 + $0xc0] sm:%s180] %v195
                %v197 = vld [vmem:[%s187 + $0x320] sm:%s180]
                %198 = vst [vmem:[%s188 + $0x100] sm:%s180] %v197
                %v199 = vld [vmem:[%s187 + $0x3e8] sm:%s180]
                %200 = vst [vmem:[%s188 + $0x140] sm:%s180] %v199
                %v201 = vld [vmem:[%s187 + $0x4b0] sm:%s180]
                %202 = vst [vmem:[%s188 + $0x180] sm:%s180] %v201
                %v203 = vld [vmem:[%s187 + $0x578] sm:%s180]
                %204 = vst [vmem:[%s188 + $0x1c0] sm:%s180] %v203
                %v205 = vld [vmem:[%s187 + $0x640] sm:%s180]
                %206 = vst [vmem:[%s188 + $0x200] sm:%s180] %v205
                %v207 = vld [vmem:[%s187 + $0x708] sm:%s180]
                %208 = vst [vmem:[%s188 + $0x240] sm:%s180] %v207
                %v209 = vld [vmem:[%s187 + $0x7d0] sm:%s180]
                %210 = vst [vmem:[%s188 + $0x280] sm:%s180] %v209
                %v211 = vld [vmem:[%s187 + $0x898] sm:%s180]
                %212 = vst [vmem:[%s188 + $0x2c0] sm:%s180] %v211
                %v213 = vld [vmem:[%s187 + $0x960] sm:%s180]
                %214 = vst [vmem:[%s188 + $0x300] sm:%s180] %v213
                %v215 = vld [vmem:[%s187 + $0xa28] sm:%s180]
                %216 = vst [vmem:[%s188 + $0x340] sm:%s180] %v215
                %v217 = vld [vmem:[%s187 + $0xaf0] sm:%s180]
                %218 = vst [vmem:[%s188 + $0x380] sm:%s180] %v217
                %v219 = vld [vmem:[%s187 + $0xbb8] sm:%s180]
                %220 = vst [vmem:[%s188 + $0x3c0] sm:%s180] %v219
                %v221 = vld [vmem:[%s187 + $0xc80] sm:%s180]
                %222 = vst [vmem:[%s188 + $0x400] sm:%s180] %v221
                %v223 = vld [vmem:[%s187 + $0xd48] sm:%s180]
                %224 = vst [vmem:[%s188 + $0x440] sm:%s180] %v223
                %v225 = vld [vmem:[%s187 + $0xe10] sm:%s180]
                %226 = vst [vmem:[%s188 + $0x480] sm:%s180] %v225
                %v227 = vld [vmem:[%s187 + $0xed8] sm:%s180]
                %228 = vst [vmem:[%s188 + $0x4c0] sm:%s180] %v227
                %v229 = vld [vmem:[%s187 + $0xfa0] sm:%s180]
                %230 = vst [vmem:[%s188 + $0x500] sm:%s180] %v229
                %v231 = vld [vmem:[%s187 + $0x1068] sm:%s180]
                %232 = vst [vmem:[%s188 + $0x540] sm:%s180] %v231
                %v233 = vld [vmem:[%s187 + $0x1130] sm:%s180]
                %234 = vst [vmem:[%s188 + $0x580] sm:%s180] %v233
                %v235 = vld [vmem:[%s187 + $0x11f8] sm:%s180]
                %236 = vst [vmem:[%s188 + $0x5c0] sm:%s180] %v235
                %v237 = vld [vmem:[%s187 + $0x12c0] sm:%s180]
                %238 = vst [vmem:[%s188 + $0x600] sm:%s180] %v237
                %v239 = vld [vmem:[%s187 + $0x1388] sm:%s180]
                %240 = vst [vmem:[%s188 + $0x640] sm:%s180] %v239
                %v241 = vld [vmem:[%s187 + $0x1450] sm:%s180]
                %242 = vst [vmem:[%s188 + $0x680] sm:%s180] %v241
                %v243 = vld [vmem:[%s187 + $0x1518] sm:%s180]
                %244 = vst [vmem:[%s188 + $0x6c0] sm:%s180] %v243
                %v245 = vld [vmem:[%s187 + $0x15e0] sm:%s180]
                %246 = vst [vmem:[%s188 + $0x700] sm:%s180] %v245
                %v247 = vld [vmem:[%s187 + $0x16a8] sm:%s180]
                %248 = vst [vmem:[%s188 + $0x740] sm:%s180] %v247
              $region41: #{fused_mul_conv1x1_bn.2} parent=35 // loop_footer
                %s186 = sadd.s32 1, %s182
              $region42: #{fused_mul_conv1x1_bn.2} parent=35 // loop_footer_branch
                %181 = sbr.rel target = $region38
              $region43: #{fused_mul_conv1x1_bn.2} parent=35 // loop_exit
                _
            $region36: #{fused_mul_conv1x1_bn.2} parent=27 // pred_fallthru
              _
          $region28: #{fused_mul_conv1x1_bn.2} parent=23 // pred_fallthru
            _
          %774 = vnop
        $region24: #{fused_mul_conv1x1_bn.2} parent=19 // pred_fallthru
          _
      $region20: #{fused_mul_conv1x1_bn.2} parent=5 // pred_fallthru
        _
      %p775 = scmp.le.s32.totalorder 1, %s10
      %p776 = scmp.lt.s32.totalorder %s10, 5
      %p777 = pnand %p775, %p776
      %p778 = pneg %p777
      // Predicated region
      $region87: #{fused_mul_conv1x1_bn.2} parent=5 // pred_check
        _
      $region88: #{fused_mul_conv1x1_bn.2} parent=5 // pred_check_branch
        %780 = sbr.rel (%p777) target = $region90
      $region89: #{fused_mul_conv1x1_bn.2} parent=5 // pred_region
        %s781 = ssub.s32 %s10, 1
        %s782 = sand.u32 %s58, 1
        %s783 = sand.u32 %s58, 1
        %s784 = smul.addr %s783, 1920
        %s785 = scalar_lea.vmem [#allocation2], %s784
        // Predicated region
        $region91: #{fused_mul_conv1x1_bn.2} parent=89 // pred_check
          %p786 = pneg %p71
        $region92: #{fused_mul_conv1x1_bn.2} parent=89 // pred_check_branch
          %788 = sbr.rel (%p786) target = $region94
        $region93: #{fused_mul_conv1x1_bn.2} parent=89 // pred_region
          _
        $region94: #{fused_mul_conv1x1_bn.2} parent=89 // pred_fallthru
          _
        %p789 = pneg %p43
        %p790 = pneg %p40
        %s791 = sand.u32 %s58, 1
        %s792 = sand.u32 %s58, 1
        %s793 = smul.addr %s792, 1920
        %s794 = scalar_lea.vmem [#allocation2], %s793
        %p795 = pneg %p71
        %p796 = pneg %p68
        %p797 = pneg %p99
        %p798 = pneg %p96
        %s799 = sand.u32 %s86, 1
        %s800 = sand.u32 %s86, 1
        %s801 = smul.addr %s800, 320
        %s802 = scalar_lea.vmem [#allocation3], %s801
        %p803 = pneg %p129
        %p804 = pneg %p126
        %s805 = smul.u32 %s19, 4
        %s806 = sadd.s32 %s805, %s20
        %p807 = scmp.lt.s32.totalorder %s806, 3
        %s808 = scalar_select %p807, %s806, 3
        %s809 = smul.addr %s808, 5
        %s810 = smul.addr %s809, 8
        %s811 = scalar_lea.vmem %s3, %s810
        %s812 = smul.u32 8, %s20
        %s813 = ssub.s32 25, %s812
        %p814 = scmp.lt.s32.totalorder %s813, 8
        %s815 = scalar_select %p814, %s813, 8
        %s816 = smul.u32 240, %s815
        %s817 = smul.u32 8, %s20
        %s818 = ssub.s32 25, %s817
        %p819 = scmp.lt.s32.totalorder %s818, 8
        %s820 = scalar_select %p819, %s818, 8
        %s821 = smul.u32 40, %s820
        %s822 = smul.u32 %s19, 4
        %s823 = sadd.s32 %s822, %s20
        %p824 = scmp.lt.s32.totalorder %s823, 3
        %s825 = scalar_select %p824, %s823, 3
        %s826 = smul.addr %s825, 5
        %s827 = smul.addr %s826, 8
        %s828 = scalar_lea.vmem %s3, %s827
        %s829 = smul.u32 %s19, 4
        %s830 = sadd.s32 %s829, %s20
        %v831 = vld [vmem:[%s0] sm:$0xff]
        %v832 = vld [vmem:[%s0 + $0x8] sm:$0xff]
        %v833 = vld [vmem:[%s0 + $0x10] sm:$0xff]
        %v834 = vld [vmem:[%s0 + $0x18] sm:$0xff]
        %v835 = vld [vmem:[%s0 + $0x20] sm:$0xff]
        %v836 = vld [vmem:[%s0 + $0x28] sm:$0xff]
        %v837 = vld [vmem:[%s0 + $0x30] sm:$0xff]
        %v838 = vld [vmem:[%s0 + $0x38] sm:$0xff]
        %v839 = vld [vmem:[%s0 + $0x40] sm:$0xff]
        %v840 = vld [vmem:[%s0 + $0x48] sm:$0xff]
        %v841 = vld [vmem:[%s785] sm:$0xff]
        %v842 = vld [vmem:[%s785 + $0x8] sm:$0xff]
        %v843 = vld [vmem:[%s785 + $0x10] sm:$0xff]
        %v844 = vld [vmem:[%s785 + $0x18] sm:$0xff]
        %v845 = vld [vmem:[%s785 + $0x20] sm:$0xff]
        %v846 = vld [vmem:[%s785 + $0x28] sm:$0xff]
        %v847 = vld [vmem:[%s785 + $0x30] sm:$0xff]
        %v848 = vld [vmem:[%s785 + $0x38] sm:$0xff]
        %v849 = vld [vmem:[%s785 + $0x40] sm:$0xff]
        %v850 = vld [vmem:[%s785 + $0x48] sm:$0xff]
        %v851 = vld [vmem:[%s785 + $0x50] sm:$0xff]
        %v852 = vld [vmem:[%s785 + $0x58] sm:$0xff]
        %v853 = vld [vmem:[%s785 + $0x60] sm:$0xff]
        %v854 = vld [vmem:[%s785 + $0x68] sm:$0xff]
        %v855 = vld [vmem:[%s785 + $0x70] sm:$0xff]
        %v856 = vld [vmem:[%s785 + $0x78] sm:$0xff]
        %v857 = vld [vmem:[%s785 + $0x80] sm:$0xff]
        %v858 = vld [vmem:[%s785 + $0x88] sm:$0xff]
        %v859 = vld [vmem:[%s785 + $0x90] sm:$0xff]
        %v860 = vld [vmem:[%s785 + $0x98] sm:$0xff]
        %v861 = vld [vmem:[%s785 + $0xa0] sm:$0xff]
        %v862 = vld [vmem:[%s785 + $0xa8] sm:$0xff]
        %v863 = vld [vmem:[%s785 + $0xb0] sm:$0xff]
        %v864 = vld [vmem:[%s785 + $0xb8] sm:$0xff]
        %v865 = vld [vmem:[%s785 + $0xc0] sm:$0xff]
        %v866 = vld [vmem:[%s785 + $0xc8] sm:$0xff]
        %v867 = vld [vmem:[%s785 + $0xd0] sm:$0xff]
        %v868 = vld [vmem:[%s785 + $0xd8] sm:$0xff]
        %v869 = vld [vmem:[%s785 + $0xe0] sm:$0xff]
        %v870 = vld [vmem:[%s785 + $0xe8] sm:$0xff]
        %v871 = vld [vmem:[%s785 + $0xf0] sm:$0xff]
        %v872 = vld [vmem:[%s785 + $0xf8] sm:$0xff]
        %v873 = vld [vmem:[%s785 + $0x100] sm:$0xff]
        %v874 = vld [vmem:[%s785 + $0x108] sm:$0xff]
        %v875 = vld [vmem:[%s785 + $0x110] sm:$0xff]
        %v876 = vld [vmem:[%s785 + $0x118] sm:$0xff]
        %v877 = vld [vmem:[%s785 + $0x120] sm:$0xff]
        %v878 = vld [vmem:[%s785 + $0x128] sm:$0xff]
        %v879 = vld [vmem:[%s785 + $0x130] sm:$0xff]
        %v880 = vld [vmem:[%s785 + $0x138] sm:$0xff]
        %v881 = vld [vmem:[%s785 + $0x140] sm:$0xff]
        %v882 = vld [vmem:[%s785 + $0x148] sm:$0xff]
        %v883 = vld [vmem:[%s785 + $0x150] sm:$0xff]
        %v884 = vld [vmem:[%s785 + $0x158] sm:$0xff]
        %v885 = vld [vmem:[%s785 + $0x160] sm:$0xff]
        %v886 = vld [vmem:[%s785 + $0x168] sm:$0xff]
        %v887 = vld [vmem:[%s785 + $0x170] sm:$0xff]
        %v888 = vld [vmem:[%s785 + $0x178] sm:$0xff]
        %v889 = vld [vmem:[%s785 + $0x180] sm:$0xff]
        %v890 = vld [vmem:[%s785 + $0x188] sm:$0xff]
        %v891 = vld [vmem:[%s785 + $0x190] sm:$0xff]
        %v892 = vld [vmem:[%s785 + $0x198] sm:$0xff]
        %v893 = vld [vmem:[%s785 + $0x1a0] sm:$0xff]
        %v894 = vld [vmem:[%s785 + $0x1a8] sm:$0xff]
        %v895 = vld [vmem:[%s785 + $0x1b0] sm:$0xff]
        %v896 = vld [vmem:[%s785 + $0x1b8] sm:$0xff]
        %v897 = vld [vmem:[%s785 + $0x1c0] sm:$0xff]
        %v898 = vld [vmem:[%s785 + $0x1c8] sm:$0xff]
        %v899 = vld [vmem:[%s785 + $0x1d0] sm:$0xff]
        %v900 = vld [vmem:[%s785 + $0x1d8] sm:$0xff]
        %v901 = vld [vmem:[%s785 + $0x1e0] sm:$0xff]
        %v902 = vld [vmem:[%s785 + $0x1e8] sm:$0xff]
        %v903 = vld [vmem:[%s785 + $0x1f0] sm:$0xff]
        %v904 = vld [vmem:[%s785 + $0x1f8] sm:$0xff]
        %v905 = vld [vmem:[%s785 + $0x200] sm:$0xff]
        %v906 = vld [vmem:[%s785 + $0x208] sm:$0xff]
        %v907 = vld [vmem:[%s785 + $0x210] sm:$0xff]
        %v908 = vld [vmem:[%s785 + $0x218] sm:$0xff]
        %v909 = vld [vmem:[%s785 + $0x220] sm:$0xff]
        %v910 = vld [vmem:[%s785 + $0x228] sm:$0xff]
        %v911 = vld [vmem:[%s785 + $0x230] sm:$0xff]
        %v912 = vld [vmem:[%s785 + $0x238] sm:$0xff]
        %v913 = vld [vmem:[%s785 + $0x240] sm:$0xff]
        %v914 = vld [vmem:[%s785 + $0x248] sm:$0xff]
        %v915 = vld [vmem:[%s785 + $0x250] sm:$0xff]
        %v916 = vld [vmem:[%s785 + $0x258] sm:$0xff]
        %v917 = vld [vmem:[%s785 + $0x260] sm:$0xff]
        %v918 = vld [vmem:[%s785 + $0x268] sm:$0xff]
        %v919 = vld [vmem:[%s785 + $0x270] sm:$0xff]
        %v920 = vld [vmem:[%s785 + $0x278] sm:$0xff]
        %v921 = vld [vmem:[%s785 + $0x280] sm:$0xff]
        %v922 = vld [vmem:[%s785 + $0x288] sm:$0xff]
        %v923 = vld [vmem:[%s785 + $0x290] sm:$0xff]
        %v924 = vld [vmem:[%s785 + $0x298] sm:$0xff]
        %v925 = vld [vmem:[%s785 + $0x2a0] sm:$0xff]
        %v926 = vld [vmem:[%s785 + $0x2a8] sm:$0xff]
        %v927 = vld [vmem:[%s785 + $0x2b0] sm:$0xff]
        %v928 = vld [vmem:[%s785 + $0x2b8] sm:$0xff]
        %v929 = vld [vmem:[%s785 + $0x2c0] sm:$0xff]
        %v930 = vld [vmem:[%s785 + $0x2c8] sm:$0xff]
        %v931 = vld [vmem:[%s785 + $0x2d0] sm:$0xff]
        %v932 = vld [vmem:[%s785 + $0x2d8] sm:$0xff]
        %v933 = vld [vmem:[%s785 + $0x2e0] sm:$0xff]
        %v934 = vld [vmem:[%s785 + $0x2e8] sm:$0xff]
        %v935 = vld [vmem:[%s785 + $0x2f0] sm:$0xff]
        %v936 = vld [vmem:[%s785 + $0x2f8] sm:$0xff]
        %v937 = vld [vmem:[%s785 + $0x300] sm:$0xff]
        %v938 = vld [vmem:[%s785 + $0x308] sm:$0xff]
        %v939 = vld [vmem:[%s785 + $0x310] sm:$0xff]
        %v940 = vld [vmem:[%s785 + $0x318] sm:$0xff]
        %v941 = vld [vmem:[%s785 + $0x320] sm:$0xff]
        %v942 = vld [vmem:[%s785 + $0x328] sm:$0xff]
        %v943 = vld [vmem:[%s785 + $0x330] sm:$0xff]
        %v944 = vld [vmem:[%s785 + $0x338] sm:$0xff]
        %v945 = vld [vmem:[%s785 + $0x340] sm:$0xff]
        %v946 = vld [vmem:[%s785 + $0x348] sm:$0xff]
        %v947 = vld [vmem:[%s785 + $0x350] sm:$0xff]
        %v948 = vld [vmem:[%s785 + $0x358] sm:$0xff]
        %v949 = vld [vmem:[%s785 + $0x360] sm:$0xff]
        %v950 = vld [vmem:[%s785 + $0x368] sm:$0xff]
        %v951 = vld [vmem:[%s785 + $0x370] sm:$0xff]
        %v952 = vld [vmem:[%s785 + $0x378] sm:$0xff]
        %v953 = vld [vmem:[%s785 + $0x380] sm:$0xff]
        %v954 = vld [vmem:[%s785 + $0x388] sm:$0xff]
        %v955 = vld [vmem:[%s785 + $0x390] sm:$0xff]
        %v956 = vld [vmem:[%s785 + $0x398] sm:$0xff]
        %v957 = vld [vmem:[%s785 + $0x3a0] sm:$0xff]
        %v958 = vld [vmem:[%s785 + $0x3a8] sm:$0xff]
        %v959 = vld [vmem:[%s785 + $0x3b0] sm:$0xff]
        %v960 = vld [vmem:[%s785 + $0x3b8] sm:$0xff]
        %v961 = vld [vmem:[%s785 + $0x3c0] sm:$0xff]
        %v962 = vld [vmem:[%s785 + $0x3c8] sm:$0xff]
        %v963 = vld [vmem:[%s785 + $0x3d0] sm:$0xff]
        %v964 = vld [vmem:[%s785 + $0x3d8] sm:$0xff]
        %v965 = vld [vmem:[%s785 + $0x3e0] sm:$0xff]
        %v966 = vld [vmem:[%s785 + $0x3e8] sm:$0xff]
        %v967 = vld [vmem:[%s785 + $0x3f0] sm:$0xff]
        %v968 = vld [vmem:[%s785 + $0x3f8] sm:$0xff]
        %v969 = vld [vmem:[%s785 + $0x400] sm:$0xff]
        %v970 = vld [vmem:[%s785 + $0x408] sm:$0xff]
        %v971 = vld [vmem:[%s785 + $0x410] sm:$0xff]
        %v972 = vld [vmem:[%s785 + $0x418] sm:$0xff]
        %v973 = vld [vmem:[%s785 + $0x420] sm:$0xff]
        %v974 = vld [vmem:[%s785 + $0x428] sm:$0xff]
        %v975 = vld [vmem:[%s785 + $0x430] sm:$0xff]
        %v976 = vld [vmem:[%s785 + $0x438] sm:$0xff]
        %v977 = vld [vmem:[%s785 + $0x440] sm:$0xff]
        %v978 = vld [vmem:[%s785 + $0x448] sm:$0xff]
        %v979 = vld [vmem:[%s785 + $0x450] sm:$0xff]
        %v980 = vld [vmem:[%s785 + $0x458] sm:$0xff]
        %v981 = vld [vmem:[%s785 + $0x460] sm:$0xff]
        %v982 = vld [vmem:[%s785 + $0x468] sm:$0xff]
        %v983 = vld [vmem:[%s785 + $0x470] sm:$0xff]
        %v984 = vld [vmem:[%s785 + $0x478] sm:$0xff]
        %v985 = vld [vmem:[%s785 + $0x480] sm:$0xff]
        %v986 = vld [vmem:[%s785 + $0x488] sm:$0xff]
        %v987 = vld [vmem:[%s785 + $0x490] sm:$0xff]
        %v988 = vld [vmem:[%s785 + $0x498] sm:$0xff]
        %v989 = vld [vmem:[%s785 + $0x4a0] sm:$0xff]
        %v990 = vld [vmem:[%s785 + $0x4a8] sm:$0xff]
        %v991 = vld [vmem:[%s785 + $0x4b0] sm:$0xff]
        %v992 = vld [vmem:[%s785 + $0x4b8] sm:$0xff]
        %v993 = vld [vmem:[%s785 + $0x4c0] sm:$0xff]
        %v994 = vld [vmem:[%s785 + $0x4c8] sm:$0xff]
        %v995 = vld [vmem:[%s785 + $0x4d0] sm:$0xff]
        %v996 = vld [vmem:[%s785 + $0x4d8] sm:$0xff]
        %v997 = vld [vmem:[%s785 + $0x4e0] sm:$0xff]
        %v998 = vld [vmem:[%s785 + $0x4e8] sm:$0xff]
        %v999 = vld [vmem:[%s785 + $0x4f0] sm:$0xff]
        %v1000 = vld [vmem:[%s785 + $0x4f8] sm:$0xff]
        %v1001 = vld [vmem:[%s785 + $0x500] sm:$0xff]
        %v1002 = vld [vmem:[%s785 + $0x508] sm:$0xff]
        %v1003 = vld [vmem:[%s785 + $0x510] sm:$0xff]
        %v1004 = vld [vmem:[%s785 + $0x518] sm:$0xff]
        %v1005 = vld [vmem:[%s785 + $0x520] sm:$0xff]
        %v1006 = vld [vmem:[%s785 + $0x528] sm:$0xff]
        %v1007 = vld [vmem:[%s785 + $0x530] sm:$0xff]
        %v1008 = vld [vmem:[%s785 + $0x538] sm:$0xff]
        %v1009 = vld [vmem:[%s785 + $0x540] sm:$0xff]
        %v1010 = vld [vmem:[%s785 + $0x548] sm:$0xff]
        %v1011 = vld [vmem:[%s785 + $0x550] sm:$0xff]
        %v1012 = vld [vmem:[%s785 + $0x558] sm:$0xff]
        %v1013 = vld [vmem:[%s785 + $0x560] sm:$0xff]
        %v1014 = vld [vmem:[%s785 + $0x568] sm:$0xff]
        %v1015 = vld [vmem:[%s785 + $0x570] sm:$0xff]
        %v1016 = vld [vmem:[%s785 + $0x578] sm:$0xff]
        %v1017 = vld [vmem:[%s785 + $0x580] sm:$0xff]
        %v1018 = vld [vmem:[%s785 + $0x588] sm:$0xff]
        %v1019 = vld [vmem:[%s785 + $0x590] sm:$0xff]
        %v1020 = vld [vmem:[%s785 + $0x598] sm:$0xff]
        %v1021 = vld [vmem:[%s785 + $0x5a0] sm:$0xff]
        %v1022 = vld [vmem:[%s785 + $0x5a8] sm:$0xff]
        %v1023 = vld [vmem:[%s785 + $0x5b0] sm:$0xff]
        %v1024 = vld [vmem:[%s785 + $0x5b8] sm:$0xff]
        %v1025 = vld [vmem:[%s785 + $0x5c0] sm:$0xff]
        %v1026 = vld [vmem:[%s785 + $0x5c8] sm:$0xff]
        %v1027 = vld [vmem:[%s785 + $0x5d0] sm:$0xff]
        %v1028 = vld [vmem:[%s785 + $0x5d8] sm:$0xff]
        %v1029 = vld [vmem:[%s785 + $0x5e0] sm:$0xff]
        %v1030 = vld [vmem:[%s785 + $0x5e8] sm:$0xff]
        %v1031 = vld [vmem:[%s785 + $0x5f0] sm:$0xff]
        %v1032 = vld [vmem:[%s785 + $0x5f8] sm:$0xff]
        %v1033 = vld [vmem:[%s785 + $0x600] sm:$0xff]
        %v1034 = vld [vmem:[%s785 + $0x608] sm:$0xff]
        %v1035 = vld [vmem:[%s785 + $0x610] sm:$0xff]
        %v1036 = vld [vmem:[%s785 + $0x618] sm:$0xff]
        %v1037 = vld [vmem:[%s785 + $0x620] sm:$0xff]
        %v1038 = vld [vmem:[%s785 + $0x628] sm:$0xff]
        %v1039 = vld [vmem:[%s785 + $0x630] sm:$0xff]
        %v1040 = vld [vmem:[%s785 + $0x638] sm:$0xff]
        %v1041 = vld [vmem:[%s785 + $0x640] sm:$0xff]
        %v1042 = vld [vmem:[%s785 + $0x648] sm:$0xff]
        %v1043 = vld [vmem:[%s785 + $0x650] sm:$0xff]
        %v1044 = vld [vmem:[%s785 + $0x658] sm:$0xff]
        %v1045 = vld [vmem:[%s785 + $0x660] sm:$0xff]
        %v1046 = vld [vmem:[%s785 + $0x668] sm:$0xff]
        %v1047 = vld [vmem:[%s785 + $0x670] sm:$0xff]
        %v1048 = vld [vmem:[%s785 + $0x678] sm:$0xff]
        %v1049 = vld [vmem:[%s785 + $0x680] sm:$0xff]
        %v1050 = vld [vmem:[%s785 + $0x688] sm:$0xff]
        %v1051 = vld [vmem:[%s785 + $0x690] sm:$0xff]
        %v1052 = vld [vmem:[%s785 + $0x698] sm:$0xff]
        %v1053 = vld [vmem:[%s785 + $0x6a0] sm:$0xff]
        %v1054 = vld [vmem:[%s785 + $0x6a8] sm:$0xff]
        %v1055 = vld [vmem:[%s785 + $0x6b0] sm:$0xff]
        %v1056 = vld [vmem:[%s785 + $0x6b8] sm:$0xff]
        %v1057 = vld [vmem:[%s785 + $0x6c0] sm:$0xff]
        %v1058 = vld [vmem:[%s785 + $0x6c8] sm:$0xff]
        %v1059 = vld [vmem:[%s785 + $0x6d0] sm:$0xff]
        %v1060 = vld [vmem:[%s785 + $0x6d8] sm:$0xff]
        %v1061 = vld [vmem:[%s785 + $0x6e0] sm:$0xff]
        %v1062 = vld [vmem:[%s785 + $0x6e8] sm:$0xff]
        %v1063 = vld [vmem:[%s785 + $0x6f0] sm:$0xff]
        %v1064 = vld [vmem:[%s785 + $0x6f8] sm:$0xff]
        %v1065 = vld [vmem:[%s785 + $0x700] sm:$0xff]
        %v1066 = vld [vmem:[%s785 + $0x708] sm:$0xff]
        %v1067 = vld [vmem:[%s785 + $0x710] sm:$0xff]
        %v1068 = vld [vmem:[%s785 + $0x718] sm:$0xff]
        %v1069 = vld [vmem:[%s785 + $0x720] sm:$0xff]
        %v1070 = vld [vmem:[%s785 + $0x728] sm:$0xff]
        %v1071 = vld [vmem:[%s785 + $0x730] sm:$0xff]
        %v1072 = vld [vmem:[%s785 + $0x738] sm:$0xff]
        %v1073 = vld [vmem:[%s785 + $0x740] sm:$0xff]
        %v1074 = vld [vmem:[%s785 + $0x748] sm:$0xff]
        %v1075 = vld [vmem:[%s785 + $0x750] sm:$0xff]
        %v1076 = vld [vmem:[%s785 + $0x758] sm:$0xff]
        %v1077 = vld [vmem:[%s785 + $0x760] sm:$0xff]
        %v1078 = vld [vmem:[%s785 + $0x768] sm:$0xff]
        %v1079 = vld [vmem:[%s785 + $0x770] sm:$0xff]
        %v1080 = vld [vmem:[%s785 + $0x778] sm:$0xff]
        %vm1081 = vcmask 916480
        %v1083 = vsel %vm1081, %v832, 0
        %v1086 = vsel %vm1081, %v834, 0
        %v1089 = vsel %vm1081, %v836, 0
        %v1092 = vsel %vm1081, %v838, 0
        %v1095 = vsel %vm1081, %v840, 0
        %1097 = vmatpush.msra.mxu0 %v961
        %1098 = vmatpush.msra.mxu0 %v953
        %1099 = vmatpush.msra.mxu0 %v945
        %1100 = vmatpush.msra.mxu0 %v937
        %1101 = vmatpush.msra.mxu0 %v929
        %1102 = vmatpush.msra.mxu0 %v921
        %1103 = vmatpush.msra.mxu0 %v913
        %1104 = vmatpush.msra.mxu0 %v905
        %1105 = vmatpush.msra.mxu0 %v897
        %1106 = vmatpush.msra.mxu0 %v889
        %1107 = vmatpush.msra.mxu0 %v881
        %1108 = vmatpush.msra.mxu0 %v873
        %1109 = vmatpush.msra.mxu0 %v865
        %1110 = vmatpush.msra.mxu0 %v857
        %1111 = vmatpush.msra.mxu0 %v849
        %1112 = vmatpush.msra.mxu0 %v841
        %1113 = vmatmul.f32.gmra.mxu0 %v831
        %v1114 = vpop.f32.mrf.mxu0
        %v1115 = vadd.f32 0.0, %v1114
        %1116 = vmatmul.f32.gmra.mxu0 %v833
        %v1117 = vpop.f32.mrf.mxu0
        %v1118 = vadd.f32 0.0, %v1117
        %1119 = vmatmul.f32.gmra.mxu0 %v835
        %v1120 = vpop.f32.mrf.mxu0
        %v1121 = vadd.f32 0.0, %v1120
        %1122 = vmatmul.f32.gmra.mxu0 %v837
        %v1123 = vpop.f32.mrf.mxu0
        %v1124 = vadd.f32 0.0, %v1123
        %1125 = vmatmul.f32.gmra.mxu0 %v839
        %v1126 = vpop.f32.mrf.mxu0
        %v1127 = vadd.f32 0.0, %v1126
        %1128 = vdwg.mxu0
        %1129 = vmatpush.msra.mxu0 0.0
        %1130 = vmatpush.msra.mxu0 0.0
        %1131 = vmatpush.msra.mxu0 %v1073
        %1132 = vmatpush.msra.mxu0 %v1065
        %1133 = vmatpush.msra.mxu0 %v1057
        %1134 = vmatpush.msra.mxu0 %v1049
        %1135 = vmatpush.msra.mxu0 %v1041
        %1136 = vmatpush.msra.mxu0 %v1033
        %1137 = vmatpush.msra.mxu0 %v1025
        %1138 = vmatpush.msra.mxu0 %v1017
        %1139 = vmatpush.msra.mxu0 %v1009
        %1140 = vmatpush.msra.mxu0 %v1001
        %1141 = vmatpush.msra.mxu0 %v993
        %1142 = vmatpush.msra.mxu0 %v985
        %1143 = vmatpush.msra.mxu0 %v977
        %1144 = vmatpush.msra.mxu0 %v969
        %1145 = vmatmul.f32.gmra.mxu0 %v1083
        %v1146 = vpop.f32.mrf.mxu0
        %v1147 = vadd.f32 %v1115, %v1146
        %1148 = vmatmul.f32.gmra.mxu0 %v1086
        %v1149 = vpop.f32.mrf.mxu0
        %v1150 = vadd.f32 %v1118, %v1149
        %1151 = vmatmul.f32.gmra.mxu0 %v1089
        %v1152 = vpop.f32.mrf.mxu0
        %v1153 = vadd.f32 %v1121, %v1152
        %1154 = vmatmul.f32.gmra.mxu0 %v1092
        %v1155 = vpop.f32.mrf.mxu0
        %v1156 = vadd.f32 %v1124, %v1155
        %1157 = vmatmul.f32.gmra.mxu0 %v1095
        %v1158 = vpop.f32.mrf.mxu0
        %v1159 = vadd.f32 %v1127, %v1158
        %1160 = vdwg.mxu0
        %1161 = vmatpush.msra.mxu0 %v962
        %1162 = vmatpush.msra.mxu0 %v954
        %1163 = vmatpush.msra.mxu0 %v946
        %1164 = vmatpush.msra.mxu0 %v938
        %1165 = vmatpush.msra.mxu0 %v930
        %1166 = vmatpush.msra.mxu0 %v922
        %1167 = vmatpush.msra.mxu0 %v914
        %1168 = vmatpush.msra.mxu0 %v906
        %1169 = vmatpush.msra.mxu0 %v898
        %1170 = vmatpush.msra.mxu0 %v890
        %1171 = vmatpush.msra.mxu0 %v882
        %1172 = vmatpush.msra.mxu0 %v874
        %1173 = vmatpush.msra.mxu0 %v866
        %1174 = vmatpush.msra.mxu0 %v858
        %1175 = vmatpush.msra.mxu0 %v850
        %1176 = vmatpush.msra.mxu0 %v842
        %1177 = vmatmul.f32.gmra.mxu0 %v831
        %v1178 = vpop.f32.mrf.mxu0
        %v1179 = vadd.f32 0.0, %v1178
        %1180 = vmatmul.f32.gmra.mxu0 %v833
        %v1181 = vpop.f32.mrf.mxu0
        %v1182 = vadd.f32 0.0, %v1181
        %1183 = vmatmul.f32.gmra.mxu0 %v835
        %v1184 = vpop.f32.mrf.mxu0
        %v1185 = vadd.f32 0.0, %v1184
        %1186 = vmatmul.f32.gmra.mxu0 %v837
        %v1187 = vpop.f32.mrf.mxu0
        %v1188 = vadd.f32 0.0, %v1187
        %1189 = vmatmul.f32.gmra.mxu0 %v839
        %v1190 = vpop.f32.mrf.mxu0
        %v1191 = vadd.f32 0.0, %v1190
        %1192 = vdwg.mxu0
        %1193 = vmatpush.msra.mxu0 0.0
        %1194 = vmatpush.msra.mxu0 0.0
        %1195 = vmatpush.msra.mxu0 %v1074
        %1196 = vmatpush.msra.mxu0 %v1066
        %1197 = vmatpush.msra.mxu0 %v1058
        %1198 = vmatpush.msra.mxu0 %v1050
        %1199 = vmatpush.msra.mxu0 %v1042
        %1200 = vmatpush.msra.mxu0 %v1034
        %1201 = vmatpush.msra.mxu0 %v1026
        %1202 = vmatpush.msra.mxu0 %v1018
        %1203 = vmatpush.msra.mxu0 %v1010
        %1204 = vmatpush.msra.mxu0 %v1002
        %1205 = vmatpush.msra.mxu0 %v994
        %1206 = vmatpush.msra.mxu0 %v986
        %1207 = vmatpush.msra.mxu0 %v978
        %1208 = vmatpush.msra.mxu0 %v970
        %1209 = vmatmul.f32.gmra.mxu0 %v1083
        %v1210 = vpop.f32.mrf.mxu0
        %v1211 = vadd.f32 %v1179, %v1210
        %1212 = vmatmul.f32.gmra.mxu0 %v1086
        %v1213 = vpop.f32.mrf.mxu0
        %v1214 = vadd.f32 %v1182, %v1213
        %1215 = vmatmul.f32.gmra.mxu0 %v1089
        %v1216 = vpop.f32.mrf.mxu0
        %v1217 = vadd.f32 %v1185, %v1216
        %1218 = vmatmul.f32.gmra.mxu0 %v1092
        %v1219 = vpop.f32.mrf.mxu0
        %v1220 = vadd.f32 %v1188, %v1219
        %1221 = vmatmul.f32.gmra.mxu0 %v1095
        %v1222 = vpop.f32.mrf.mxu0
        %v1223 = vadd.f32 %v1191, %v1222
        %1224 = vdwg.mxu0
        %1225 = vmatpush.msra.mxu0 %v963
        %1226 = vmatpush.msra.mxu0 %v955
        %1227 = vmatpush.msra.mxu0 %v947
        %1228 = vmatpush.msra.mxu0 %v939
        %1229 = vmatpush.msra.mxu0 %v931
        %1230 = vmatpush.msra.mxu0 %v923
        %1231 = vmatpush.msra.mxu0 %v915
        %1232 = vmatpush.msra.mxu0 %v907
        %1233 = vmatpush.msra.mxu0 %v899
        %1234 = vmatpush.msra.mxu0 %v891
        %1235 = vmatpush.msra.mxu0 %v883
        %1236 = vmatpush.msra.mxu0 %v875
        %1237 = vmatpush.msra.mxu0 %v867
        %1238 = vmatpush.msra.mxu0 %v859
        %1239 = vmatpush.msra.mxu0 %v851
        %1240 = vmatpush.msra.mxu0 %v843
        %1241 = vmatmul.f32.gmra.mxu0 %v831
        %v1242 = vpop.f32.mrf.mxu0
        %v1243 = vadd.f32 0.0, %v1242
        %1244 = vmatmul.f32.gmra.mxu0 %v833
        %v1245 = vpop.f32.mrf.mxu0
        %v1246 = vadd.f32 0.0, %v1245
        %1247 = vmatmul.f32.gmra.mxu0 %v835
        %v1248 = vpop.f32.mrf.mxu0
        %v1249 = vadd.f32 0.0, %v1248
        %1250 = vmatmul.f32.gmra.mxu0 %v837
        %v1251 = vpop.f32.mrf.mxu0
        %v1252 = vadd.f32 0.0, %v1251
        %1253 = vmatmul.f32.gmra.mxu0 %v839
        %v1254 = vpop.f32.mrf.mxu0
        %v1255 = vadd.f32 0.0, %v1254
        %1256 = vdwg.mxu0
        %1257 = vmatpush.msra.mxu0 0.0
        %1258 = vmatpush.msra.mxu0 0.0
        %1259 = vmatpush.msra.mxu0 %v1075
        %1260 = vmatpush.msra.mxu0 %v1067
        %1261 = vmatpush.msra.mxu0 %v1059
        %1262 = vmatpush.msra.mxu0 %v1051
        %1263 = vmatpush.msra.mxu0 %v1043
        %1264 = vmatpush.msra.mxu0 %v1035
        %1265 = vmatpush.msra.mxu0 %v1027
        %1266 = vmatpush.msra.mxu0 %v1019
        %1267 = vmatpush.msra.mxu0 %v1011
        %1268 = vmatpush.msra.mxu0 %v1003
        %1269 = vmatpush.msra.mxu0 %v995
        %1270 = vmatpush.msra.mxu0 %v987
        %1271 = vmatpush.msra.mxu0 %v979
        %1272 = vmatpush.msra.mxu0 %v971
        %1273 = vmatmul.f32.gmra.mxu0 %v1083
        %v1274 = vpop.f32.mrf.mxu0
        %v1275 = vadd.f32 %v1243, %v1274
        %1276 = vmatmul.f32.gmra.mxu0 %v1086
        %v1277 = vpop.f32.mrf.mxu0
        %v1278 = vadd.f32 %v1246, %v1277
        %1279 = vmatmul.f32.gmra.mxu0 %v1089
        %v1280 = vpop.f32.mrf.mxu0
        %v1281 = vadd.f32 %v1249, %v1280
        %1282 = vmatmul.f32.gmra.mxu0 %v1092
        %v1283 = vpop.f32.mrf.mxu0
        %v1284 = vadd.f32 %v1252, %v1283
        %1285 = vmatmul.f32.gmra.mxu0 %v1095
        %v1286 = vpop.f32.mrf.mxu0
        %v1287 = vadd.f32 %v1255, %v1286
        %1288 = vdwg.mxu0
        %1289 = vmatpush.msra.mxu0 %v964
        %1290 = vmatpush.msra.mxu0 %v956
        %1291 = vmatpush.msra.mxu0 %v948
        %1292 = vmatpush.msra.mxu0 %v940
        %1293 = vmatpush.msra.mxu0 %v932
        %1294 = vmatpush.msra.mxu0 %v924
        %1295 = vmatpush.msra.mxu0 %v916
        %1296 = vmatpush.msra.mxu0 %v908
        %1297 = vmatpush.msra.mxu0 %v900
        %1298 = vmatpush.msra.mxu0 %v892
        %1299 = vmatpush.msra.mxu0 %v884
        %1300 = vmatpush.msra.mxu0 %v876
        %1301 = vmatpush.msra.mxu0 %v868
        %1302 = vmatpush.msra.mxu0 %v860
        %1303 = vmatpush.msra.mxu0 %v852
        %1304 = vmatpush.msra.mxu0 %v844
        %1305 = vmatmul.f32.gmra.mxu0 %v831
        %v1306 = vpop.f32.mrf.mxu0
        %v1307 = vadd.f32 0.0, %v1306
        %1308 = vmatmul.f32.gmra.mxu0 %v833
        %v1309 = vpop.f32.mrf.mxu0
        %v1310 = vadd.f32 0.0, %v1309
        %1311 = vmatmul.f32.gmra.mxu0 %v835
        %v1312 = vpop.f32.mrf.mxu0
        %v1313 = vadd.f32 0.0, %v1312
        %1314 = vmatmul.f32.gmra.mxu0 %v837
        %v1315 = vpop.f32.mrf.mxu0
        %v1316 = vadd.f32 0.0, %v1315
        %1317 = vmatmul.f32.gmra.mxu0 %v839
        %v1318 = vpop.f32.mrf.mxu0
        %v1319 = vadd.f32 0.0, %v1318
        %1320 = vdwg.mxu0
        %1321 = vmatpush.msra.mxu0 0.0
        %1322 = vmatpush.msra.mxu0 0.0
        %1323 = vmatpush.msra.mxu0 %v1076
        %1324 = vmatpush.msra.mxu0 %v1068
        %1325 = vmatpush.msra.mxu0 %v1060
        %1326 = vmatpush.msra.mxu0 %v1052
        %1327 = vmatpush.msra.mxu0 %v1044
        %1328 = vmatpush.msra.mxu0 %v1036
        %1329 = vmatpush.msra.mxu0 %v1028
        %1330 = vmatpush.msra.mxu0 %v1020
        %1331 = vmatpush.msra.mxu0 %v1012
        %1332 = vmatpush.msra.mxu0 %v1004
        %1333 = vmatpush.msra.mxu0 %v996
        %1334 = vmatpush.msra.mxu0 %v988
        %1335 = vmatpush.msra.mxu0 %v980
        %1336 = vmatpush.msra.mxu0 %v972
        %1337 = vmatmul.f32.gmra.mxu0 %v1083
        %v1338 = vpop.f32.mrf.mxu0
        %v1339 = vadd.f32 %v1307, %v1338
        %1340 = vmatmul.f32.gmra.mxu0 %v1086
        %v1341 = vpop.f32.mrf.mxu0
        %v1342 = vadd.f32 %v1310, %v1341
        %1343 = vmatmul.f32.gmra.mxu0 %v1089
        %v1344 = vpop.f32.mrf.mxu0
        %v1345 = vadd.f32 %v1313, %v1344
        %1346 = vmatmul.f32.gmra.mxu0 %v1092
        %v1347 = vpop.f32.mrf.mxu0
        %v1348 = vadd.f32 %v1316, %v1347
        %1349 = vmatmul.f32.gmra.mxu0 %v1095
        %v1350 = vpop.f32.mrf.mxu0
        %v1351 = vadd.f32 %v1319, %v1350
        %1352 = vdwg.mxu0
        %1353 = vmatpush.msra.mxu0 %v965
        %1354 = vmatpush.msra.mxu0 %v957
        %1355 = vmatpush.msra.mxu0 %v949
        %1356 = vmatpush.msra.mxu0 %v941
        %1357 = vmatpush.msra.mxu0 %v933
        %1358 = vmatpush.msra.mxu0 %v925
        %1359 = vmatpush.msra.mxu0 %v917
        %1360 = vmatpush.msra.mxu0 %v909
        %1361 = vmatpush.msra.mxu0 %v901
        %1362 = vmatpush.msra.mxu0 %v893
        %1363 = vmatpush.msra.mxu0 %v885
        %1364 = vmatpush.msra.mxu0 %v877
        %1365 = vmatpush.msra.mxu0 %v869
        %1366 = vmatpush.msra.mxu0 %v861
        %1367 = vmatpush.msra.mxu0 %v853
        %1368 = vmatpush.msra.mxu0 %v845
        %1369 = vmatmul.f32.gmra.mxu0 %v831
        %v1370 = vpop.f32.mrf.mxu0
        %v1371 = vadd.f32 0.0, %v1370
        %1372 = vmatmul.f32.gmra.mxu0 %v833
        %v1373 = vpop.f32.mrf.mxu0
        %v1374 = vadd.f32 0.0, %v1373
        %1375 = vmatmul.f32.gmra.mxu0 %v835
        %v1376 = vpop.f32.mrf.mxu0
        %v1377 = vadd.f32 0.0, %v1376
        %1378 = vmatmul.f32.gmra.mxu0 %v837
        %v1379 = vpop.f32.mrf.mxu0
        %v1380 = vadd.f32 0.0, %v1379
        %1381 = vmatmul.f32.gmra.mxu0 %v839
        %v1382 = vpop.f32.mrf.mxu0
        %v1383 = vadd.f32 0.0, %v1382
        %1384 = vdwg.mxu0
        %1385 = vmatpush.msra.mxu0 0.0
        %1386 = vmatpush.msra.mxu0 0.0
        %1387 = vmatpush.msra.mxu0 %v1077
        %1388 = vmatpush.msra.mxu0 %v1069
        %1389 = vmatpush.msra.mxu0 %v1061
        %1390 = vmatpush.msra.mxu0 %v1053
        %1391 = vmatpush.msra.mxu0 %v1045
        %1392 = vmatpush.msra.mxu0 %v1037
        %1393 = vmatpush.msra.mxu0 %v1029
        %1394 = vmatpush.msra.mxu0 %v1021
        %1395 = vmatpush.msra.mxu0 %v1013
        %1396 = vmatpush.msra.mxu0 %v1005
        %1397 = vmatpush.msra.mxu0 %v997
        %1398 = vmatpush.msra.mxu0 %v989
        %1399 = vmatpush.msra.mxu0 %v981
        %1400 = vmatpush.msra.mxu0 %v973
        %1401 = vmatmul.f32.gmra.mxu0 %v1083
        %v1402 = vpop.f32.mrf.mxu0
        %v1403 = vadd.f32 %v1371, %v1402
        %1404 = vmatmul.f32.gmra.mxu0 %v1086
        %v1405 = vpop.f32.mrf.mxu0
        %v1406 = vadd.f32 %v1374, %v1405
        %1407 = vmatmul.f32.gmra.mxu0 %v1089
        %v1408 = vpop.f32.mrf.mxu0
        %v1409 = vadd.f32 %v1377, %v1408
        %1410 = vmatmul.f32.gmra.mxu0 %v1092
        %v1411 = vpop.f32.mrf.mxu0
        %v1412 = vadd.f32 %v1380, %v1411
        %1413 = vmatmul.f32.gmra.mxu0 %v1095
        %v1414 = vpop.f32.mrf.mxu0
        %v1415 = vadd.f32 %v1383, %v1414
        %1416 = vdwg.mxu0
        %1417 = vmatpush.msra.mxu0 %v966
        %1418 = vmatpush.msra.mxu0 %v958
        %1419 = vmatpush.msra.mxu0 %v950
        %1420 = vmatpush.msra.mxu0 %v942
        %1421 = vmatpush.msra.mxu0 %v934
        %1422 = vmatpush.msra.mxu0 %v926
        %1423 = vmatpush.msra.mxu0 %v918
        %1424 = vmatpush.msra.mxu0 %v910
        %1425 = vmatpush.msra.mxu0 %v902
        %1426 = vmatpush.msra.mxu0 %v894
        %1427 = vmatpush.msra.mxu0 %v886
        %1428 = vmatpush.msra.mxu0 %v878
        %1429 = vmatpush.msra.mxu0 %v870
        %1430 = vmatpush.msra.mxu0 %v862
        %1431 = vmatpush.msra.mxu0 %v854
        %1432 = vmatpush.msra.mxu0 %v846
        %1433 = vmatmul.f32.gmra.mxu0 %v831
        %v1434 = vpop.f32.mrf.mxu0
        %v1435 = vadd.f32 0.0, %v1434
        %1436 = vmatmul.f32.gmra.mxu0 %v833
        %v1437 = vpop.f32.mrf.mxu0
        %v1438 = vadd.f32 0.0, %v1437
        %1439 = vmatmul.f32.gmra.mxu0 %v835
        %v1440 = vpop.f32.mrf.mxu0
        %v1441 = vadd.f32 0.0, %v1440
        %1442 = vmatmul.f32.gmra.mxu0 %v837
        %v1443 = vpop.f32.mrf.mxu0
        %v1444 = vadd.f32 0.0, %v1443
        %1445 = vmatmul.f32.gmra.mxu0 %v839
        %v1446 = vpop.f32.mrf.mxu0
        %v1447 = vadd.f32 0.0, %v1446
        %1448 = vdwg.mxu0
        %1449 = vmatpush.msra.mxu0 0.0
        %1450 = vmatpush.msra.mxu0 0.0
        %1451 = vmatpush.msra.mxu0 %v1078
        %1452 = vmatpush.msra.mxu0 %v1070
        %1453 = vmatpush.msra.mxu0 %v1062
        %1454 = vmatpush.msra.mxu0 %v1054
        %1455 = vmatpush.msra.mxu0 %v1046
        %1456 = vmatpush.msra.mxu0 %v1038
        %1457 = vmatpush.msra.mxu0 %v1030
        %1458 = vmatpush.msra.mxu0 %v1022
        %1459 = vmatpush.msra.mxu0 %v1014
        %1460 = vmatpush.msra.mxu0 %v1006
        %1461 = vmatpush.msra.mxu0 %v998
        %1462 = vmatpush.msra.mxu0 %v990
        %1463 = vmatpush.msra.mxu0 %v982
        %1464 = vmatpush.msra.mxu0 %v974
        %1465 = vmatmul.f32.gmra.mxu0 %v1083
        %v1466 = vpop.f32.mrf.mxu0
        %v1467 = vadd.f32 %v1435, %v1466
        %1468 = vmatmul.f32.gmra.mxu0 %v1086
        %v1469 = vpop.f32.mrf.mxu0
        %v1470 = vadd.f32 %v1438, %v1469
        %1471 = vmatmul.f32.gmra.mxu0 %v1089
        %v1472 = vpop.f32.mrf.mxu0
        %v1473 = vadd.f32 %v1441, %v1472
        %1474 = vmatmul.f32.gmra.mxu0 %v1092
        %v1475 = vpop.f32.mrf.mxu0
        %v1476 = vadd.f32 %v1444, %v1475
        %1477 = vmatmul.f32.gmra.mxu0 %v1095
        %v1478 = vpop.f32.mrf.mxu0
        %v1479 = vadd.f32 %v1447, %v1478
        %1480 = vdwg.mxu0
        %1481 = vmatpush.msra.mxu0 %v967
        %1482 = vmatpush.msra.mxu0 %v959
        %1483 = vmatpush.msra.mxu0 %v951
        %1484 = vmatpush.msra.mxu0 %v943
        %1485 = vmatpush.msra.mxu0 %v935
        %1486 = vmatpush.msra.mxu0 %v927
        %1487 = vmatpush.msra.mxu0 %v919
        %1488 = vmatpush.msra.mxu0 %v911
        %1489 = vmatpush.msra.mxu0 %v903
        %1490 = vmatpush.msra.mxu0 %v895
        %1491 = vmatpush.msra.mxu0 %v887
        %1492 = vmatpush.msra.mxu0 %v879
        %1493 = vmatpush.msra.mxu0 %v871
        %1494 = vmatpush.msra.mxu0 %v863
        %1495 = vmatpush.msra.mxu0 %v855
        %1496 = vmatpush.msra.mxu0 %v847
        %1497 = vmatmul.f32.gmra.mxu0 %v831
        %v1498 = vpop.f32.mrf.mxu0
        %v1499 = vadd.f32 0.0, %v1498
        %1500 = vmatmul.f32.gmra.mxu0 %v833
        %v1501 = vpop.f32.mrf.mxu0
        %v1502 = vadd.f32 0.0, %v1501
        %1503 = vmatmul.f32.gmra.mxu0 %v835
        %v1504 = vpop.f32.mrf.mxu0
        %v1505 = vadd.f32 0.0, %v1504
        %1506 = vmatmul.f32.gmra.mxu0 %v837
        %v1507 = vpop.f32.mrf.mxu0
        %v1508 = vadd.f32 0.0, %v1507
        %1509 = vmatmul.f32.gmra.mxu0 %v839
        %v1510 = vpop.f32.mrf.mxu0
        %v1511 = vadd.f32 0.0, %v1510
        %1512 = vdwg.mxu0
        %1513 = vmatpush.msra.mxu0 0.0
        %1514 = vmatpush.msra.mxu0 0.0
        %1515 = vmatpush.msra.mxu0 %v1079
        %1516 = vmatpush.msra.mxu0 %v1071
        %1517 = vmatpush.msra.mxu0 %v1063
        %1518 = vmatpush.msra.mxu0 %v1055
        %1519 = vmatpush.msra.mxu0 %v1047
        %1520 = vmatpush.msra.mxu0 %v1039
        %1521 = vmatpush.msra.mxu0 %v1031
        %1522 = vmatpush.msra.mxu0 %v1023
        %1523 = vmatpush.msra.mxu0 %v1015
        %1524 = vmatpush.msra.mxu0 %v1007
        %1525 = vmatpush.msra.mxu0 %v999
        %1526 = vmatpush.msra.mxu0 %v991
        %1527 = vmatpush.msra.mxu0 %v983
        %1528 = vmatpush.msra.mxu0 %v975
        %1529 = vmatmul.f32.gmra.mxu0 %v1083
        %v1530 = vpop.f32.mrf.mxu0
        %v1531 = vadd.f32 %v1499, %v1530
        %1532 = vmatmul.f32.gmra.mxu0 %v1086
        %v1533 = vpop.f32.mrf.mxu0
        %v1534 = vadd.f32 %v1502, %v1533
        %1535 = vmatmul.f32.gmra.mxu0 %v1089
        %v1536 = vpop.f32.mrf.mxu0
        %v1537 = vadd.f32 %v1505, %v1536
        %1538 = vmatmul.f32.gmra.mxu0 %v1092
        %v1539 = vpop.f32.mrf.mxu0
        %v1540 = vadd.f32 %v1508, %v1539
        %1541 = vmatmul.f32.gmra.mxu0 %v1095
        %v1542 = vpop.f32.mrf.mxu0
        %v1543 = vadd.f32 %v1511, %v1542
        %1544 = vdwg.mxu0
        %1545 = vmatpush.msra.mxu0 %v968
        %1546 = vmatpush.msra.mxu0 %v960
        %1547 = vmatpush.msra.mxu0 %v952
        %1548 = vmatpush.msra.mxu0 %v944
        %1549 = vmatpush.msra.mxu0 %v936
        %1550 = vmatpush.msra.mxu0 %v928
        %1551 = vmatpush.msra.mxu0 %v920
        %1552 = vmatpush.msra.mxu0 %v912
        %1553 = vmatpush.msra.mxu0 %v904
        %1554 = vmatpush.msra.mxu0 %v896
        %1555 = vmatpush.msra.mxu0 %v888
        %1556 = vmatpush.msra.mxu0 %v880
        %1557 = vmatpush.msra.mxu0 %v872
        %1558 = vmatpush.msra.mxu0 %v864
        %1559 = vmatpush.msra.mxu0 %v856
        %1560 = vmatpush.msra.mxu0 %v848
        %1561 = vmatmul.f32.gmra.mxu0 %v831
        %v1562 = vpop.f32.mrf.mxu0
        %v1563 = vadd.f32 0.0, %v1562
        %1564 = vmatmul.f32.gmra.mxu0 %v833
        %v1565 = vpop.f32.mrf.mxu0
        %v1566 = vadd.f32 0.0, %v1565
        %1567 = vmatmul.f32.gmra.mxu0 %v835
        %v1568 = vpop.f32.mrf.mxu0
        %v1569 = vadd.f32 0.0, %v1568
        %1570 = vmatmul.f32.gmra.mxu0 %v837
        %v1571 = vpop.f32.mrf.mxu0
        %v1572 = vadd.f32 0.0, %v1571
        %1573 = vmatmul.f32.gmra.mxu0 %v839
        %v1574 = vpop.f32.mrf.mxu0
        %v1575 = vadd.f32 0.0, %v1574
        %1576 = vdwg.mxu0
        %1577 = vmatpush.msra.mxu0 0.0
        %1578 = vmatpush.msra.mxu0 0.0
        %1579 = vmatpush.msra.mxu0 %v1080
        %1580 = vmatpush.msra.mxu0 %v1072
        %1581 = vmatpush.msra.mxu0 %v1064
        %1582 = vmatpush.msra.mxu0 %v1056
        %1583 = vmatpush.msra.mxu0 %v1048
        %1584 = vmatpush.msra.mxu0 %v1040
        %1585 = vmatpush.msra.mxu0 %v1032
        %1586 = vmatpush.msra.mxu0 %v1024
        %1587 = vmatpush.msra.mxu0 %v1016
        %1588 = vmatpush.msra.mxu0 %v1008
        %1589 = vmatpush.msra.mxu0 %v1000
        %1590 = vmatpush.msra.mxu0 %v992
        %1591 = vmatpush.msra.mxu0 %v984
        %1592 = vmatpush.msra.mxu0 %v976
        %1593 = vmatmul.f32.gmra.mxu0 %v1083
        %v1594 = vpop.f32.mrf.mxu0
        %v1595 = vadd.f32 %v1563, %v1594
        %1596 = vmatmul.f32.gmra.mxu0 %v1086
        %v1597 = vpop.f32.mrf.mxu0
        %v1598 = vadd.f32 %v1566, %v1597
        %1599 = vmatmul.f32.gmra.mxu0 %v1089
        %v1600 = vpop.f32.mrf.mxu0
        %v1601 = vadd.f32 %v1569, %v1600
        %1602 = vmatmul.f32.gmra.mxu0 %v1092
        %v1603 = vpop.f32.mrf.mxu0
        %v1604 = vadd.f32 %v1572, %v1603
        %1605 = vmatmul.f32.gmra.mxu0 %v1095
        %v1606 = vpop.f32.mrf.mxu0
        %v1607 = vadd.f32 %v1575, %v1606
        %1608 = vdwg.mxu0
        %1609 = vst [vmem:[%s802] sm:$0xff] %v1147
        %1610 = vst [vmem:[%s802 + $0x8] sm:$0xff] %v1211
        %1611 = vst [vmem:[%s802 + $0x10] sm:$0xff] %v1275
        %1612 = vst [vmem:[%s802 + $0x18] sm:$0xff] %v1339
        %1613 = vst [vmem:[%s802 + $0x20] sm:$0xff] %v1403
        %1614 = vst [vmem:[%s802 + $0x28] sm:$0xff] %v1467
        %1615 = vst [vmem:[%s802 + $0x30] sm:$0xff] %v1531
        %1616 = vst [vmem:[%s802 + $0x38] sm:$0xff] %v1595
        %1617 = vst [vmem:[%s802 + $0x40] sm:$0xff] %v1150
        %1618 = vst [vmem:[%s802 + $0x48] sm:$0xff] %v1214
        %1619 = vst [vmem:[%s802 + $0x50] sm:$0xff] %v1278
        %1620 = vst [vmem:[%s802 + $0x58] sm:$0xff] %v1342
        %1621 = vst [vmem:[%s802 + $0x60] sm:$0xff] %v1406
        %1622 = vst [vmem:[%s802 + $0x68] sm:$0xff] %v1470
        %1623 = vst [vmem:[%s802 + $0x70] sm:$0xff] %v1534
        %1624 = vst [vmem:[%s802 + $0x78] sm:$0xff] %v1598
        %1625 = vst [vmem:[%s802 + $0x80] sm:$0xff] %v1153
        %1626 = vst [vmem:[%s802 + $0x88] sm:$0xff] %v1217
        %1627 = vst [vmem:[%s802 + $0x90] sm:$0xff] %v1281
        %1628 = vst [vmem:[%s802 + $0x98] sm:$0xff] %v1345
        %1629 = vst [vmem:[%s802 + $0xa0] sm:$0xff] %v1409
        %1630 = vst [vmem:[%s802 + $0xa8] sm:$0xff] %v1473
        %1631 = vst [vmem:[%s802 + $0xb0] sm:$0xff] %v1537
        %1632 = vst [vmem:[%s802 + $0xb8] sm:$0xff] %v1601
        %1633 = vst [vmem:[%s802 + $0xc0] sm:$0xff] %v1156
        %1634 = vst [vmem:[%s802 + $0xc8] sm:$0xff] %v1220
        %1635 = vst [vmem:[%s802 + $0xd0] sm:$0xff] %v1284
        %1636 = vst [vmem:[%s802 + $0xd8] sm:$0xff] %v1348
        %1637 = vst [vmem:[%s802 + $0xe0] sm:$0xff] %v1412
        %1638 = vst [vmem:[%s802 + $0xe8] sm:$0xff] %v1476
        %1639 = vst [vmem:[%s802 + $0xf0] sm:$0xff] %v1540
        %1640 = vst [vmem:[%s802 + $0xf8] sm:$0xff] %v1604
        %1641 = vst [vmem:[%s802 + $0x100] sm:$0xff] %v1159
        %1642 = vst [vmem:[%s802 + $0x108] sm:$0xff] %v1223
        %1643 = vst [vmem:[%s802 + $0x110] sm:$0xff] %v1287
        %1644 = vst [vmem:[%s802 + $0x118] sm:$0xff] %v1351
        %1645 = vst [vmem:[%s802 + $0x120] sm:$0xff] %v1415
        %1646 = vst [vmem:[%s802 + $0x128] sm:$0xff] %v1479
        %1647 = vst [vmem:[%s802 + $0x130] sm:$0xff] %v1543
        %1648 = vst [vmem:[%s802 + $0x138] sm:$0xff] %v1607
        %s1649 = smul.u32 %s20, 1024
        %s1650 = ssub.s32 3136, %s1649
        %v1651 = vlaneseq
        %v1652 = vand.u32 %v1651, 127
        %v1653 = vadd.s32 %v1652, 128
        %v1654 = vadd.s32 %v1652, 256
        %v1655 = vadd.s32 %v1652, 384
        %v1656 = vadd.s32 %v1652, 512
        %v1657 = vadd.s32 %v1652, 640
        %v1658 = vadd.s32 %v1652, 768
        %v1659 = vadd.s32 %v1652, 896
        %v1660 = vstv %s1650
        %vm1661 = vcmp.lt.s32.totalorder %v1652, %v1660
        %vm1662 = vcmp.lt.s32.totalorder %v1653, %v1660
        %vm1663 = vcmp.lt.s32.totalorder %v1654, %v1660
        %vm1664 = vcmp.lt.s32.totalorder %v1655, %v1660
        %vm1665 = vcmp.lt.s32.totalorder %v1656, %v1660
        %vm1666 = vcmp.lt.s32.totalorder %v1657, %v1660
        %vm1667 = vcmp.lt.s32.totalorder %v1658, %v1660
        %vm1668 = vcmp.lt.s32.totalorder %v1659, %v1660
        %v1669 = vsel %vm1661, 1, 0
        %v1670 = vsel %vm1662, 1, 0
        %v1671 = vsel %vm1663, 1, 0
        %v1672 = vsel %vm1664, 1, 0
        %v1673 = vsel %vm1665, 1, 0
        %v1674 = vsel %vm1666, 1, 0
        %v1675 = vsel %vm1667, 1, 0
        %v1676 = vsel %vm1668, 1, 0
        %vm1677 = vcmp.eq.s32.totalorder %v1669, 1
        %vm1678 = vcmp.eq.s32.totalorder %v1670, 1
        %vm1679 = vcmp.eq.s32.totalorder %v1671, 1
        %vm1680 = vcmp.eq.s32.totalorder %v1672, 1
        %vm1681 = vcmp.eq.s32.totalorder %v1673, 1
        %vm1682 = vcmp.eq.s32.totalorder %v1674, 1
        %vm1683 = vcmp.eq.s32.totalorder %v1675, 1
        %vm1684 = vcmp.eq.s32.totalorder %v1676, 1
        %v1685 = vsel %vm1677, %v1147, 0.0
        %v1686 = vsel %vm1678, %v1211, 0.0
        %v1687 = vsel %vm1679, %v1275, 0.0
        %v1688 = vsel %vm1680, %v1339, 0.0
        %v1689 = vsel %vm1681, %v1403, 0.0
        %v1690 = vsel %vm1682, %v1467, 0.0
        %v1691 = vsel %vm1683, %v1531, 0.0
        %v1692 = vsel %vm1684, %v1595, 0.0
        %v1693 = vsel %vm1677, %v1150, 0.0
        %v1694 = vsel %vm1678, %v1214, 0.0
        %v1695 = vsel %vm1679, %v1278, 0.0
        %v1696 = vsel %vm1680, %v1342, 0.0
        %v1697 = vsel %vm1681, %v1406, 0.0
        %v1698 = vsel %vm1682, %v1470, 0.0
        %v1699 = vsel %vm1683, %v1534, 0.0
        %v1700 = vsel %vm1684, %v1598, 0.0
        %v1701 = vsel %vm1677, %v1153, 0.0
        %v1702 = vsel %vm1678, %v1217, 0.0
        %v1703 = vsel %vm1679, %v1281, 0.0
        %v1704 = vsel %vm1680, %v1345, 0.0
        %v1705 = vsel %vm1681, %v1409, 0.0
        %v1706 = vsel %vm1682, %v1473, 0.0
        %v1707 = vsel %vm1683, %v1537, 0.0
        %v1708 = vsel %vm1684, %v1601, 0.0
        %v1709 = vsel %vm1677, %v1156, 0.0
        %v1710 = vsel %vm1678, %v1220, 0.0
        %v1711 = vsel %vm1679, %v1284, 0.0
        %v1712 = vsel %vm1680, %v1348, 0.0
        %v1713 = vsel %vm1681, %v1412, 0.0
        %v1714 = vsel %vm1682, %v1476, 0.0
        %v1715 = vsel %vm1683, %v1540, 0.0
        %v1716 = vsel %vm1684, %v1604, 0.0
        %v1717 = vsel %vm1677, %v1159, 0.0
        %v1718 = vsel %vm1678, %v1223, 0.0
        %v1719 = vsel %vm1679, %v1287, 0.0
        %v1720 = vsel %vm1680, %v1351, 0.0
        %v1721 = vsel %vm1681, %v1415, 0.0
        %v1722 = vsel %vm1682, %v1479, 0.0
        %v1723 = vsel %vm1683, %v1543, 0.0
        %v1724 = vsel %vm1684, %v1607, 0.0
        %v1725 = vadd.f32 %v1685, %v1686
        %v1726 = vadd.f32 %v1725, %v1687
        %v1727 = vadd.f32 %v1726, %v1688
        %v1728 = vadd.f32 %v1727, %v1689
        %v1729 = vadd.f32 %v1728, %v1690
        %v1730 = vadd.f32 %v1729, %v1691
        %v1731 = vadd.f32 %v1730, %v1692
        %1732 = vadd.xlane.f32.xlu0 %v1731
        %v1733 = vpop.xlane.xlu0 %1732
        %v1734 = vadd.f32 %v1693, %v1694
        %v1735 = vadd.f32 %v1734, %v1695
        %v1736 = vadd.f32 %v1735, %v1696
        %v1737 = vadd.f32 %v1736, %v1697
        %v1738 = vadd.f32 %v1737, %v1698
        %v1739 = vadd.f32 %v1738, %v1699
        %v1740 = vadd.f32 %v1739, %v1700
        %1741 = vadd.xlane.f32.xlu0 %v1740
        %v1742 = vpop.xlane.xlu0 %1741
        %v1743 = vadd.f32 %v1701, %v1702
        %v1744 = vadd.f32 %v1743, %v1703
        %v1745 = vadd.f32 %v1744, %v1704
        %v1746 = vadd.f32 %v1745, %v1705
        %v1747 = vadd.f32 %v1746, %v1706
        %v1748 = vadd.f32 %v1747, %v1707
        %v1749 = vadd.f32 %v1748, %v1708
        %1750 = vadd.xlane.f32.xlu0 %v1749
        %v1751 = vpop.xlane.xlu0 %1750
        %v1752 = vadd.f32 %v1709, %v1710
        %v1753 = vadd.f32 %v1752, %v1711
        %v1754 = vadd.f32 %v1753, %v1712
        %v1755 = vadd.f32 %v1754, %v1713
        %v1756 = vadd.f32 %v1755, %v1714
        %v1757 = vadd.f32 %v1756, %v1715
        %v1758 = vadd.f32 %v1757, %v1716
        %1759 = vadd.xlane.f32.xlu0 %v1758
        %v1760 = vpop.xlane.xlu0 %1759
        %v1761 = vadd.f32 %v1717, %v1718
        %v1762 = vadd.f32 %v1761, %v1719
        %v1763 = vadd.f32 %v1762, %v1720
        %v1764 = vadd.f32 %v1763, %v1721
        %v1765 = vadd.f32 %v1764, %v1722
        %v1766 = vadd.f32 %v1765, %v1723
        %v1767 = vadd.f32 %v1766, %v1724
        %1768 = vadd.xlane.f32.xlu0 %v1767
        %v1769 = vpop.xlane.xlu0 %1768
        %vm1770 = vcmask 7168
        %1771 = vst.msk [vmem:[%s828] sm:$0xff] %vm1770, %v1733
        %1772 = vst.msk [vmem:[%s828 + $0x8] sm:$0xff] %vm1770, %v1742
        %1773 = vst.msk [vmem:[%s828 + $0x10] sm:$0xff] %vm1770, %v1751
        %1774 = vst.msk [vmem:[%s828 + $0x18] sm:$0xff] %vm1770, %v1760
        %1775 = vst.msk [vmem:[%s828 + $0x20] sm:$0xff] %vm1770, %v1769
        %v1776 = vmul.f32 %v1685, %v1685
        %v1777 = vmul.f32 %v1686, %v1686
        %v1778 = vmul.f32 %v1687, %v1687
        %v1779 = vmul.f32 %v1688, %v1688
        %v1780 = vmul.f32 %v1689, %v1689
        %v1781 = vmul.f32 %v1690, %v1690
        %v1782 = vmul.f32 %v1691, %v1691
        %v1783 = vmul.f32 %v1692, %v1692
        %v1784 = vmul.f32 %v1693, %v1693
        %v1785 = vmul.f32 %v1694, %v1694
        %v1786 = vmul.f32 %v1695, %v1695
        %v1787 = vmul.f32 %v1696, %v1696
        %v1788 = vmul.f32 %v1697, %v1697
        %v1789 = vmul.f32 %v1698, %v1698
        %v1790 = vmul.f32 %v1699, %v1699
        %v1791 = vmul.f32 %v1700, %v1700
        %v1792 = vmul.f32 %v1701, %v1701
        %v1793 = vmul.f32 %v1702, %v1702
        %v1794 = vmul.f32 %v1703, %v1703
        %v1795 = vmul.f32 %v1704, %v1704
        %v1796 = vmul.f32 %v1705, %v1705
        %v1797 = vmul.f32 %v1706, %v1706
        %v1798 = vmul.f32 %v1707, %v1707
        %v1799 = vmul.f32 %v1708, %v1708
        %v1800 = vmul.f32 %v1709, %v1709
        %v1801 = vmul.f32 %v1710, %v1710
        %v1802 = vmul.f32 %v1711, %v1711
        %v1803 = vmul.f32 %v1712, %v1712
        %v1804 = vmul.f32 %v1713, %v1713
        %v1805 = vmul.f32 %v1714, %v1714
        %v1806 = vmul.f32 %v1715, %v1715
        %v1807 = vmul.f32 %v1716, %v1716
        %v1808 = vmul.f32 %v1717, %v1717
        %v1809 = vmul.f32 %v1718, %v1718
        %v1810 = vmul.f32 %v1719, %v1719
        %v1811 = vmul.f32 %v1720, %v1720
        %v1812 = vmul.f32 %v1721, %v1721
        %v1813 = vmul.f32 %v1722, %v1722
        %v1814 = vmul.f32 %v1723, %v1723
        %v1815 = vmul.f32 %v1724, %v1724
        %v1816 = vadd.f32 %v1776, %v1777
        %v1817 = vadd.f32 %v1816, %v1778
        %v1818 = vadd.f32 %v1817, %v1779
        %v1819 = vadd.f32 %v1818, %v1780
        %v1820 = vadd.f32 %v1819, %v1781
        %v1821 = vadd.f32 %v1820, %v1782
        %v1822 = vadd.f32 %v1821, %v1783
        %1823 = vadd.xlane.f32.xlu0 %v1822
        %v1824 = vpop.xlane.xlu0 %1823
        %v1825 = vadd.f32 %v1784, %v1785
        %v1826 = vadd.f32 %v1825, %v1786
        %v1827 = vadd.f32 %v1826, %v1787
        %v1828 = vadd.f32 %v1827, %v1788
        %v1829 = vadd.f32 %v1828, %v1789
        %v1830 = vadd.f32 %v1829, %v1790
        %v1831 = vadd.f32 %v1830, %v1791
        %1832 = vadd.xlane.f32.xlu0 %v1831
        %v1833 = vpop.xlane.xlu0 %1832
        %v1834 = vadd.f32 %v1792, %v1793
        %v1835 = vadd.f32 %v1834, %v1794
        %v1836 = vadd.f32 %v1835, %v1795
        %v1837 = vadd.f32 %v1836, %v1796
        %v1838 = vadd.f32 %v1837, %v1797
        %v1839 = vadd.f32 %v1838, %v1798
        %v1840 = vadd.f32 %v1839, %v1799
        %1841 = vadd.xlane.f32.xlu0 %v1840
        %v1842 = vpop.xlane.xlu0 %1841
        %v1843 = vadd.f32 %v1800, %v1801
        %v1844 = vadd.f32 %v1843, %v1802
        %v1845 = vadd.f32 %v1844, %v1803
        %v1846 = vadd.f32 %v1845, %v1804
        %v1847 = vadd.f32 %v1846, %v1805
        %v1848 = vadd.f32 %v1847, %v1806
        %v1849 = vadd.f32 %v1848, %v1807
        %1850 = vadd.xlane.f32.xlu0 %v1849
        %v1851 = vpop.xlane.xlu0 %1850
        %v1852 = vadd.f32 %v1808, %v1809
        %v1853 = vadd.f32 %v1852, %v1810
        %v1854 = vadd.f32 %v1853, %v1811
        %v1855 = vadd.f32 %v1854, %v1812
        %v1856 = vadd.f32 %v1855, %v1813
        %v1857 = vadd.f32 %v1856, %v1814
        %v1858 = vadd.f32 %v1857, %v1815
        %1859 = vadd.xlane.f32.xlu0 %v1858
        %v1860 = vpop.xlane.xlu0 %1859
        %vm1861 = vcmask 15368
        %1862 = vst.msk [vmem:[%s828] sm:$0xff] %vm1861, %v1824
        %1863 = vst.msk [vmem:[%s828 + $0x8] sm:$0xff] %vm1861, %v1833
        %1864 = vst.msk [vmem:[%s828 + $0x10] sm:$0xff] %vm1861, %v1842
        %1865 = vst.msk [vmem:[%s828 + $0x18] sm:$0xff] %vm1861, %v1851
        %1866 = vst.msk [vmem:[%s828 + $0x20] sm:$0xff] %vm1861, %v1860
        %s1867 = sand.u32 %s86, 1
        %s1868 = sand.u32 %s86, 1
        %s1869 = smul.addr %s1868, 320
        %s1870 = scalar_lea.vmem [#allocation3], %s1869
        %s1871 = smul.u32 %s19, 4
        %s1872 = sadd.s32 %s1871, %s20
        %p1873 = scmp.lt.s32.totalorder %s1872, 3
        %s1874 = scalar_select %p1873, %s1872, 3
        %s1875 = smul.addr %s1874, 5
        %s1876 = smul.addr %s1875, 8
        %s1877 = scalar_lea.vmem %s3, %s1876
        // Predicated region
        $region95: #{fused_mul_conv1x1_bn.2} parent=89 // pred_check
          %p1878 = pneg %p96
        $region96: #{fused_mul_conv1x1_bn.2} parent=89 // pred_check_branch
          %1880 = sbr.rel (%p1878) target = $region98
        $region97: #{fused_mul_conv1x1_bn.2} parent=89 // pred_region
          %s1881 = smul.u32 8, %s20
          %s1882 = ssub.s32 25, %s1881
          %p1883 = scmp.lt.s32.totalorder %s1882, 8
          %s1884 = scalar_select %p1883, %s1882, 8
          %s1885 = smul.u32 40, %s1884
          %p1886 = scmp.ne.s32.totalorder 0, %s1885
          %s1887 = smul.addr %s19, 125
          %s1888 = sadd.s32 %s1881, %s1887
          %s1889 = smul.addr %s1888, 8
          %s1890 = scalar_lea.vmem %s2, %s1889
          %s1891 = smul.u32 %s1884, 8
          // Predicated region
          $region99: #{fused_mul_conv1x1_bn.2} parent=97 // pred_check
            %p1892 = pneg %p1886
          $region100: #{fused_mul_conv1x1_bn.2} parent=97 // pred_check_branch
            %1894 = sbr.rel (%p1892) target = $region102
          $region101: #{fused_mul_conv1x1_bn.2} parent=97 // pred_region
            %p1895 = scmp.lt.u32.totalorder %s1891, 8
            %p1896 = pneg %p1895
            // Predicated region
            $region103: #{fused_mul_conv1x1_bn.2} parent=101 // pred_check
              _
            $region104: #{fused_mul_conv1x1_bn.2} parent=101 // pred_check_branch
              %1898 = sbr.rel (%p1895) target = $region106
            $region105: #{fused_mul_conv1x1_bn.2} parent=101 // pred_region
              %s1922 = sand.u32 %s1891, 7
              %p1923 = scmp.eq.s32.totalorder %s1922, 0
              // Predicated region
              $region118: #{fused_mul_conv1x1_bn.2} parent=105 // pred_check
                %p1924 = pneg %p1923
              $region119: #{fused_mul_conv1x1_bn.2} parent=105 // pred_check_branch
                %1926 = sbr.rel (%p1924) target = $region121
              $region120: #{fused_mul_conv1x1_bn.2} parent=105 // pred_region
                %s1927 = sshrl.u32 %s1891, 3
                %s1928 = sshrl.u32 %s1927, 3
                // While loop
                $region122: #{fused_mul_conv1x1_bn.2} parent=120 // loop_pre_header
                  _
                $region123: #{fused_mul_conv1x1_bn.2} parent=120 // loop_header
                  %s1930 = sphi 0, %s1932
                  %p1931 = scmp.ge.s32.totalorder %s1930, %s1928
                  %s1935 = sphi 0, %s2020
                  %s1936 = sphi %s1870, %s2023
                  %s1937 = sphi %s1890, %s2024
                $region124: #{fused_mul_conv1x1_bn.2} parent=120 // loop_header_branch
                  %1934 = sbr.rel (%p1931) target = $region128
                $region125: #{fused_mul_conv1x1_bn.2} parent=120 // loop_body
                  %v1938 = vld [vmem:[%s1936] sm:$0xff]
                  %1939 = vst [vmem:[%s1937] sm:$0xff] %v1938
                  %v1940 = vld [vmem:[%s1936 + $0x8] sm:$0xff]
                  %1941 = vst [vmem:[%s1937 + $0x8] sm:$0xff] %v1940
                  %v1942 = vld [vmem:[%s1936 + $0x10] sm:$0xff]
                  %1943 = vst [vmem:[%s1937 + $0x10] sm:$0xff] %v1942
                  %v1944 = vld [vmem:[%s1936 + $0x18] sm:$0xff]
                  %1945 = vst [vmem:[%s1937 + $0x18] sm:$0xff] %v1944
                  %v1946 = vld [vmem:[%s1936 + $0x20] sm:$0xff]
                  %1947 = vst [vmem:[%s1937 + $0x20] sm:$0xff] %v1946
                  %v1948 = vld [vmem:[%s1936 + $0x28] sm:$0xff]
                  %1949 = vst [vmem:[%s1937 + $0x28] sm:$0xff] %v1948
                  %v1950 = vld [vmem:[%s1936 + $0x30] sm:$0xff]
                  %1951 = vst [vmem:[%s1937 + $0x30] sm:$0xff] %v1950
                  %v1952 = vld [vmem:[%s1936 + $0x38] sm:$0xff]
                  %1953 = vst [vmem:[%s1937 + $0x38] sm:$0xff] %v1952
                  %v1954 = vld [vmem:[%s1936 + $0x40] sm:$0xff]
                  %1955 = vst [vmem:[%s1937 + $0xc8] sm:$0xff] %v1954
                  %v1956 = vld [vmem:[%s1936 + $0x48] sm:$0xff]
                  %1957 = vst [vmem:[%s1937 + $0xd0] sm:$0xff] %v1956
                  %v1958 = vld [vmem:[%s1936 + $0x50] sm:$0xff]
                  %1959 = vst [vmem:[%s1937 + $0xd8] sm:$0xff] %v1958
                  %v1960 = vld [vmem:[%s1936 + $0x58] sm:$0xff]
                  %1961 = vst [vmem:[%s1937 + $0xe0] sm:$0xff] %v1960
                  %v1962 = vld [vmem:[%s1936 + $0x60] sm:$0xff]
                  %1963 = vst [vmem:[%s1937 + $0xe8] sm:$0xff] %v1962
                  %v1964 = vld [vmem:[%s1936 + $0x68] sm:$0xff]
                  %1965 = vst [vmem:[%s1937 + $0xf0] sm:$0xff] %v1964
                  %v1966 = vld [vmem:[%s1936 + $0x70] sm:$0xff]
                  %1967 = vst [vmem:[%s1937 + $0xf8] sm:$0xff] %v1966
                  %v1968 = vld [vmem:[%s1936 + $0x78] sm:$0xff]
                  %1969 = vst [vmem:[%s1937 + $0x100] sm:$0xff] %v1968
                  %v1970 = vld [vmem:[%s1936 + $0x80] sm:$0xff]
                  %1971 = vst [vmem:[%s1937 + $0x190] sm:$0xff] %v1970
                  %v1972 = vld [vmem:[%s1936 + $0x88] sm:$0xff]
                  %1973 = vst [vmem:[%s1937 + $0x198] sm:$0xff] %v1972
                  %v1974 = vld [vmem:[%s1936 + $0x90] sm:$0xff]
                  %1975 = vst [vmem:[%s1937 + $0x1a0] sm:$0xff] %v1974
                  %v1976 = vld [vmem:[%s1936 + $0x98] sm:$0xff]
                  %1977 = vst [vmem:[%s1937 + $0x1a8] sm:$0xff] %v1976
                  %v1978 = vld [vmem:[%s1936 + $0xa0] sm:$0xff]
                  %1979 = vst [vmem:[%s1937 + $0x1b0] sm:$0xff] %v1978
                  %v1980 = vld [vmem:[%s1936 + $0xa8] sm:$0xff]
                  %1981 = vst [vmem:[%s1937 + $0x1b8] sm:$0xff] %v1980
                  %v1982 = vld [vmem:[%s1936 + $0xb0] sm:$0xff]
                  %1983 = vst [vmem:[%s1937 + $0x1c0] sm:$0xff] %v1982
                  %v1984 = vld [vmem:[%s1936 + $0xb8] sm:$0xff]
                  %1985 = vst [vmem:[%s1937 + $0x1c8] sm:$0xff] %v1984
                  %v1986 = vld [vmem:[%s1936 + $0xc0] sm:$0xff]
                  %1987 = vst [vmem:[%s1937 + $0x258] sm:$0xff] %v1986
                  %v1988 = vld [vmem:[%s1936 + $0xc8] sm:$0xff]
                  %1989 = vst [vmem:[%s1937 + $0x260] sm:$0xff] %v1988
                  %v1990 = vld [vmem:[%s1936 + $0xd0] sm:$0xff]
                  %1991 = vst [vmem:[%s1937 + $0x268] sm:$0xff] %v1990
                  %v1992 = vld [vmem:[%s1936 + $0xd8] sm:$0xff]
                  %1993 = vst [vmem:[%s1937 + $0x270] sm:$0xff] %v1992
                  %v1994 = vld [vmem:[%s1936 + $0xe0] sm:$0xff]
                  %1995 = vst [vmem:[%s1937 + $0x278] sm:$0xff] %v1994
                  %v1996 = vld [vmem:[%s1936 + $0xe8] sm:$0xff]
                  %1997 = vst [vmem:[%s1937 + $0x280] sm:$0xff] %v1996
                  %v1998 = vld [vmem:[%s1936 + $0xf0] sm:$0xff]
                  %1999 = vst [vmem:[%s1937 + $0x288] sm:$0xff] %v1998
                  %v2000 = vld [vmem:[%s1936 + $0xf8] sm:$0xff]
                  %2001 = vst [vmem:[%s1937 + $0x290] sm:$0xff] %v2000
                  %v2002 = vld [vmem:[%s1936 + $0x100] sm:$0xff]
                  %2003 = vst [vmem:[%s1937 + $0x320] sm:$0xff] %v2002
                  %v2004 = vld [vmem:[%s1936 + $0x108] sm:$0xff]
                  %2005 = vst [vmem:[%s1937 + $0x328] sm:$0xff] %v2004
                  %v2006 = vld [vmem:[%s1936 + $0x110] sm:$0xff]
                  %2007 = vst [vmem:[%s1937 + $0x330] sm:$0xff] %v2006
                  %v2008 = vld [vmem:[%s1936 + $0x118] sm:$0xff]
                  %2009 = vst [vmem:[%s1937 + $0x338] sm:$0xff] %v2008
                  %v2010 = vld [vmem:[%s1936 + $0x120] sm:$0xff]
                  %2011 = vst [vmem:[%s1937 + $0x340] sm:$0xff] %v2010
                  %v2012 = vld [vmem:[%s1936 + $0x128] sm:$0xff]
                  %2013 = vst [vmem:[%s1937 + $0x348] sm:$0xff] %v2012
                  %v2014 = vld [vmem:[%s1936 + $0x130] sm:$0xff]
                  %2015 = vst [vmem:[%s1937 + $0x350] sm:$0xff] %v2014
                  %v2016 = vld [vmem:[%s1936 + $0x138] sm:$0xff]
                  %2017 = vst [vmem:[%s1937 + $0x358] sm:$0xff] %v2016
                  %s2018 = sadd.s32 1, %s1935
                  %p2019 = scmp.ge.s32.totalorder %s2018, %s1928
                  %s2020 = scalar_select %p2019, 0, %s2018
                  %s2021 = smul.u32 %s2020, 64
                  %s2022 = smul.u32 %s2020, 64
                  %s2023 = scalar_lea.vmem %s1870, %s2021 [#allocation3]
                  %s2024 = scalar_lea.vmem %s1890, %s2022
                $region126: #{fused_mul_conv1x1_bn.2} parent=120 // loop_footer
                  %s1932 = sadd.s32 %s1930, 1
                $region127: #{fused_mul_conv1x1_bn.2} parent=120 // loop_footer_branch
                  %1929 = sbr.rel target = $region123
                $region128: #{fused_mul_conv1x1_bn.2} parent=120 // loop_exit
                  _
                %s2025 = sshrl.u32 %s1927, 3
                %s2026 = sand.u32 %s1927, 7
                %s2027 = smul.u32 %s2025, 8
                %s2028 = smul.u32 8, %s2027
                %s2029 = scalar_lea.vmem %s1870, %s2028 [#allocation3]
                %s2030 = smul.u32 8, %s2027
                %s2031 = scalar_lea.vmem %s1890, %s2030
                // While loop
                $region129: #{fused_mul_conv1x1_bn.2} parent=120 // loop_pre_header
                  _
                $region130: #{fused_mul_conv1x1_bn.2} parent=120 // loop_header
                  %s2033 = sphi 0, %s2035
                  %p2034 = scmp.ge.s32.totalorder %s2033, %s2026
                  %s2038 = sphi 0, %s2053
                  %s2039 = sphi %s2029, %s2056
                  %s2040 = sphi %s2031, %s2057
                $region131: #{fused_mul_conv1x1_bn.2} parent=120 // loop_header_branch
                  %2037 = sbr.rel (%p2034) target = $region135
                $region132: #{fused_mul_conv1x1_bn.2} parent=120 // loop_body
                  %v2041 = vld [vmem:[%s2039] sm:$0xff]
                  %2042 = vst [vmem:[%s2040] sm:$0xff] %v2041
                  %v2043 = vld [vmem:[%s2039 + $0x40] sm:$0xff]
                  %2044 = vst [vmem:[%s2040 + $0xc8] sm:$0xff] %v2043
                  %v2045 = vld [vmem:[%s2039 + $0x80] sm:$0xff]
                  %2046 = vst [vmem:[%s2040 + $0x190] sm:$0xff] %v2045
                  %v2047 = vld [vmem:[%s2039 + $0xc0] sm:$0xff]
                  %2048 = vst [vmem:[%s2040 + $0x258] sm:$0xff] %v2047
                  %v2049 = vld [vmem:[%s2039 + $0x100] sm:$0xff]
                  %2050 = vst [vmem:[%s2040 + $0x320] sm:$0xff] %v2049
                  %s2051 = sadd.s32 1, %s2038
                  %p2052 = scmp.ge.s32.totalorder %s2051, %s2026
                  %s2053 = scalar_select %p2052, 0, %s2051
                  %s2054 = smul.u32 %s2053, 8
                  %s2055 = smul.u32 %s2053, 8
                  %s2056 = scalar_lea.vmem %s2029, %s2054 [#allocation3]
                  %s2057 = scalar_lea.vmem %s2031, %s2055
                $region133: #{fused_mul_conv1x1_bn.2} parent=120 // loop_footer
                  %s2035 = sadd.s32 %s2033, 1
                $region134: #{fused_mul_conv1x1_bn.2} parent=120 // loop_footer_branch
                  %2032 = sbr.rel target = $region130
                $region135: #{fused_mul_conv1x1_bn.2} parent=120 // loop_exit
                  _
              $region121: #{fused_mul_conv1x1_bn.2} parent=105 // pred_fallthru
                _
              %p2058 = pneg %p1923
              // Predicated region
              $region136: #{fused_mul_conv1x1_bn.2} parent=105 // pred_check
                _
              $region137: #{fused_mul_conv1x1_bn.2} parent=105 // pred_check_branch
                %2060 = sbr.rel (%p1923) target = $region139
              $region138: #{fused_mul_conv1x1_bn.2} parent=105 // pred_region
                %s2061 = sand.u32 %s1891, 7
                %s2062 = ssub.s32 %s1891, %s2061
                %s2063 = scalar_lea.vmem %s1870, %s2062 [#allocation3]
                %s2064 = ssub.s32 %s1891, %s2061
                %s2065 = scalar_lea.vmem %s1890, %s2064
                %s2066 = sshrl.u32 %s1891, 3
                %s2067 = sshrl.u32 %s2066, 3
                // While loop
                $region140: #{fused_mul_conv1x1_bn.2} parent=138 // loop_pre_header
                  _
                $region141: #{fused_mul_conv1x1_bn.2} parent=138 // loop_header
                  %s2069 = sphi 0, %s2071
                  %p2070 = scmp.ge.s32.totalorder %s2069, %s2067
                  %s2074 = sphi 0, %s2159
                  %s2075 = sphi %s1870, %s2162
                  %s2076 = sphi %s1890, %s2163
                $region142: #{fused_mul_conv1x1_bn.2} parent=138 // loop_header_branch
                  %2073 = sbr.rel (%p2070) target = $region146
                $region143: #{fused_mul_conv1x1_bn.2} parent=138 // loop_body
                  %v2077 = vld [vmem:[%s2075] sm:$0xff]
                  %2078 = vst [vmem:[%s2076] sm:$0xff] %v2077
                  %v2079 = vld [vmem:[%s2075 + $0x8] sm:$0xff]
                  %2080 = vst [vmem:[%s2076 + $0x8] sm:$0xff] %v2079
                  %v2081 = vld [vmem:[%s2075 + $0x10] sm:$0xff]
                  %2082 = vst [vmem:[%s2076 + $0x10] sm:$0xff] %v2081
                  %v2083 = vld [vmem:[%s2075 + $0x18] sm:$0xff]
                  %2084 = vst [vmem:[%s2076 + $0x18] sm:$0xff] %v2083
                  %v2085 = vld [vmem:[%s2075 + $0x20] sm:$0xff]
                  %2086 = vst [vmem:[%s2076 + $0x20] sm:$0xff] %v2085
                  %v2087 = vld [vmem:[%s2075 + $0x28] sm:$0xff]
                  %2088 = vst [vmem:[%s2076 + $0x28] sm:$0xff] %v2087
                  %v2089 = vld [vmem:[%s2075 + $0x30] sm:$0xff]
                  %2090 = vst [vmem:[%s2076 + $0x30] sm:$0xff] %v2089
                  %v2091 = vld [vmem:[%s2075 + $0x38] sm:$0xff]
                  %2092 = vst [vmem:[%s2076 + $0x38] sm:$0xff] %v2091
                  %v2093 = vld [vmem:[%s2075 + $0x40] sm:$0xff]
                  %2094 = vst [vmem:[%s2076 + $0xc8] sm:$0xff] %v2093
                  %v2095 = vld [vmem:[%s2075 + $0x48] sm:$0xff]
                  %2096 = vst [vmem:[%s2076 + $0xd0] sm:$0xff] %v2095
                  %v2097 = vld [vmem:[%s2075 + $0x50] sm:$0xff]
                  %2098 = vst [vmem:[%s2076 + $0xd8] sm:$0xff] %v2097
                  %v2099 = vld [vmem:[%s2075 + $0x58] sm:$0xff]
                  %2100 = vst [vmem:[%s2076 + $0xe0] sm:$0xff] %v2099
                  %v2101 = vld [vmem:[%s2075 + $0x60] sm:$0xff]
                  %2102 = vst [vmem:[%s2076 + $0xe8] sm:$0xff] %v2101
                  %v2103 = vld [vmem:[%s2075 + $0x68] sm:$0xff]
                  %2104 = vst [vmem:[%s2076 + $0xf0] sm:$0xff] %v2103
                  %v2105 = vld [vmem:[%s2075 + $0x70] sm:$0xff]
                  %2106 = vst [vmem:[%s2076 + $0xf8] sm:$0xff] %v2105
                  %v2107 = vld [vmem:[%s2075 + $0x78] sm:$0xff]
                  %2108 = vst [vmem:[%s2076 + $0x100] sm:$0xff] %v2107
                  %v2109 = vld [vmem:[%s2075 + $0x80] sm:$0xff]
                  %2110 = vst [vmem:[%s2076 + $0x190] sm:$0xff] %v2109
                  %v2111 = vld [vmem:[%s2075 + $0x88] sm:$0xff]
                  %2112 = vst [vmem:[%s2076 + $0x198] sm:$0xff] %v2111
                  %v2113 = vld [vmem:[%s2075 + $0x90] sm:$0xff]
                  %2114 = vst [vmem:[%s2076 + $0x1a0] sm:$0xff] %v2113
                  %v2115 = vld [vmem:[%s2075 + $0x98] sm:$0xff]
                  %2116 = vst [vmem:[%s2076 + $0x1a8] sm:$0xff] %v2115
                  %v2117 = vld [vmem:[%s2075 + $0xa0] sm:$0xff]
                  %2118 = vst [vmem:[%s2076 + $0x1b0] sm:$0xff] %v2117
                  %v2119 = vld [vmem:[%s2075 + $0xa8] sm:$0xff]
                  %2120 = vst [vmem:[%s2076 + $0x1b8] sm:$0xff] %v2119
                  %v2121 = vld [vmem:[%s2075 + $0xb0] sm:$0xff]
                  %2122 = vst [vmem:[%s2076 + $0x1c0] sm:$0xff] %v2121
                  %v2123 = vld [vmem:[%s2075 + $0xb8] sm:$0xff]
                  %2124 = vst [vmem:[%s2076 + $0x1c8] sm:$0xff] %v2123
                  %v2125 = vld [vmem:[%s2075 + $0xc0] sm:$0xff]
                  %2126 = vst [vmem:[%s2076 + $0x258] sm:$0xff] %v2125
                  %v2127 = vld [vmem:[%s2075 + $0xc8] sm:$0xff]
                  %2128 = vst [vmem:[%s2076 + $0x260] sm:$0xff] %v2127
                  %v2129 = vld [vmem:[%s2075 + $0xd0] sm:$0xff]
                  %2130 = vst [vmem:[%s2076 + $0x268] sm:$0xff] %v2129
                  %v2131 = vld [vmem:[%s2075 + $0xd8] sm:$0xff]
                  %2132 = vst [vmem:[%s2076 + $0x270] sm:$0xff] %v2131
                  %v2133 = vld [vmem:[%s2075 + $0xe0] sm:$0xff]
                  %2134 = vst [vmem:[%s2076 + $0x278] sm:$0xff] %v2133
                  %v2135 = vld [vmem:[%s2075 + $0xe8] sm:$0xff]
                  %2136 = vst [vmem:[%s2076 + $0x280] sm:$0xff] %v2135
                  %v2137 = vld [vmem:[%s2075 + $0xf0] sm:$0xff]
                  %2138 = vst [vmem:[%s2076 + $0x288] sm:$0xff] %v2137
                  %v2139 = vld [vmem:[%s2075 + $0xf8] sm:$0xff]
                  %2140 = vst [vmem:[%s2076 + $0x290] sm:$0xff] %v2139
                  %v2141 = vld [vmem:[%s2075 + $0x100] sm:$0xff]
                  %2142 = vst [vmem:[%s2076 + $0x320] sm:$0xff] %v2141
                  %v2143 = vld [vmem:[%s2075 + $0x108] sm:$0xff]
                  %2144 = vst [vmem:[%s2076 + $0x328] sm:$0xff] %v2143
                  %v2145 = vld [vmem:[%s2075 + $0x110] sm:$0xff]
                  %2146 = vst [vmem:[%s2076 + $0x330] sm:$0xff] %v2145
                  %v2147 = vld [vmem:[%s2075 + $0x118] sm:$0xff]
                  %2148 = vst [vmem:[%s2076 + $0x338] sm:$0xff] %v2147
                  %v2149 = vld [vmem:[%s2075 + $0x120] sm:$0xff]
                  %2150 = vst [vmem:[%s2076 + $0x340] sm:$0xff] %v2149
                  %v2151 = vld [vmem:[%s2075 + $0x128] sm:$0xff]
                  %2152 = vst [vmem:[%s2076 + $0x348] sm:$0xff] %v2151
                  %v2153 = vld [vmem:[%s2075 + $0x130] sm:$0xff]
                  %2154 = vst [vmem:[%s2076 + $0x350] sm:$0xff] %v2153
                  %v2155 = vld [vmem:[%s2075 + $0x138] sm:$0xff]
                  %2156 = vst [vmem:[%s2076 + $0x358] sm:$0xff] %v2155
                  %s2157 = sadd.s32 1, %s2074
                  %p2158 = scmp.ge.s32.totalorder %s2157, %s2067
                  %s2159 = scalar_select %p2158, 0, %s2157
                  %s2160 = smul.u32 %s2159, 64
                  %s2161 = smul.u32 %s2159, 64
                  %s2162 = scalar_lea.vmem %s1870, %s2160 [#allocation3]
                  %s2163 = scalar_lea.vmem %s1890, %s2161
                $region144: #{fused_mul_conv1x1_bn.2} parent=138 // loop_footer
                  %s2071 = sadd.s32 %s2069, 1
                $region145: #{fused_mul_conv1x1_bn.2} parent=138 // loop_footer_branch
                  %2068 = sbr.rel target = $region141
                $region146: #{fused_mul_conv1x1_bn.2} parent=138 // loop_exit
                  _
                %s2164 = sshrl.u32 %s2066, 3
                %s2165 = sand.u32 %s2066, 7
                %s2166 = smul.u32 %s2164, 8
                %s2167 = smul.u32 8, %s2166
                %s2168 = scalar_lea.vmem %s1870, %s2167 [#allocation3]
                %s2169 = smul.u32 8, %s2166
                %s2170 = scalar_lea.vmem %s1890, %s2169
                // While loop
                $region147: #{fused_mul_conv1x1_bn.2} parent=138 // loop_pre_header
                  _
                $region148: #{fused_mul_conv1x1_bn.2} parent=138 // loop_header
                  %s2172 = sphi 0, %s2174
                  %p2173 = scmp.ge.s32.totalorder %s2172, %s2165
                  %s2177 = sphi 0, %s2192
                  %s2178 = sphi %s2168, %s2195
                  %s2179 = sphi %s2170, %s2196
                $region149: #{fused_mul_conv1x1_bn.2} parent=138 // loop_header_branch
                  %2176 = sbr.rel (%p2173) target = $region153
                $region150: #{fused_mul_conv1x1_bn.2} parent=138 // loop_body
                  %v2180 = vld [vmem:[%s2178] sm:$0xff]
                  %2181 = vst [vmem:[%s2179] sm:$0xff] %v2180
                  %v2182 = vld [vmem:[%s2178 + $0x40] sm:$0xff]
                  %2183 = vst [vmem:[%s2179 + $0xc8] sm:$0xff] %v2182
                  %v2184 = vld [vmem:[%s2178 + $0x80] sm:$0xff]
                  %2185 = vst [vmem:[%s2179 + $0x190] sm:$0xff] %v2184
                  %v2186 = vld [vmem:[%s2178 + $0xc0] sm:$0xff]
                  %2187 = vst [vmem:[%s2179 + $0x258] sm:$0xff] %v2186
                  %v2188 = vld [vmem:[%s2178 + $0x100] sm:$0xff]
                  %2189 = vst [vmem:[%s2179 + $0x320] sm:$0xff] %v2188
                  %s2190 = sadd.s32 1, %s2177
                  %p2191 = scmp.ge.s32.totalorder %s2190, %s2165
                  %s2192 = scalar_select %p2191, 0, %s2190
                  %s2193 = smul.u32 %s2192, 8
                  %s2194 = smul.u32 %s2192, 8
                  %s2195 = scalar_lea.vmem %s2168, %s2193 [#allocation3]
                  %s2196 = scalar_lea.vmem %s2170, %s2194
                $region151: #{fused_mul_conv1x1_bn.2} parent=138 // loop_footer
                  %s2174 = sadd.s32 %s2172, 1
                $region152: #{fused_mul_conv1x1_bn.2} parent=138 // loop_footer_branch
                  %2171 = sbr.rel target = $region148
                $region153: #{fused_mul_conv1x1_bn.2} parent=138 // loop_exit
                  _
                %s2197 = sshll.u32 1, %s2061
                %s2198 = ssub.s32 %s2197, 1
                loop: start=0, step=1, limit=1
                $region154: #{fused_mul_conv1x1_bn.2} parent=138 // loop_pre_header
                  _
                $region155: #{fused_mul_conv1x1_bn.2} parent=138 // loop_header
                  %s2200 = sphi 0, %s2204
                  %p2201 = scmp.ge.s32.totalorder %s2200, 1
                  %s2205 = sphi %s2063, %s2063
                  %s2206 = sphi %s2065, %s2065
                $region156: #{fused_mul_conv1x1_bn.2} parent=138 // loop_header_branch
                  %2203 = sbr.rel (%p2201) target = $region160
                $region157: #{fused_mul_conv1x1_bn.2} parent=138 // loop_body
                  %v2207 = vld [vmem:[%s2205] sm:%s2198]
                  %2208 = vst [vmem:[%s2206] sm:%s2198] %v2207
                  %v2209 = vld [vmem:[%s2205 + $0x40] sm:%s2198]
                  %2210 = vst [vmem:[%s2206 + $0xc8] sm:%s2198] %v2209
                  %v2211 = vld [vmem:[%s2205 + $0x80] sm:%s2198]
                  %2212 = vst [vmem:[%s2206 + $0x190] sm:%s2198] %v2211
                  %v2213 = vld [vmem:[%s2205 + $0xc0] sm:%s2198]
                  %2214 = vst [vmem:[%s2206 + $0x258] sm:%s2198] %v2213
                  %v2215 = vld [vmem:[%s2205 + $0x100] sm:%s2198]
                  %2216 = vst [vmem:[%s2206 + $0x320] sm:%s2198] %v2215
                $region158: #{fused_mul_conv1x1_bn.2} parent=138 // loop_footer
                  %s2204 = sadd.s32 1, %s2200
                $region159: #{fused_mul_conv1x1_bn.2} parent=138 // loop_footer_branch
                  %2199 = sbr.rel target = $region155
                $region160: #{fused_mul_conv1x1_bn.2} parent=138 // loop_exit
                  _
              $region139: #{fused_mul_conv1x1_bn.2} parent=105 // pred_fallthru
                _
            $region106: #{fused_mul_conv1x1_bn.2} parent=101 // pred_fallthru
              _
            // Predicated region
            $region107: #{fused_mul_conv1x1_bn.2} parent=101 // pred_check
              %p1899 = pneg %p1895
            $region108: #{fused_mul_conv1x1_bn.2} parent=101 // pred_check_branch
              %1901 = sbr.rel (%p1899) target = $region110
            $region109: #{fused_mul_conv1x1_bn.2} parent=101 // pred_region
              %s1902 = sshll.u32 1, %s1891
              %s1903 = ssub.s32 %s1902, 1
              loop: start=0, step=1, limit=1
              $region111: #{fused_mul_conv1x1_bn.2} parent=109 // loop_pre_header
                _
              $region112: #{fused_mul_conv1x1_bn.2} parent=109 // loop_header
                %s1905 = sphi 0, %s1909
                %p1906 = scmp.ge.s32.totalorder %s1905, 1
                %s1910 = sphi %s1870, %s1870
                %s1911 = sphi %s1890, %s1890
              $region113: #{fused_mul_conv1x1_bn.2} parent=109 // loop_header_branch
                %1908 = sbr.rel (%p1906) target = $region117
              $region114: #{fused_mul_conv1x1_bn.2} parent=109 // loop_body
                %v1912 = vld [vmem:[%s1910] sm:%s1903]
                %1913 = vst [vmem:[%s1911] sm:%s1903] %v1912
                %v1914 = vld [vmem:[%s1910 + $0x40] sm:%s1903]
                %1915 = vst [vmem:[%s1911 + $0xc8] sm:%s1903] %v1914
                %v1916 = vld [vmem:[%s1910 + $0x80] sm:%s1903]
                %1917 = vst [vmem:[%s1911 + $0x190] sm:%s1903] %v1916
                %v1918 = vld [vmem:[%s1910 + $0xc0] sm:%s1903]
                %1919 = vst [vmem:[%s1911 + $0x258] sm:%s1903] %v1918
                %v1920 = vld [vmem:[%s1910 + $0x100] sm:%s1903]
                %1921 = vst [vmem:[%s1911 + $0x320] sm:%s1903] %v1920
              $region115: #{fused_mul_conv1x1_bn.2} parent=109 // loop_footer
                %s1909 = sadd.s32 1, %s1905
              $region116: #{fused_mul_conv1x1_bn.2} parent=109 // loop_footer_branch
                %1904 = sbr.rel target = $region112
              $region117: #{fused_mul_conv1x1_bn.2} parent=109 // loop_exit
                _
            $region110: #{fused_mul_conv1x1_bn.2} parent=101 // pred_fallthru
              _
          $region102: #{fused_mul_conv1x1_bn.2} parent=97 // pred_fallthru
            _
          %2217 = vnop
        $region98: #{fused_mul_conv1x1_bn.2} parent=89 // pred_fallthru
          _
        // Predicated region
        $region161: #{fused_mul_conv1x1_bn.2} parent=89 // pred_check
          %p2218 = pneg %p126
        $region162: #{fused_mul_conv1x1_bn.2} parent=89 // pred_check_branch
          %2220 = sbr.rel (%p2218) target = $region164
        $region163: #{fused_mul_conv1x1_bn.2} parent=89 // pred_region
          %s2221 = smul.u32 %s19, 4
          %s2222 = sadd.s32 %s2221, %s20
        $region164: #{fused_mul_conv1x1_bn.2} parent=89 // pred_fallthru
          _
      $region90: #{fused_mul_conv1x1_bn.2} parent=5 // pred_fallthru
        _
      %p2223 = scmp.le.s32.totalorder 2, %s10
      // Predicated region
      $region165: #{fused_mul_conv1x1_bn.2} parent=5 // pred_check
        %p2224 = pneg %p2223
      $region166: #{fused_mul_conv1x1_bn.2} parent=5 // pred_check_branch
        %2226 = sbr.rel (%p2224) target = $region168
      $region167: #{fused_mul_conv1x1_bn.2} parent=5 // pred_region
        %s2227 = ssub.s32 %s10, 2
        // Predicated region
        $region169: #{fused_mul_conv1x1_bn.2} parent=167 // pred_check
          %p2228 = pneg %p102
        $region170: #{fused_mul_conv1x1_bn.2} parent=167 // pred_check_branch
          %2230 = sbr.rel (%p2228) target = $region172
        $region171: #{fused_mul_conv1x1_bn.2} parent=167 // pred_region
          %s2231 = sand.u32 %s87, 1
          %s2232 = sand.u32 %s87, 1
          %s2233 = smul.addr %s2232, 320
          %s2234 = scalar_lea.vmem [#allocation3], %s2233
        $region172: #{fused_mul_conv1x1_bn.2} parent=167 // pred_fallthru
          _
        // Predicated region
        $region173: #{fused_mul_conv1x1_bn.2} parent=167 // pred_check
          %p2235 = pneg %p132
        $region174: #{fused_mul_conv1x1_bn.2} parent=167 // pred_check_branch
          %2237 = sbr.rel (%p2235) target = $region176
        $region175: #{fused_mul_conv1x1_bn.2} parent=167 // pred_region
          %s2238 = smul.u32 %s21, 4
          %s2239 = sadd.s32 %s2238, %s22
          %p2240 = scmp.lt.s32.totalorder %s2239, 3
          %s2241 = scalar_select %p2240, %s2239, 3
          %s2242 = smul.addr %s2241, 5
          %s2243 = smul.addr %s2242, 8
          %s2244 = scalar_lea.vmem %s3, %s2243
        $region176: #{fused_mul_conv1x1_bn.2} parent=167 // pred_fallthru
          _
      $region168: #{fused_mul_conv1x1_bn.2} parent=5 // pred_fallthru
        _
    $region6: #{fused_mul_conv1x1_bn.2} parent=1 // loop_footer
      %s14 = sadd.s32 1, %s10
    $region7: #{fused_mul_conv1x1_bn.2} parent=1 // loop_footer_branch
      %9 = sbr.rel target = $region3
    $region8: #{fused_mul_conv1x1_bn.2} parent=1 // loop_exit
      _

</llo_original>
